<compile_context>
chip_gen: v6e
topology: v6e:2x2x1
jax: 0.10.0
libtpu: 0.0.40
codegen_flags: <defaults>
</compile_context>

<pallas_src>
import functools

import jax
import jax.numpy as jnp
from jax.experimental import pallas as pl
from jax.experimental.pallas import tpu as pltpu


# ----------------------------------------------------------------------------
# Pallas kernel: fused im2col conv row.
#   grid = (N, Ho, KH); KH is the reduction axis (accumulator in VMEM scratch).
#   x_ref : (1, 1, stride, Wq, Cin)   one padded input row, width phase-split
#   w_ref : (KH, KW, Cin, Coutp)      full weight, VMEM resident
#   b_ref : (1, Coutp)
#   o_ref : (1, 1, Wo, Coutp)         written once at kh == KH-1
#   acc_ref: (Wo, Coutp) f32 scratch
# ----------------------------------------------------------------------------
def _conv_row_kernel(x_ref, w_ref, b_ref, o_ref, acc_ref, *,
                     stride, kh_size, kw_size, wo,
                     apply_act, slope, apply_sigmoid):
    kh = pl.program_id(2)

    @pl.when(kh == 0)
    def _init():
        acc_ref[...] = jnp.zeros_like(acc_ref)

    acc = acc_ref[...]
    for kw in range(kw_size):
        phase = kw % stride          # static
        off = kw // stride           # static
        xs = x_ref[0, 0, phase, pl.ds(off, wo), :]        # (Wo, Cin) bf16
        wk = w_ref[kh, kw]                                # (Cin, Coutp) bf16
        acc = acc + jnp.dot(xs, wk, preferred_element_type=jnp.float32)
    acc_ref[...] = acc

    @pl.when(kh == kh_size - 1)
    def _finalize():
        y = acc_ref[...] + b_ref[...]                     # (Wo, Coutp) f32
        if apply_act:
            y = jnp.where(y > 0, y, slope * y)            # LeakyReLU(0.2)
        if apply_sigmoid:
            y = 1.0 / (1.0 + jnp.exp(-y))                 # fused sigmoid (EUP)
        o_ref[0, 0] = y.astype(o_ref.dtype)


# ----------------------------------------------------------------------------
# Conv2d (kernel=4, padding=2, stride in {1,2}) — fused-im2col pallas_call.
#   x_nhwc : (N, H, W, Cin) bf16
#   w_t    : (KH, KW, Cin, Coutp) bf16   (pre-transposed / pre-padded at init)
#   bias   : (1, Coutp) f32
# Returns (N, Ho, Wo, Coutp) bf16.
# ----------------------------------------------------------------------------
def conv2d_pallas(x_nhwc, w_t, bias_row, stride, pad, apply_act,
                  apply_sigmoid=False):
    N, H, W, Cin = x_nhwc.shape
    KH, KW, Cin_w, Coutp = w_t.shape
    assert Cin_w == Cin, (Cin_w, Cin)

    Hp = H + 2 * pad
    Wp = W + 2 * pad
    Ho = (Hp - KH) // stride + 1
    Wo = (Wp - KW) // stride + 1
    Wq = -(-Wp // stride)                 # ceil(Wp / stride)
    extra_w = Wq * stride - Wp

    # Spatial zero-pad + width phase-split: (N, Hp, stride, Wq, Cin).  After the
    # split, output column wo / tap kw reads phase=kw%stride at offset wo+kw//stride,
    # i.e. only static, contiguous slices inside the kernel.
    xp = jnp.pad(x_nhwc, ((0, 0), (pad, pad), (pad, pad + extra_w), (0, 0)))
    xs = xp.reshape(N, Hp, Wq, stride, Cin).transpose(0, 1, 3, 2, 4)

    kernel = functools.partial(
        _conv_row_kernel, stride=stride, kh_size=KH, kw_size=KW, wo=Wo,
        apply_act=apply_act, slope=0.2, apply_sigmoid=apply_sigmoid)

    flops = 2 * N * Ho * Wo * KH * KW * Cin * Coutp
    transcendentals = N * Ho * Wo * Coutp if apply_sigmoid else 0
    bytes_accessed = (N * Ho * KH * stride * Wq * Cin * 2    # input rows (per-tap-row fetch)
                      + KH * KW * Cin * Coutp * 2            # resident weight (once)
                      + Coutp * 4                            # bias
                      + N * Ho * Wo * Coutp * 2)             # output

    return pl.pallas_call(
        kernel,
        out_shape=jax.ShapeDtypeStruct((N, Ho, Wo, Coutp), jnp.bfloat16),
        grid=(N, Ho, KH),
        in_specs=[
            pl.BlockSpec((1, 1, stride, Wq, Cin),
                         lambda n, ho, kh: (n, ho * stride + kh, 0, 0, 0)),
            pl.BlockSpec((KH, KW, Cin, Coutp),
                         lambda n, ho, kh: (0, 0, 0, 0)),
            pl.BlockSpec((1, Coutp), lambda n, ho, kh: (0, 0)),
        ],
        out_specs=pl.BlockSpec((1, 1, Wo, Coutp),
                               lambda n, ho, kh: (n, ho, 0, 0)),
        scratch_shapes=[pltpu.VMEM((Wo, Coutp), jnp.float32)],
        compiler_params=pltpu.CompilerParams(
            dimension_semantics=("parallel", "parallel", "arbitrary"),
            vmem_limit_bytes=48 * 1024 * 1024),
        cost_estimate=pl.CostEstimate(
            flops=flops, transcendentals=transcendentals,
            bytes_accessed=bytes_accessed),
    )(xs, w_t, bias_row)


# ----------------------------------------------------------------------------
# Spectral normalization (parameter setup, deterministic power iteration)
# ----------------------------------------------------------------------------
def spectral_normalize(w_oihw, n_iters=20):
    cout = w_oihw.shape[0]
    wm = w_oihw.reshape(cout, -1).astype(jnp.float32)
    u = jnp.ones((cout,), jnp.float32) / jnp.sqrt(jnp.float32(cout))
    v = None
    for _ in range(n_iters):
        v = wm.T @ u
        v = v / (jnp.linalg.norm(v) + 1e-12)
        u = wm @ v
        u = u / (jnp.linalg.norm(u) + 1e-12)
    sigma = u @ (wm @ v)
    return (w_oihw / sigma).astype(w_oihw.dtype)


def _round_up(x, m):
    return ((x + m - 1) // m) * m


# ----------------------------------------------------------------------------
# Forward (jitted so the small glue ops — pad / phase-split / final slice —
# are scheduled around the pallas_calls in one XLA program).
# ----------------------------------------------------------------------------
def _forward_impl(params, x_nchw, *, configs, padw, use_sigmoid, out_channels):
    # NCHW in / NCHW out (PyTorch convention); NHWC bf16 inside.
    x = jnp.transpose(x_nchw, (0, 2, 3, 1)).astype(jnp.bfloat16)
    n_layers = len(configs)
    for i, ((w, b), (stride, act)) in enumerate(zip(params, configs)):
        last = i == n_layers - 1
        x = conv2d_pallas(x, w, b, stride, padw, apply_act=act,
                          apply_sigmoid=(last and use_sigmoid))
    x = x[..., :out_channels]                       # drop lane-padding channels
    return jnp.transpose(x, (0, 3, 1, 2)).astype(jnp.float32)


# ----------------------------------------------------------------------------
# NLayerDiscriminator
# ----------------------------------------------------------------------------
class NLayerDiscriminatorPallas:
    def __init__(self, input_nc, ndf=64, n_layers=3, use_sigmoid=False, key=None):
        if key is None:
            key = jax.random.PRNGKey(0)
        self.use_sigmoid = use_sigmoid
        kw = 4
        self.padw = 2  # ceil((4 - 1) / 2)

        # (cin, cout, stride, use_spectral_norm, apply_leaky_relu)
        specs = [(input_nc, ndf, 2, False, True)]
        nf = ndf
        for _ in range(1, n_layers):
            nf_prev, nf = nf, min(nf * 2, 512)
            specs.append((nf_prev, nf, 2, True, True))
        nf_prev, nf = nf, min(nf * 2, 512)
        specs.append((nf_prev, nf, 1, True, True))
        specs.append((nf, 1, 1, False, False))

        params = []
        configs = []
        prev_cout_pad = input_nc            # channels actually carried between layers
        for (cin, cout, stride, use_sn, act) in specs:
            key, k_w, k_b = jax.random.split(key, 3)
            w = jax.random.normal(k_w, (cout, cin, kw, kw), jnp.float32) * 0.05
            b = jax.random.normal(k_b, (cout,), jnp.float32) * 0.01
            if use_sn:
                w = spectral_normalize(w)

            cin_pad = prev_cout_pad                 # == cin for the first layer
            cout_pad = _round_up(cout, 128)         # lane-dense output channels
            # (Cout,Cin,KH,KW) -> (KH,KW,Cin,Cout), zero-pad channels, pre-cast bf16
            w_t = jnp.transpose(w, (2, 3, 1, 0))
            w_t = jnp.pad(w_t, ((0, 0), (0, 0),
                                (0, cin_pad - cin), (0, cout_pad - cout)))
            b_p = jnp.pad(b, (0, cout_pad - cout)).reshape(1, cout_pad)

            params.append((w_t.astype(jnp.bfloat16), b_p.astype(jnp.float32)))
            configs.append((stride, act))
            prev_cout_pad = cout_pad

        self.params = params
        self.configs = tuple(configs)
        self.out_channels = specs[-1][1]    # 1
        self._forward = jax.jit(functools.partial(
            _forward_impl, configs=self.configs, padw=self.padw,
            use_sigmoid=self.use_sigmoid, out_channels=self.out_channels))

    def __call__(self, x_nchw):
        return self._forward(self.params, x_nchw)


# ----------------------------------------------------------------------------
if __name__ == "__main__":
    key = jax.random.PRNGKey(0)
    k_in, k_model = jax.random.split(key)

    # Small shapes consistent with the module: batch=2, input_nc=4, 16x16 image,
    # ndf=8, n_layers=3  ->  output (2, 1, 5, 5)
    x = jax.random.normal(k_in, (2, 4, 16, 16), jnp.float32)
    model = NLayerDiscriminatorPallas(input_nc=4, ndf=8, n_layers=3, key=k_model)

    out = model(x)
    out = jax.block_until_ready(out)
    assert out.shape == (2, 1, 5, 5), out.shape
    print("KERNEL_OK")
</pallas_src>

<mosaic_0001>
module attributes {stable_mosaic.version = 11 : i64} {
  func.func @_conv_row_kernel(%arg0: i32, %arg1: i32, %arg2: i32, %arg3: memref<1x1x2x10x4xbf16, #tpu.memory_space<vmem>>, %arg4: memref<4x4x4x128xbf16, #tpu.memory_space<vmem>>, %arg5: memref<1x128xf32, #tpu.memory_space<vmem>>, %arg6: memref<1x1x9x128xbf16, #tpu.memory_space<vmem>>, %arg7: memref<9x128xf32, #tpu.memory_space<vmem>>) attributes {dimension_semantics = [#tpu.dimension_semantics<parallel>, #tpu.dimension_semantics<parallel>, #tpu.dimension_semantics<arbitrary>], iteration_bounds = array<i64: 2, 9, 4>, scalar_prefetch = 0 : i64, scratch_operands = 1 : i64, tpu.core_type = #tpu.core_type<tc>, window_params = [{transform_indices = @transform_0, window_bounds = array<i64: 1, 1, 2, 10, 4>}, {pipeline_mode = #tpu.pipeline_mode<synchronous>, transform_indices = @transform_1, window_bounds = array<i64: 4, 4, 4, 128>}, {pipeline_mode = #tpu.pipeline_mode<synchronous>, transform_indices = @transform_2, window_bounds = array<i64: 1, 128>}, {transform_indices = @transform_3, window_bounds = array<i64: 1, 1, 9, 128>}]} {
    %c0_i32 = arith.constant 0 : i32
    %0 = arith.cmpi eq, %arg2, %c0_i32 : i32
    %1 = arith.extui %0 : i1 to i32
    %c0_i32_0 = arith.constant 0 : i32
    %2 = arith.cmpi ne, %1, %c0_i32_0 : i32
    scf.if %2 {
      %cst_37 = arith.constant 0.000000e+00 : f32
      %36 = vector.broadcast %cst_37 : f32 to vector<9x128xf32>
      %c0_38 = arith.constant 0 : index
      %c0_39 = arith.constant 0 : index
      %37 = vector.load %arg7[%c0_38, %c0_39] : memref<9x128xf32, #tpu.memory_space<vmem>>, vector<9x128xf32>
      tpu.vector_store %arg7[%c0_38, %c0_39], %36 {strides = array<i32>} : memref<9x128xf32, #tpu.memory_space<vmem>>, vector<9x128xf32>,
    } else {
    }
    %c0 = arith.constant 0 : index
    %c0_1 = arith.constant 0 : index
    %3 = vector.load %arg7[%c0, %c0_1] : memref<9x128xf32, #tpu.memory_space<vmem>>, vector<9x128xf32>
    %c0_2 = arith.constant 0 : index
    %c0_3 = arith.constant 0 : index
    %c0_4 = arith.constant 0 : index
    %c0_5 = arith.constant 0 : index
    %c0_6 = arith.constant 0 : index
    %4 = vector.load %arg3[%c0_2, %c0_3, %c0_4, %c0_5, %c0_6] : memref<1x1x2x10x4xbf16, #tpu.memory_space<vmem>>, vector<1x1x1x9x4xbf16>
    %5 = vector.shape_cast %4 : vector<1x1x1x9x4xbf16> to vector<9x4xbf16>
    %6 = arith.index_cast %arg2 : i32 to index
    %c0_7 = arith.constant 0 : index
    %c0_8 = arith.constant 0 : index
    %c0_9 = arith.constant 0 : index
    %7 = vector.load %arg4[%6, %c0_7, %c0_8, %c0_9] : memref<4x4x4x128xbf16, #tpu.memory_space<vmem>>, vector<1x1x4x128xbf16>
    %8 = vector.shape_cast %7 : vector<1x1x4x128xbf16> to vector<4x128xbf16>
    %cst = arith.constant dense<0.000000e+00> : vector<9x128xf32>
    %9 = tpu.matmul %5, %8, %cst {dimension_numbers = #tpu.dot_dimension_numbers<[1], [0], [0], [1], [0, 0, 1, 1], [], []>} : vector<9x4xbf16>, vector<4x128xbf16>, vector<9x128xf32> -> vector<9x128xf32>
    %10 = arith.addf %3, %9 : vector<9x128xf32>
    %c0_10 = arith.constant 0 : index
    %c0_11 = arith.constant 0 : index
    %c1 = arith.constant 1 : index
    %c0_12 = arith.constant 0 : index
    %c0_13 = arith.constant 0 : index
    %11 = vector.load %arg3[%c0_10, %c0_11, %c1, %c0_12, %c0_13] : memref<1x1x2x10x4xbf16, #tpu.memory_space<vmem>>, vector<1x1x1x9x4xbf16>
    %12 = vector.shape_cast %11 : vector<1x1x1x9x4xbf16> to vector<9x4xbf16>
    %13 = arith.index_cast %arg2 : i32 to index
    %c1_14 = arith.constant 1 : index
    %c0_15 = arith.constant 0 : index
    %c0_16 = arith.constant 0 : index
    %14 = vector.load %arg4[%13, %c1_14, %c0_15, %c0_16] : memref<4x4x4x128xbf16, #tpu.memory_space<vmem>>, vector<1x1x4x128xbf16>
    %15 = vector.shape_cast %14 : vector<1x1x4x128xbf16> to vector<4x128xbf16>
    %cst_17 = arith.constant dense<0.000000e+00> : vector<9x128xf32>
    %16 = tpu.matmul %12, %15, %cst_17 {dimension_numbers = #tpu.dot_dimension_numbers<[1], [0], [0], [1], [0, 0, 1, 1], [], []>} : vector<9x4xbf16>, vector<4x128xbf16>, vector<9x128xf32> -> vector<9x128xf32>
    %17 = arith.addf %10, %16 : vector<9x128xf32>
    %c0_18 = arith.constant 0 : index
    %c0_19 = arith.constant 0 : index
    %c0_20 = arith.constant 0 : index
    %c1_21 = arith.constant 1 : index
    %c0_22 = arith.constant 0 : index
    %18 = vector.load %arg3[%c0_18, %c0_19, %c0_20, %c1_21, %c0_22] : memref<1x1x2x10x4xbf16, #tpu.memory_space<vmem>>, vector<1x1x1x9x4xbf16>
    %19 = vector.shape_cast %18 : vector<1x1x1x9x4xbf16> to vector<9x4xbf16>
    %20 = arith.index_cast %arg2 : i32 to index
    %c2 = arith.constant 2 : index
    %c0_23 = arith.constant 0 : index
    %c0_24 = arith.constant 0 : index
    %21 = vector.load %arg4[%20, %c2, %c0_23, %c0_24] : memref<4x4x4x128xbf16, #tpu.memory_space<vmem>>, vector<1x1x4x128xbf16>
    %22 = vector.shape_cast %21 : vector<1x1x4x128xbf16> to vector<4x128xbf16>
    %cst_25 = arith.constant dense<0.000000e+00> : vector<9x128xf32>
    %23 = tpu.matmul %19, %22, %cst_25 {dimension_numbers = #tpu.dot_dimension_numbers<[1], [0], [0], [1], [0, 0, 1, 1], [], []>} : vector<9x4xbf16>, vector<4x128xbf16>, vector<9x128xf32> -> vector<9x128xf32>
    %24 = arith.addf %17, %23 : vector<9x128xf32>
    %c0_26 = arith.constant 0 : index
    %c0_27 = arith.constant 0 : index
    %c1_28 = arith.constant 1 : index
    %c1_29 = arith.constant 1 : index
    %c0_30 = arith.constant 0 : index
    %25 = vector.load %arg3[%c0_26, %c0_27, %c1_28, %c1_29, %c0_30] : memref<1x1x2x10x4xbf16, #tpu.memory_space<vmem>>, vector<1x1x1x9x4xbf16>
    %26 = vector.shape_cast %25 : vector<1x1x1x9x4xbf16> to vector<9x4xbf16>
    %27 = arith.index_cast %arg2 : i32 to index
    %c3 = arith.constant 3 : index
    %c0_31 = arith.constant 0 : index
    %c0_32 = arith.constant 0 : index
    %28 = vector.load %arg4[%27, %c3, %c0_31, %c0_32] : memref<4x4x4x128xbf16, #tpu.memory_space<vmem>>, vector<1x1x4x128xbf16>
    %29 = vector.shape_cast %28 : vector<1x1x4x128xbf16> to vector<4x128xbf16>
    %cst_33 = arith.constant dense<0.000000e+00> : vector<9x128xf32>
    %30 = tpu.matmul %26, %29, %cst_33 {dimension_numbers = #tpu.dot_dimension_numbers<[1], [0], [0], [1], [0, 0, 1, 1], [], []>} : vector<9x4xbf16>, vector<4x128xbf16>, vector<9x128xf32> -> vector<9x128xf32>
    %31 = arith.addf %24, %30 : vector<9x128xf32>
    %c0_34 = arith.constant 0 : index
    %c0_35 = arith.constant 0 : index
    %32 = vector.load %arg7[%c0_34, %c0_35] : memref<9x128xf32, #tpu.memory_space<vmem>>, vector<9x128xf32>
    tpu.vector_store %arg7[%c0_34, %c0_35], %31 {strides = array<i32>} : memref<9x128xf32, #tpu.memory_space<vmem>>, vector<9x128xf32>,
    %c3_i32 = arith.constant 3 : i32
    %33 = arith.cmpi eq, %arg2, %c3_i32 : i32
    %34 = arith.extui %33 : i1 to i32
    %c0_i32_36 = arith.constant 0 : i32
    %35 = arith.cmpi ne, %34, %c0_i32_36 : i32
    scf.if %35 {
      %c0_37 = arith.constant 0 : index
      %c0_38 = arith.constant 0 : index
      %36 = vector.load %arg7[%c0_37, %c0_38] : memref<9x128xf32, #tpu.memory_space<vmem>>, vector<9x128xf32>
      %c0_39 = arith.constant 0 : index
      %c0_40 = arith.constant 0 : index
      %37 = vector.load %arg5[%c0_39, %c0_40] : memref<1x128xf32, #tpu.memory_space<vmem>>, vector<1x128xf32>
      %38 = vector.broadcast %37 : vector<1x128xf32> to vector<9x128xf32>
      %39 = arith.addf %36, %38 : vector<9x128xf32>
      %cst_41 = arith.constant 0.000000e+00 : f32
      %40 = vector.broadcast %cst_41 : f32 to vector<9x128xf32>
      %41 = arith.cmpf ogt, %39, %40 : vector<9x128xf32>
      %cst_42 = arith.constant 2.000000e-01 : f32
      %42 = vector.broadcast %cst_42 : f32 to vector<9x128xf32>
      %43 = arith.mulf %42, %39 : vector<9x128xf32>
      %44 = arith.select %41, %39, %43 : vector<9x128xi1>, vector<9x128xf32>
      %45 = arith.truncf %44 : vector<9x128xf32> to vector<9x128xbf16>
      %c0_43 = arith.constant 0 : index
      %c0_44 = arith.constant 0 : index
      %c0_45 = arith.constant 0 : index
      %c0_46 = arith.constant 0 : index
      %46 = vector.load %arg6[%c0_43, %c0_44, %c0_45, %c0_46] : memref<1x1x9x128xbf16, #tpu.memory_space<vmem>>, vector<1x1x9x128xbf16>
      %47 = vector.shape_cast %46 : vector<1x1x9x128xbf16> to vector<9x128xbf16>
      %48 = vector.shape_cast %45 : vector<9x128xbf16> to vector<1x1x9x128xbf16>
      tpu.vector_store %arg6[%c0_43, %c0_44, %c0_45, %c0_46], %48 {strides = array<i32>} : memref<1x1x9x128xbf16, #tpu.memory_space<vmem>>, vector<1x1x9x128xbf16>,
    } else {
    }
    return
  }
  func.func @transform_0(%arg0: i32, %arg1: i32, %arg2: i32) -> (i32, i32, i32, i32, i32) {
    %c2_i32 = arith.constant 2 : i32
    %0 = arith.muli %arg1, %c2_i32 : i32
    %1 = arith.addi %0, %arg2 : i32
    %c0_i32 = arith.constant 0 : i32
    %c0_i32_0 = arith.constant 0 : i32
    %c0_i32_1 = arith.constant 0 : i32
    %c0_i32_2 = arith.constant 0 : i32
    return %arg0, %1, %c0_i32, %c0_i32_0, %c0_i32_1 : i32, i32, i32, i32, i32
  }
  func.func @transform_1(%arg0: i32, %arg1: i32, %arg2: i32) -> (i32, i32, i32, i32) {
    %c0_i32 = arith.constant 0 : i32
    %c0_i32_0 = arith.constant 0 : i32
    %c0_i32_1 = arith.constant 0 : i32
    %c0_i32_2 = arith.constant 0 : i32
    %c0_i32_3 = arith.constant 0 : i32
    return %c0_i32, %c0_i32_0, %c0_i32_1, %c0_i32_2 : i32, i32, i32, i32
  }
  func.func @transform_2(%arg0: i32, %arg1: i32, %arg2: i32) -> (i32, i32) {
    %c0_i32 = arith.constant 0 : i32
    %c0_i32_0 = arith.constant 0 : i32
    %c0_i32_1 = arith.constant 0 : i32
    return %c0_i32, %c0_i32_0 : i32, i32
  }
  func.func @transform_3(%arg0: i32, %arg1: i32, %arg2: i32) -> (i32, i32, i32, i32) {
    %c0_i32 = arith.constant 0 : i32
    %c0_i32_0 = arith.constant 0 : i32
    %c0_i32_1 = arith.constant 0 : i32
    return %arg0, %arg1, %c0_i32, %c0_i32_0 : i32, i32, i32, i32
  }
}

module attributes {stable_mosaic.version = 11 : i64} {
  func.func @_conv_row_kernel(%arg0: i32, %arg1: i32, %arg2: i32, %arg3: memref<1x1x2x7x128xbf16, #tpu.memory_space<vmem>>, %arg4: memref<4x4x128x128xbf16, #tpu.memory_space<vmem>>, %arg5: memref<1x128xf32, #tpu.memory_space<vmem>>, %arg6: memref<1x1x5x128xbf16, #tpu.memory_space<vmem>>, %arg7: memref<5x128xf32, #tpu.memory_space<vmem>>) attributes {dimension_semantics = [#tpu.dimension_semantics<parallel>, #tpu.dimension_semantics<parallel>, #tpu.dimension_semantics<arbitrary>], iteration_bounds = array<i64: 2, 5, 4>, scalar_prefetch = 0 : i64, scratch_operands = 1 : i64, tpu.core_type = #tpu.core_type<tc>, window_params = [{transform_indices = @transform_0, window_bounds = array<i64: 1, 1, 2, 7, 128>}, {pipeline_mode = #tpu.pipeline_mode<synchronous>, transform_indices = @transform_1, window_bounds = array<i64: 4, 4, 128, 128>}, {pipeline_mode = #tpu.pipeline_mode<synchronous>, transform_indices = @transform_2, window_bounds = array<i64: 1, 128>}, {transform_indices = @transform_3, window_bounds = array<i64: 1, 1, 5, 128>}]} {
    %c0_i32 = arith.constant 0 : i32
    %0 = arith.cmpi eq, %arg2, %c0_i32 : i32
    %1 = arith.extui %0 : i1 to i32
    %c0_i32_0 = arith.constant 0 : i32
    %2 = arith.cmpi ne, %1, %c0_i32_0 : i32
    scf.if %2 {
      %cst_37 = arith.constant 0.000000e+00 : f32
      %36 = vector.broadcast %cst_37 : f32 to vector<5x128xf32>
      %c0_38 = arith.constant 0 : index
      %c0_39 = arith.constant 0 : index
      %37 = vector.load %arg7[%c0_38, %c0_39] : memref<5x128xf32, #tpu.memory_space<vmem>>, vector<5x128xf32>
      tpu.vector_store %arg7[%c0_38, %c0_39], %36 {strides = array<i32>} : memref<5x128xf32, #tpu.memory_space<vmem>>, vector<5x128xf32>,
    } else {
    }
    %c0 = arith.constant 0 : index
    %c0_1 = arith.constant 0 : index
    %3 = vector.load %arg7[%c0, %c0_1] : memref<5x128xf32, #tpu.memory_space<vmem>>, vector<5x128xf32>
    %c0_2 = arith.constant 0 : index
    %c0_3 = arith.constant 0 : index
    %c0_4 = arith.constant 0 : index
    %c0_5 = arith.constant 0 : index
    %c0_6 = arith.constant 0 : index
    %4 = vector.load %arg3[%c0_2, %c0_3, %c0_4, %c0_5, %c0_6] : memref<1x1x2x7x128xbf16, #tpu.memory_space<vmem>>, vector<1x1x1x5x128xbf16>
    %5 = vector.shape_cast %4 : vector<1x1x1x5x128xbf16> to vector<5x128xbf16>
    %6 = arith.index_cast %arg2 : i32 to index
    %c0_7 = arith.constant 0 : index
    %c0_8 = arith.constant 0 : index
    %c0_9 = arith.constant 0 : index
    %7 = vector.load %arg4[%6, %c0_7, %c0_8, %c0_9] : memref<4x4x128x128xbf16, #tpu.memory_space<vmem>>, vector<1x1x128x128xbf16>
    %8 = vector.shape_cast %7 : vector<1x1x128x128xbf16> to vector<128x128xbf16>
    %cst = arith.constant dense<0.000000e+00> : vector<5x128xf32>
    %9 = tpu.matmul %5, %8, %cst {dimension_numbers = #tpu.dot_dimension_numbers<[1], [0], [0], [1], [0, 0, 1, 1], [], []>} : vector<5x128xbf16>, vector<128x128xbf16>, vector<5x128xf32> -> vector<5x128xf32>
    %10 = arith.addf %3, %9 : vector<5x128xf32>
    %c0_10 = arith.constant 0 : index
    %c0_11 = arith.constant 0 : index
    %c1 = arith.constant 1 : index
    %c0_12 = arith.constant 0 : index
    %c0_13 = arith.constant 0 : index
    %11 = vector.load %arg3[%c0_10, %c0_11, %c1, %c0_12, %c0_13] : memref<1x1x2x7x128xbf16, #tpu.memory_space<vmem>>, vector<1x1x1x5x128xbf16>
    %12 = vector.shape_cast %11 : vector<1x1x1x5x128xbf16> to vector<5x128xbf16>
    %13 = arith.index_cast %arg2 : i32 to index
    %c1_14 = arith.constant 1 : index
    %c0_15 = arith.constant 0 : index
    %c0_16 = arith.constant 0 : index
    %14 = vector.load %arg4[%13, %c1_14, %c0_15, %c0_16] : memref<4x4x128x128xbf16, #tpu.memory_space<vmem>>, vector<1x1x128x128xbf16>
    %15 = vector.shape_cast %14 : vector<1x1x128x128xbf16> to vector<128x128xbf16>
    %cst_17 = arith.constant dense<0.000000e+00> : vector<5x128xf32>
    %16 = tpu.matmul %12, %15, %cst_17 {dimension_numbers = #tpu.dot_dimension_numbers<[1], [0], [0], [1], [0, 0, 1, 1], [], []>} : vector<5x128xbf16>, vector<128x128xbf16>, vector<5x128xf32> -> vector<5x128xf32>
    %17 = arith.addf %10, %16 : vector<5x128xf32>
    %c0_18 = arith.constant 0 : index
    %c0_19 = arith.constant 0 : index
    %c0_20 = arith.constant 0 : index
    %c1_21 = arith.constant 1 : index
    %c0_22 = arith.constant 0 : index
    %18 = vector.load %arg3[%c0_18, %c0_19, %c0_20, %c1_21, %c0_22] : memref<1x1x2x7x128xbf16, #tpu.memory_space<vmem>>, vector<1x1x1x5x128xbf16>
    %19 = vector.shape_cast %18 : vector<1x1x1x5x128xbf16> to vector<5x128xbf16>
    %20 = arith.index_cast %arg2 : i32 to index
    %c2 = arith.constant 2 : index
    %c0_23 = arith.constant 0 : index
    %c0_24 = arith.constant 0 : index
    %21 = vector.load %arg4[%20, %c2, %c0_23, %c0_24] : memref<4x4x128x128xbf16, #tpu.memory_space<vmem>>, vector<1x1x128x128xbf16>
    %22 = vector.shape_cast %21 : vector<1x1x128x128xbf16> to vector<128x128xbf16>
    %cst_25 = arith.constant dense<0.000000e+00> : vector<5x128xf32>
    %23 = tpu.matmul %19, %22, %cst_25 {dimension_numbers = #tpu.dot_dimension_numbers<[1], [0], [0], [1], [0, 0, 1, 1], [], []>} : vector<5x128xbf16>, vector<128x128xbf16>, vector<5x128xf32> -> vector<5x128xf32>
    %24 = arith.addf %17, %23 : vector<5x128xf32>
    %c0_26 = arith.constant 0 : index
    %c0_27 = arith.constant 0 : index
    %c1_28 = arith.constant 1 : index
    %c1_29 = arith.constant 1 : index
    %c0_30 = arith.constant 0 : index
    %25 = vector.load %arg3[%c0_26, %c0_27, %c1_28, %c1_29, %c0_30] : memref<1x1x2x7x128xbf16, #tpu.memory_space<vmem>>, vector<1x1x1x5x128xbf16>
    %26 = vector.shape_cast %25 : vector<1x1x1x5x128xbf16> to vector<5x128xbf16>
    %27 = arith.index_cast %arg2 : i32 to index
    %c3 = arith.constant 3 : index
    %c0_31 = arith.constant 0 : index
    %c0_32 = arith.constant 0 : index
    %28 = vector.load %arg4[%27, %c3, %c0_31, %c0_32] : memref<4x4x128x128xbf16, #tpu.memory_space<vmem>>, vector<1x1x128x128xbf16>
    %29 = vector.shape_cast %28 : vector<1x1x128x128xbf16> to vector<128x128xbf16>
    %cst_33 = arith.constant dense<0.000000e+00> : vector<5x128xf32>
    %30 = tpu.matmul %26, %29, %cst_33 {dimension_numbers = #tpu.dot_dimension_numbers<[1], [0], [0], [1], [0, 0, 1, 1], [], []>} : vector<5x128xbf16>, vector<128x128xbf16>, vector<5x128xf32> -> vector<5x128xf32>
    %31 = arith.addf %24, %30 : vector<5x128xf32>
    %c0_34 = arith.constant 0 : index
    %c0_35 = arith.constant 0 : index
    %32 = vector.load %arg7[%c0_34, %c0_35] : memref<5x128xf32, #tpu.memory_space<vmem>>, vector<5x128xf32>
    tpu.vector_store %arg7[%c0_34, %c0_35], %31 {strides = array<i32>} : memref<5x128xf32, #tpu.memory_space<vmem>>, vector<5x128xf32>,
    %c3_i32 = arith.constant 3 : i32
    %33 = arith.cmpi eq, %arg2, %c3_i32 : i32
    %34 = arith.extui %33 : i1 to i32
    %c0_i32_36 = arith.constant 0 : i32
    %35 = arith.cmpi ne, %34, %c0_i32_36 : i32
    scf.if %35 {
      %c0_37 = arith.constant 0 : index
      %c0_38 = arith.constant 0 : index
      %36 = vector.load %arg7[%c0_37, %c0_38] : memref<5x128xf32, #tpu.memory_space<vmem>>, vector<5x128xf32>
      %c0_39 = arith.constant 0 : index
      %c0_40 = arith.constant 0 : index
      %37 = vector.load %arg5[%c0_39, %c0_40] : memref<1x128xf32, #tpu.memory_space<vmem>>, vector<1x128xf32>
      %38 = vector.broadcast %37 : vector<1x128xf32> to vector<5x128xf32>
      %39 = arith.addf %36, %38 : vector<5x128xf32>
      %cst_41 = arith.constant 0.000000e+00 : f32
      %40 = vector.broadcast %cst_41 : f32 to vector<5x128xf32>
      %41 = arith.cmpf ogt, %39, %40 : vector<5x128xf32>
      %cst_42 = arith.constant 2.000000e-01 : f32
      %42 = vector.broadcast %cst_42 : f32 to vector<5x128xf32>
      %43 = arith.mulf %42, %39 : vector<5x128xf32>
      %44 = arith.select %41, %39, %43 : vector<5x128xi1>, vector<5x128xf32>
      %45 = arith.truncf %44 : vector<5x128xf32> to vector<5x128xbf16>
      %c0_43 = arith.constant 0 : index
      %c0_44 = arith.constant 0 : index
      %c0_45 = arith.constant 0 : index
      %c0_46 = arith.constant 0 : index
      %46 = vector.load %arg6[%c0_43, %c0_44, %c0_45, %c0_46] : memref<1x1x5x128xbf16, #tpu.memory_space<vmem>>, vector<1x1x5x128xbf16>
      %47 = vector.shape_cast %46 : vector<1x1x5x128xbf16> to vector<5x128xbf16>
      %48 = vector.shape_cast %45 : vector<5x128xbf16> to vector<1x1x5x128xbf16>
      tpu.vector_store %arg6[%c0_43, %c0_44, %c0_45, %c0_46], %48 {strides = array<i32>} : memref<1x1x5x128xbf16, #tpu.memory_space<vmem>>, vector<1x1x5x128xbf16>,
    } else {
    }
    return
  }
  func.func @transform_0(%arg0: i32, %arg1: i32, %arg2: i32) -> (i32, i32, i32, i32, i32) {
    %c2_i32 = arith.constant 2 : i32
    %0 = arith.muli %arg1, %c2_i32 : i32
    %1 = arith.addi %0, %arg2 : i32
    %c0_i32 = arith.constant 0 : i32
    %c0_i32_0 = arith.constant 0 : i32
    %c0_i32_1 = arith.constant 0 : i32
    %c0_i32_2 = arith.constant 0 : i32
    return %arg0, %1, %c0_i32, %c0_i32_0, %c0_i32_1 : i32, i32, i32, i32, i32
  }
  func.func @transform_1(%arg0: i32, %arg1: i32, %arg2: i32) -> (i32, i32, i32, i32) {
    %c0_i32 = arith.constant 0 : i32
    %c0_i32_0 = arith.constant 0 : i32
    %c0_i32_1 = arith.constant 0 : i32
    %c0_i32_2 = arith.constant 0 : i32
    %c0_i32_3 = arith.constant 0 : i32
    return %c0_i32, %c0_i32_0, %c0_i32_1, %c0_i32_2 : i32, i32, i32, i32
  }
  func.func @transform_2(%arg0: i32, %arg1: i32, %arg2: i32) -> (i32, i32) {
    %c0_i32 = arith.constant 0 : i32
    %c0_i32_0 = arith.constant 0 : i32
    %c0_i32_1 = arith.constant 0 : i32
    return %c0_i32, %c0_i32_0 : i32, i32
  }
  func.func @transform_3(%arg0: i32, %arg1: i32, %arg2: i32) -> (i32, i32, i32, i32) {
    %c0_i32 = arith.constant 0 : i32
    %c0_i32_0 = arith.constant 0 : i32
    %c0_i32_1 = arith.constant 0 : i32
    return %arg0, %arg1, %c0_i32, %c0_i32_0 : i32, i32, i32, i32
  }
}

module attributes {stable_mosaic.version = 11 : i64} {
  func.func @_conv_row_kernel(%arg0: i32, %arg1: i32, %arg2: i32, %arg3: memref<1x1x2x5x128xbf16, #tpu.memory_space<vmem>>, %arg4: memref<4x4x128x128xbf16, #tpu.memory_space<vmem>>, %arg5: memref<1x128xf32, #tpu.memory_space<vmem>>, %arg6: memref<1x1x3x128xbf16, #tpu.memory_space<vmem>>, %arg7: memref<3x128xf32, #tpu.memory_space<vmem>>) attributes {dimension_semantics = [#tpu.dimension_semantics<parallel>, #tpu.dimension_semantics<parallel>, #tpu.dimension_semantics<arbitrary>], iteration_bounds = array<i64: 2, 3, 4>, scalar_prefetch = 0 : i64, scratch_operands = 1 : i64, tpu.core_type = #tpu.core_type<tc>, window_params = [{transform_indices = @transform_0, window_bounds = array<i64: 1, 1, 2, 5, 128>}, {pipeline_mode = #tpu.pipeline_mode<synchronous>, transform_indices = @transform_1, window_bounds = array<i64: 4, 4, 128, 128>}, {pipeline_mode = #tpu.pipeline_mode<synchronous>, transform_indices = @transform_2, window_bounds = array<i64: 1, 128>}, {transform_indices = @transform_3, window_bounds = array<i64: 1, 1, 3, 128>}]} {
    %c0_i32 = arith.constant 0 : i32
    %0 = arith.cmpi eq, %arg2, %c0_i32 : i32
    %1 = arith.extui %0 : i1 to i32
    %c0_i32_0 = arith.constant 0 : i32
    %2 = arith.cmpi ne, %1, %c0_i32_0 : i32
    scf.if %2 {
      %cst_37 = arith.constant 0.000000e+00 : f32
      %36 = vector.broadcast %cst_37 : f32 to vector<3x128xf32>
      %c0_38 = arith.constant 0 : index
      %c0_39 = arith.constant 0 : index
      %37 = vector.load %arg7[%c0_38, %c0_39] : memref<3x128xf32, #tpu.memory_space<vmem>>, vector<3x128xf32>
      tpu.vector_store %arg7[%c0_38, %c0_39], %36 {strides = array<i32>} : memref<3x128xf32, #tpu.memory_space<vmem>>, vector<3x128xf32>,
    } else {
    }
    %c0 = arith.constant 0 : index
    %c0_1 = arith.constant 0 : index
    %3 = vector.load %arg7[%c0, %c0_1] : memref<3x128xf32, #tpu.memory_space<vmem>>, vector<3x128xf32>
    %c0_2 = arith.constant 0 : index
    %c0_3 = arith.constant 0 : index
    %c0_4 = arith.constant 0 : index
    %c0_5 = arith.constant 0 : index
    %c0_6 = arith.constant 0 : index
    %4 = vector.load %arg3[%c0_2, %c0_3, %c0_4, %c0_5, %c0_6] : memref<1x1x2x5x128xbf16, #tpu.memory_space<vmem>>, vector<1x1x1x3x128xbf16>
    %5 = vector.shape_cast %4 : vector<1x1x1x3x128xbf16> to vector<3x128xbf16>
    %6 = arith.index_cast %arg2 : i32 to index
    %c0_7 = arith.constant 0 : index
    %c0_8 = arith.constant 0 : index
    %c0_9 = arith.constant 0 : index
    %7 = vector.load %arg4[%6, %c0_7, %c0_8, %c0_9] : memref<4x4x128x128xbf16, #tpu.memory_space<vmem>>, vector<1x1x128x128xbf16>
    %8 = vector.shape_cast %7 : vector<1x1x128x128xbf16> to vector<128x128xbf16>
    %cst = arith.constant dense<0.000000e+00> : vector<3x128xf32>
    %9 = tpu.matmul %5, %8, %cst {dimension_numbers = #tpu.dot_dimension_numbers<[1], [0], [0], [1], [0, 0, 1, 1], [], []>} : vector<3x128xbf16>, vector<128x128xbf16>, vector<3x128xf32> -> vector<3x128xf32>
    %10 = arith.addf %3, %9 : vector<3x128xf32>
    %c0_10 = arith.constant 0 : index
    %c0_11 = arith.constant 0 : index
    %c1 = arith.constant 1 : index
    %c0_12 = arith.constant 0 : index
    %c0_13 = arith.constant 0 : index
    %11 = vector.load %arg3[%c0_10, %c0_11, %c1, %c0_12, %c0_13] : memref<1x1x2x5x128xbf16, #tpu.memory_space<vmem>>, vector<1x1x1x3x128xbf16>
    %12 = vector.shape_cast %11 : vector<1x1x1x3x128xbf16> to vector<3x128xbf16>
    %13 = arith.index_cast %arg2 : i32 to index
    %c1_14 = arith.constant 1 : index
    %c0_15 = arith.constant 0 : index
    %c0_16 = arith.constant 0 : index
    %14 = vector.load %arg4[%13, %c1_14, %c0_15, %c0_16] : memref<4x4x128x128xbf16, #tpu.memory_space<vmem>>, vector<1x1x128x128xbf16>
    %15 = vector.shape_cast %14 : vector<1x1x128x128xbf16> to vector<128x128xbf16>
    %cst_17 = arith.constant dense<0.000000e+00> : vector<3x128xf32>
    %16 = tpu.matmul %12, %15, %cst_17 {dimension_numbers = #tpu.dot_dimension_numbers<[1], [0], [0], [1], [0, 0, 1, 1], [], []>} : vector<3x128xbf16>, vector<128x128xbf16>, vector<3x128xf32> -> vector<3x128xf32>
    %17 = arith.addf %10, %16 : vector<3x128xf32>
    %c0_18 = arith.constant 0 : index
    %c0_19 = arith.constant 0 : index
    %c0_20 = arith.constant 0 : index
    %c1_21 = arith.constant 1 : index
    %c0_22 = arith.constant 0 : index
    %18 = vector.load %arg3[%c0_18, %c0_19, %c0_20, %c1_21, %c0_22] : memref<1x1x2x5x128xbf16, #tpu.memory_space<vmem>>, vector<1x1x1x3x128xbf16>
    %19 = vector.shape_cast %18 : vector<1x1x1x3x128xbf16> to vector<3x128xbf16>
    %20 = arith.index_cast %arg2 : i32 to index
    %c2 = arith.constant 2 : index
    %c0_23 = arith.constant 0 : index
    %c0_24 = arith.constant 0 : index
    %21 = vector.load %arg4[%20, %c2, %c0_23, %c0_24] : memref<4x4x128x128xbf16, #tpu.memory_space<vmem>>, vector<1x1x128x128xbf16>
    %22 = vector.shape_cast %21 : vector<1x1x128x128xbf16> to vector<128x128xbf16>
    %cst_25 = arith.constant dense<0.000000e+00> : vector<3x128xf32>
    %23 = tpu.matmul %19, %22, %cst_25 {dimension_numbers = #tpu.dot_dimension_numbers<[1], [0], [0], [1], [0, 0, 1, 1], [], []>} : vector<3x128xbf16>, vector<128x128xbf16>, vector<3x128xf32> -> vector<3x128xf32>
    %24 = arith.addf %17, %23 : vector<3x128xf32>
    %c0_26 = arith.constant 0 : index
    %c0_27 = arith.constant 0 : index
    %c1_28 = arith.constant 1 : index
    %c1_29 = arith.constant 1 : index
    %c0_30 = arith.constant 0 : index
    %25 = vector.load %arg3[%c0_26, %c0_27, %c1_28, %c1_29, %c0_30] : memref<1x1x2x5x128xbf16, #tpu.memory_space<vmem>>, vector<1x1x1x3x128xbf16>
    %26 = vector.shape_cast %25 : vector<1x1x1x3x128xbf16> to vector<3x128xbf16>
    %27 = arith.index_cast %arg2 : i32 to index
    %c3 = arith.constant 3 : index
    %c0_31 = arith.constant 0 : index
    %c0_32 = arith.constant 0 : index
    %28 = vector.load %arg4[%27, %c3, %c0_31, %c0_32] : memref<4x4x128x128xbf16, #tpu.memory_space<vmem>>, vector<1x1x128x128xbf16>
    %29 = vector.shape_cast %28 : vector<1x1x128x128xbf16> to vector<128x128xbf16>
    %cst_33 = arith.constant dense<0.000000e+00> : vector<3x128xf32>
    %30 = tpu.matmul %26, %29, %cst_33 {dimension_numbers = #tpu.dot_dimension_numbers<[1], [0], [0], [1], [0, 0, 1, 1], [], []>} : vector<3x128xbf16>, vector<128x128xbf16>, vector<3x128xf32> -> vector<3x128xf32>
    %31 = arith.addf %24, %30 : vector<3x128xf32>
    %c0_34 = arith.constant 0 : index
    %c0_35 = arith.constant 0 : index
    %32 = vector.load %arg7[%c0_34, %c0_35] : memref<3x128xf32, #tpu.memory_space<vmem>>, vector<3x128xf32>
    tpu.vector_store %arg7[%c0_34, %c0_35], %31 {strides = array<i32>} : memref<3x128xf32, #tpu.memory_space<vmem>>, vector<3x128xf32>,
    %c3_i32 = arith.constant 3 : i32
    %33 = arith.cmpi eq, %arg2, %c3_i32 : i32
    %34 = arith.extui %33 : i1 to i32
    %c0_i32_36 = arith.constant 0 : i32
    %35 = arith.cmpi ne, %34, %c0_i32_36 : i32
    scf.if %35 {
      %c0_37 = arith.constant 0 : index
      %c0_38 = arith.constant 0 : index
      %36 = vector.load %arg7[%c0_37, %c0_38] : memref<3x128xf32, #tpu.memory_space<vmem>>, vector<3x128xf32>
      %c0_39 = arith.constant 0 : index
      %c0_40 = arith.constant 0 : index
      %37 = vector.load %arg5[%c0_39, %c0_40] : memref<1x128xf32, #tpu.memory_space<vmem>>, vector<1x128xf32>
      %38 = vector.broadcast %37 : vector<1x128xf32> to vector<3x128xf32>
      %39 = arith.addf %36, %38 : vector<3x128xf32>
      %cst_41 = arith.constant 0.000000e+00 : f32
      %40 = vector.broadcast %cst_41 : f32 to vector<3x128xf32>
      %41 = arith.cmpf ogt, %39, %40 : vector<3x128xf32>
      %cst_42 = arith.constant 2.000000e-01 : f32
      %42 = vector.broadcast %cst_42 : f32 to vector<3x128xf32>
      %43 = arith.mulf %42, %39 : vector<3x128xf32>
      %44 = arith.select %41, %39, %43 : vector<3x128xi1>, vector<3x128xf32>
      %45 = arith.truncf %44 : vector<3x128xf32> to vector<3x128xbf16>
      %c0_43 = arith.constant 0 : index
      %c0_44 = arith.constant 0 : index
      %c0_45 = arith.constant 0 : index
      %c0_46 = arith.constant 0 : index
      %46 = vector.load %arg6[%c0_43, %c0_44, %c0_45, %c0_46] : memref<1x1x3x128xbf16, #tpu.memory_space<vmem>>, vector<1x1x3x128xbf16>
      %47 = vector.shape_cast %46 : vector<1x1x3x128xbf16> to vector<3x128xbf16>
      %48 = vector.shape_cast %45 : vector<3x128xbf16> to vector<1x1x3x128xbf16>
      tpu.vector_store %arg6[%c0_43, %c0_44, %c0_45, %c0_46], %48 {strides = array<i32>} : memref<1x1x3x128xbf16, #tpu.memory_space<vmem>>, vector<1x1x3x128xbf16>,
    } else {
    }
    return
  }
  func.func @transform_0(%arg0: i32, %arg1: i32, %arg2: i32) -> (i32, i32, i32, i32, i32) {
    %c2_i32 = arith.constant 2 : i32
    %0 = arith.muli %arg1, %c2_i32 : i32
    %1 = arith.addi %0, %arg2 : i32
    %c0_i32 = arith.constant 0 : i32
    %c0_i32_0 = arith.constant 0 : i32
    %c0_i32_1 = arith.constant 0 : i32
    %c0_i32_2 = arith.constant 0 : i32
    return %arg0, %1, %c0_i32, %c0_i32_0, %c0_i32_1 : i32, i32, i32, i32, i32
  }
  func.func @transform_1(%arg0: i32, %arg1: i32, %arg2: i32) -> (i32, i32, i32, i32) {
    %c0_i32 = arith.constant 0 : i32
    %c0_i32_0 = arith.constant 0 : i32
    %c0_i32_1 = arith.constant 0 : i32
    %c0_i32_2 = arith.constant 0 : i32
    %c0_i32_3 = arith.constant 0 : i32
    return %c0_i32, %c0_i32_0, %c0_i32_1, %c0_i32_2 : i32, i32, i32, i32
  }
  func.func @transform_2(%arg0: i32, %arg1: i32, %arg2: i32) -> (i32, i32) {
    %c0_i32 = arith.constant 0 : i32
    %c0_i32_0 = arith.constant 0 : i32
    %c0_i32_1 = arith.constant 0 : i32
    return %c0_i32, %c0_i32_0 : i32, i32
  }
  func.func @transform_3(%arg0: i32, %arg1: i32, %arg2: i32) -> (i32, i32, i32, i32) {
    %c0_i32 = arith.constant 0 : i32
    %c0_i32_0 = arith.constant 0 : i32
    %c0_i32_1 = arith.constant 0 : i32
    return %arg0, %arg1, %c0_i32, %c0_i32_0 : i32, i32, i32, i32
  }
}

module attributes {stable_mosaic.version = 11 : i64} {
  func.func @_conv_row_kernel(%arg0: i32, %arg1: i32, %arg2: i32, %arg3: memref<1x1x1x7x128xbf16, #tpu.memory_space<vmem>>, %arg4: memref<4x4x128x128xbf16, #tpu.memory_space<vmem>>, %arg5: memref<1x128xf32, #tpu.memory_space<vmem>>, %arg6: memref<1x1x4x128xbf16, #tpu.memory_space<vmem>>, %arg7: memref<4x128xf32, #tpu.memory_space<vmem>>) attributes {dimension_semantics = [#tpu.dimension_semantics<parallel>, #tpu.dimension_semantics<parallel>, #tpu.dimension_semantics<arbitrary>], iteration_bounds = array<i64: 2, 4, 4>, scalar_prefetch = 0 : i64, scratch_operands = 1 : i64, tpu.core_type = #tpu.core_type<tc>, window_params = [{transform_indices = @transform_0, window_bounds = array<i64: 1, 1, 1, 7, 128>}, {pipeline_mode = #tpu.pipeline_mode<synchronous>, transform_indices = @transform_1, window_bounds = array<i64: 4, 4, 128, 128>}, {pipeline_mode = #tpu.pipeline_mode<synchronous>, transform_indices = @transform_2, window_bounds = array<i64: 1, 128>}, {transform_indices = @transform_3, window_bounds = array<i64: 1, 1, 4, 128>}]} {
    %c0_i32 = arith.constant 0 : i32
    %0 = arith.cmpi eq, %arg2, %c0_i32 : i32
    %1 = arith.extui %0 : i1 to i32
    %c0_i32_0 = arith.constant 0 : i32
    %2 = arith.cmpi ne, %1, %c0_i32_0 : i32
    scf.if %2 {
      %cst_37 = arith.constant 0.000000e+00 : f32
      %36 = vector.broadcast %cst_37 : f32 to vector<4x128xf32>
      %c0_38 = arith.constant 0 : index
      %c0_39 = arith.constant 0 : index
      %37 = vector.load %arg7[%c0_38, %c0_39] : memref<4x128xf32, #tpu.memory_space<vmem>>, vector<4x128xf32>
      tpu.vector_store %arg7[%c0_38, %c0_39], %36 {strides = array<i32>} : memref<4x128xf32, #tpu.memory_space<vmem>>, vector<4x128xf32>,
    } else {
    }
    %c0 = arith.constant 0 : index
    %c0_1 = arith.constant 0 : index
    %3 = vector.load %arg7[%c0, %c0_1] : memref<4x128xf32, #tpu.memory_space<vmem>>, vector<4x128xf32>
    %c0_2 = arith.constant 0 : index
    %c0_3 = arith.constant 0 : index
    %c0_4 = arith.constant 0 : index
    %c0_5 = arith.constant 0 : index
    %c0_6 = arith.constant 0 : index
    %4 = vector.load %arg3[%c0_2, %c0_3, %c0_4, %c0_5, %c0_6] : memref<1x1x1x7x128xbf16, #tpu.memory_space<vmem>>, vector<1x1x1x4x128xbf16>
    %5 = vector.shape_cast %4 : vector<1x1x1x4x128xbf16> to vector<4x128xbf16>
    %6 = arith.index_cast %arg2 : i32 to index
    %c0_7 = arith.constant 0 : index
    %c0_8 = arith.constant 0 : index
    %c0_9 = arith.constant 0 : index
    %7 = vector.load %arg4[%6, %c0_7, %c0_8, %c0_9] : memref<4x4x128x128xbf16, #tpu.memory_space<vmem>>, vector<1x1x128x128xbf16>
    %8 = vector.shape_cast %7 : vector<1x1x128x128xbf16> to vector<128x128xbf16>
    %cst = arith.constant dense<0.000000e+00> : vector<4x128xf32>
    %9 = tpu.matmul %5, %8, %cst {dimension_numbers = #tpu.dot_dimension_numbers<[1], [0], [0], [1], [0, 0, 1, 1], [], []>} : vector<4x128xbf16>, vector<128x128xbf16>, vector<4x128xf32> -> vector<4x128xf32>
    %10 = arith.addf %3, %9 : vector<4x128xf32>
    %c0_10 = arith.constant 0 : index
    %c0_11 = arith.constant 0 : index
    %c0_12 = arith.constant 0 : index
    %c1 = arith.constant 1 : index
    %c0_13 = arith.constant 0 : index
    %11 = vector.load %arg3[%c0_10, %c0_11, %c0_12, %c1, %c0_13] : memref<1x1x1x7x128xbf16, #tpu.memory_space<vmem>>, vector<1x1x1x4x128xbf16>
    %12 = vector.shape_cast %11 : vector<1x1x1x4x128xbf16> to vector<4x128xbf16>
    %13 = arith.index_cast %arg2 : i32 to index
    %c1_14 = arith.constant 1 : index
    %c0_15 = arith.constant 0 : index
    %c0_16 = arith.constant 0 : index
    %14 = vector.load %arg4[%13, %c1_14, %c0_15, %c0_16] : memref<4x4x128x128xbf16, #tpu.memory_space<vmem>>, vector<1x1x128x128xbf16>
    %15 = vector.shape_cast %14 : vector<1x1x128x128xbf16> to vector<128x128xbf16>
    %cst_17 = arith.constant dense<0.000000e+00> : vector<4x128xf32>
    %16 = tpu.matmul %12, %15, %cst_17 {dimension_numbers = #tpu.dot_dimension_numbers<[1], [0], [0], [1], [0, 0, 1, 1], [], []>} : vector<4x128xbf16>, vector<128x128xbf16>, vector<4x128xf32> -> vector<4x128xf32>
    %17 = arith.addf %10, %16 : vector<4x128xf32>
    %c0_18 = arith.constant 0 : index
    %c0_19 = arith.constant 0 : index
    %c0_20 = arith.constant 0 : index
    %c2 = arith.constant 2 : index
    %c0_21 = arith.constant 0 : index
    %18 = vector.load %arg3[%c0_18, %c0_19, %c0_20, %c2, %c0_21] : memref<1x1x1x7x128xbf16, #tpu.memory_space<vmem>>, vector<1x1x1x4x128xbf16>
    %19 = vector.shape_cast %18 : vector<1x1x1x4x128xbf16> to vector<4x128xbf16>
    %20 = arith.index_cast %arg2 : i32 to index
    %c2_22 = arith.constant 2 : index
    %c0_23 = arith.constant 0 : index
    %c0_24 = arith.constant 0 : index
    %21 = vector.load %arg4[%20, %c2_22, %c0_23, %c0_24] : memref<4x4x128x128xbf16, #tpu.memory_space<vmem>>, vector<1x1x128x128xbf16>
    %22 = vector.shape_cast %21 : vector<1x1x128x128xbf16> to vector<128x128xbf16>
    %cst_25 = arith.constant dense<0.000000e+00> : vector<4x128xf32>
    %23 = tpu.matmul %19, %22, %cst_25 {dimension_numbers = #tpu.dot_dimension_numbers<[1], [0], [0], [1], [0, 0, 1, 1], [], []>} : vector<4x128xbf16>, vector<128x128xbf16>, vector<4x128xf32> -> vector<4x128xf32>
    %24 = arith.addf %17, %23 : vector<4x128xf32>
    %c0_26 = arith.constant 0 : index
    %c0_27 = arith.constant 0 : index
    %c0_28 = arith.constant 0 : index
    %c3 = arith.constant 3 : index
    %c0_29 = arith.constant 0 : index
    %25 = vector.load %arg3[%c0_26, %c0_27, %c0_28, %c3, %c0_29] : memref<1x1x1x7x128xbf16, #tpu.memory_space<vmem>>, vector<1x1x1x4x128xbf16>
    %26 = vector.shape_cast %25 : vector<1x1x1x4x128xbf16> to vector<4x128xbf16>
    %27 = arith.index_cast %arg2 : i32 to index
    %c3_30 = arith.constant 3 : index
    %c0_31 = arith.constant 0 : index
    %c0_32 = arith.constant 0 : index
    %28 = vector.load %arg4[%27, %c3_30, %c0_31, %c0_32] : memref<4x4x128x128xbf16, #tpu.memory_space<vmem>>, vector<1x1x128x128xbf16>
    %29 = vector.shape_cast %28 : vector<1x1x128x128xbf16> to vector<128x128xbf16>
    %cst_33 = arith.constant dense<0.000000e+00> : vector<4x128xf32>
    %30 = tpu.matmul %26, %29, %cst_33 {dimension_numbers = #tpu.dot_dimension_numbers<[1], [0], [0], [1], [0, 0, 1, 1], [], []>} : vector<4x128xbf16>, vector<128x128xbf16>, vector<4x128xf32> -> vector<4x128xf32>
    %31 = arith.addf %24, %30 : vector<4x128xf32>
    %c0_34 = arith.constant 0 : index
    %c0_35 = arith.constant 0 : index
    %32 = vector.load %arg7[%c0_34, %c0_35] : memref<4x128xf32, #tpu.memory_space<vmem>>, vector<4x128xf32>
    tpu.vector_store %arg7[%c0_34, %c0_35], %31 {strides = array<i32>} : memref<4x128xf32, #tpu.memory_space<vmem>>, vector<4x128xf32>,
    %c3_i32 = arith.constant 3 : i32
    %33 = arith.cmpi eq, %arg2, %c3_i32 : i32
    %34 = arith.extui %33 : i1 to i32
    %c0_i32_36 = arith.constant 0 : i32
    %35 = arith.cmpi ne, %34, %c0_i32_36 : i32
    scf.if %35 {
      %c0_37 = arith.constant 0 : index
      %c0_38 = arith.constant 0 : index
      %36 = vector.load %arg7[%c0_37, %c0_38] : memref<4x128xf32, #tpu.memory_space<vmem>>, vector<4x128xf32>
      %c0_39 = arith.constant 0 : index
      %c0_40 = arith.constant 0 : index
      %37 = vector.load %arg5[%c0_39, %c0_40] : memref<1x128xf32, #tpu.memory_space<vmem>>, vector<1x128xf32>
      %38 = vector.broadcast %37 : vector<1x128xf32> to vector<4x128xf32>
      %39 = arith.addf %36, %38 : vector<4x128xf32>
      %cst_41 = arith.constant 0.000000e+00 : f32
      %40 = vector.broadcast %cst_41 : f32 to vector<4x128xf32>
      %41 = arith.cmpf ogt, %39, %40 : vector<4x128xf32>
      %cst_42 = arith.constant 2.000000e-01 : f32
      %42 = vector.broadcast %cst_42 : f32 to vector<4x128xf32>
      %43 = arith.mulf %42, %39 : vector<4x128xf32>
      %44 = arith.select %41, %39, %43 : vector<4x128xi1>, vector<4x128xf32>
      %45 = arith.truncf %44 : vector<4x128xf32> to vector<4x128xbf16>
      %c0_43 = arith.constant 0 : index
      %c0_44 = arith.constant 0 : index
      %c0_45 = arith.constant 0 : index
      %c0_46 = arith.constant 0 : index
      %46 = vector.load %arg6[%c0_43, %c0_44, %c0_45, %c0_46] : memref<1x1x4x128xbf16, #tpu.memory_space<vmem>>, vector<1x1x4x128xbf16>
      %47 = vector.shape_cast %46 : vector<1x1x4x128xbf16> to vector<4x128xbf16>
      %48 = vector.shape_cast %45 : vector<4x128xbf16> to vector<1x1x4x128xbf16>
      tpu.vector_store %arg6[%c0_43, %c0_44, %c0_45, %c0_46], %48 {strides = array<i32>} : memref<1x1x4x128xbf16, #tpu.memory_space<vmem>>, vector<1x1x4x128xbf16>,
    } else {
    }
    return
  }
  func.func @transform_0(%arg0: i32, %arg1: i32, %arg2: i32) -> (i32, i32, i32, i32, i32) {
    %c1_i32 = arith.constant 1 : i32
    %0 = arith.muli %arg1, %c1_i32 : i32
    %1 = arith.addi %0, %arg2 : i32
    %c0_i32 = arith.constant 0 : i32
    %c0_i32_0 = arith.constant 0 : i32
    %c0_i32_1 = arith.constant 0 : i32
    %c0_i32_2 = arith.constant 0 : i32
    return %arg0, %1, %c0_i32, %c0_i32_0, %c0_i32_1 : i32, i32, i32, i32, i32
  }
  func.func @transform_1(%arg0: i32, %arg1: i32, %arg2: i32) -> (i32, i32, i32, i32) {
    %c0_i32 = arith.constant 0 : i32
    %c0_i32_0 = arith.constant 0 : i32
    %c0_i32_1 = arith.constant 0 : i32
    %c0_i32_2 = arith.constant 0 : i32
    %c0_i32_3 = arith.constant 0 : i32
    return %c0_i32, %c0_i32_0, %c0_i32_1, %c0_i32_2 : i32, i32, i32, i32
  }
  func.func @transform_2(%arg0: i32, %arg1: i32, %arg2: i32) -> (i32, i32) {
    %c0_i32 = arith.constant 0 : i32
    %c0_i32_0 = arith.constant 0 : i32
    %c0_i32_1 = arith.constant 0 : i32
    return %c0_i32, %c0_i32_0 : i32, i32
  }
  func.func @transform_3(%arg0: i32, %arg1: i32, %arg2: i32) -> (i32, i32, i32, i32) {
    %c0_i32 = arith.constant 0 : i32
    %c0_i32_0 = arith.constant 0 : i32
    %c0_i32_1 = arith.constant 0 : i32
    return %arg0, %arg1, %c0_i32, %c0_i32_0 : i32, i32, i32, i32
  }
}

module attributes {stable_mosaic.version = 11 : i64} {
  func.func @_conv_row_kernel(%arg0: i32, %arg1: i32, %arg2: i32, %arg3: memref<1x1x1x8x128xbf16, #tpu.memory_space<vmem>>, %arg4: memref<4x4x128x128xbf16, #tpu.memory_space<vmem>>, %arg5: memref<1x128xf32, #tpu.memory_space<vmem>>, %arg6: memref<1x1x5x128xbf16, #tpu.memory_space<vmem>>, %arg7: memref<5x128xf32, #tpu.memory_space<vmem>>) attributes {dimension_semantics = [#tpu.dimension_semantics<parallel>, #tpu.dimension_semantics<parallel>, #tpu.dimension_semantics<arbitrary>], iteration_bounds = array<i64: 2, 5, 4>, scalar_prefetch = 0 : i64, scratch_operands = 1 : i64, tpu.core_type = #tpu.core_type<tc>, window_params = [{transform_indices = @transform_0, window_bounds = array<i64: 1, 1, 1, 8, 128>}, {pipeline_mode = #tpu.pipeline_mode<synchronous>, transform_indices = @transform_1, window_bounds = array<i64: 4, 4, 128, 128>}, {pipeline_mode = #tpu.pipeline_mode<synchronous>, transform_indices = @transform_2, window_bounds = array<i64: 1, 128>}, {transform_indices = @transform_3, window_bounds = array<i64: 1, 1, 5, 128>}]} {
    %c0_i32 = arith.constant 0 : i32
    %0 = arith.cmpi eq, %arg2, %c0_i32 : i32
    %1 = arith.extui %0 : i1 to i32
    %c0_i32_0 = arith.constant 0 : i32
    %2 = arith.cmpi ne, %1, %c0_i32_0 : i32
    scf.if %2 {
      %cst_37 = arith.constant 0.000000e+00 : f32
      %36 = vector.broadcast %cst_37 : f32 to vector<5x128xf32>
      %c0_38 = arith.constant 0 : index
      %c0_39 = arith.constant 0 : index
      %37 = vector.load %arg7[%c0_38, %c0_39] : memref<5x128xf32, #tpu.memory_space<vmem>>, vector<5x128xf32>
      tpu.vector_store %arg7[%c0_38, %c0_39], %36 {strides = array<i32>} : memref<5x128xf32, #tpu.memory_space<vmem>>, vector<5x128xf32>,
    } else {
    }
    %c0 = arith.constant 0 : index
    %c0_1 = arith.constant 0 : index
    %3 = vector.load %arg7[%c0, %c0_1] : memref<5x128xf32, #tpu.memory_space<vmem>>, vector<5x128xf32>
    %c0_2 = arith.constant 0 : index
    %c0_3 = arith.constant 0 : index
    %c0_4 = arith.constant 0 : index
    %c0_5 = arith.constant 0 : index
    %c0_6 = arith.constant 0 : index
    %4 = vector.load %arg3[%c0_2, %c0_3, %c0_4, %c0_5, %c0_6] : memref<1x1x1x8x128xbf16, #tpu.memory_space<vmem>>, vector<1x1x1x5x128xbf16>
    %5 = vector.shape_cast %4 : vector<1x1x1x5x128xbf16> to vector<5x128xbf16>
    %6 = arith.index_cast %arg2 : i32 to index
    %c0_7 = arith.constant 0 : index
    %c0_8 = arith.constant 0 : index
    %c0_9 = arith.constant 0 : index
    %7 = vector.load %arg4[%6, %c0_7, %c0_8, %c0_9] : memref<4x4x128x128xbf16, #tpu.memory_space<vmem>>, vector<1x1x128x128xbf16>
    %8 = vector.shape_cast %7 : vector<1x1x128x128xbf16> to vector<128x128xbf16>
    %cst = arith.constant dense<0.000000e+00> : vector<5x128xf32>
    %9 = tpu.matmul %5, %8, %cst {dimension_numbers = #tpu.dot_dimension_numbers<[1], [0], [0], [1], [0, 0, 1, 1], [], []>} : vector<5x128xbf16>, vector<128x128xbf16>, vector<5x128xf32> -> vector<5x128xf32>
    %10 = arith.addf %3, %9 : vector<5x128xf32>
    %c0_10 = arith.constant 0 : index
    %c0_11 = arith.constant 0 : index
    %c0_12 = arith.constant 0 : index
    %c1 = arith.constant 1 : index
    %c0_13 = arith.constant 0 : index
    %11 = vector.load %arg3[%c0_10, %c0_11, %c0_12, %c1, %c0_13] : memref<1x1x1x8x128xbf16, #tpu.memory_space<vmem>>, vector<1x1x1x5x128xbf16>
    %12 = vector.shape_cast %11 : vector<1x1x1x5x128xbf16> to vector<5x128xbf16>
    %13 = arith.index_cast %arg2 : i32 to index
    %c1_14 = arith.constant 1 : index
    %c0_15 = arith.constant 0 : index
    %c0_16 = arith.constant 0 : index
    %14 = vector.load %arg4[%13, %c1_14, %c0_15, %c0_16] : memref<4x4x128x128xbf16, #tpu.memory_space<vmem>>, vector<1x1x128x128xbf16>
    %15 = vector.shape_cast %14 : vector<1x1x128x128xbf16> to vector<128x128xbf16>
    %cst_17 = arith.constant dense<0.000000e+00> : vector<5x128xf32>
    %16 = tpu.matmul %12, %15, %cst_17 {dimension_numbers = #tpu.dot_dimension_numbers<[1], [0], [0], [1], [0, 0, 1, 1], [], []>} : vector<5x128xbf16>, vector<128x128xbf16>, vector<5x128xf32> -> vector<5x128xf32>
    %17 = arith.addf %10, %16 : vector<5x128xf32>
    %c0_18 = arith.constant 0 : index
    %c0_19 = arith.constant 0 : index
    %c0_20 = arith.constant 0 : index
    %c2 = arith.constant 2 : index
    %c0_21 = arith.constant 0 : index
    %18 = vector.load %arg3[%c0_18, %c0_19, %c0_20, %c2, %c0_21] : memref<1x1x1x8x128xbf16, #tpu.memory_space<vmem>>, vector<1x1x1x5x128xbf16>
    %19 = vector.shape_cast %18 : vector<1x1x1x5x128xbf16> to vector<5x128xbf16>
    %20 = arith.index_cast %arg2 : i32 to index
    %c2_22 = arith.constant 2 : index
    %c0_23 = arith.constant 0 : index
    %c0_24 = arith.constant 0 : index
    %21 = vector.load %arg4[%20, %c2_22, %c0_23, %c0_24] : memref<4x4x128x128xbf16, #tpu.memory_space<vmem>>, vector<1x1x128x128xbf16>
    %22 = vector.shape_cast %21 : vector<1x1x128x128xbf16> to vector<128x128xbf16>
    %cst_25 = arith.constant dense<0.000000e+00> : vector<5x128xf32>
    %23 = tpu.matmul %19, %22, %cst_25 {dimension_numbers = #tpu.dot_dimension_numbers<[1], [0], [0], [1], [0, 0, 1, 1], [], []>} : vector<5x128xbf16>, vector<128x128xbf16>, vector<5x128xf32> -> vector<5x128xf32>
    %24 = arith.addf %17, %23 : vector<5x128xf32>
    %c0_26 = arith.constant 0 : index
    %c0_27 = arith.constant 0 : index
    %c0_28 = arith.constant 0 : index
    %c3 = arith.constant 3 : index
    %c0_29 = arith.constant 0 : index
    %25 = vector.load %arg3[%c0_26, %c0_27, %c0_28, %c3, %c0_29] : memref<1x1x1x8x128xbf16, #tpu.memory_space<vmem>>, vector<1x1x1x5x128xbf16>
    %26 = vector.shape_cast %25 : vector<1x1x1x5x128xbf16> to vector<5x128xbf16>
    %27 = arith.index_cast %arg2 : i32 to index
    %c3_30 = arith.constant 3 : index
    %c0_31 = arith.constant 0 : index
    %c0_32 = arith.constant 0 : index
    %28 = vector.load %arg4[%27, %c3_30, %c0_31, %c0_32] : memref<4x4x128x128xbf16, #tpu.memory_space<vmem>>, vector<1x1x128x128xbf16>
    %29 = vector.shape_cast %28 : vector<1x1x128x128xbf16> to vector<128x128xbf16>
    %cst_33 = arith.constant dense<0.000000e+00> : vector<5x128xf32>
    %30 = tpu.matmul %26, %29, %cst_33 {dimension_numbers = #tpu.dot_dimension_numbers<[1], [0], [0], [1], [0, 0, 1, 1], [], []>} : vector<5x128xbf16>, vector<128x128xbf16>, vector<5x128xf32> -> vector<5x128xf32>
    %31 = arith.addf %24, %30 : vector<5x128xf32>
    %c0_34 = arith.constant 0 : index
    %c0_35 = arith.constant 0 : index
    %32 = vector.load %arg7[%c0_34, %c0_35] : memref<5x128xf32, #tpu.memory_space<vmem>>, vector<5x128xf32>
    tpu.vector_store %arg7[%c0_34, %c0_35], %31 {strides = array<i32>} : memref<5x128xf32, #tpu.memory_space<vmem>>, vector<5x128xf32>,
    %c3_i32 = arith.constant 3 : i32
    %33 = arith.cmpi eq, %arg2, %c3_i32 : i32
    %34 = arith.extui %33 : i1 to i32
    %c0_i32_36 = arith.constant 0 : i32
    %35 = arith.cmpi ne, %34, %c0_i32_36 : i32
    scf.if %35 {
      %c0_37 = arith.constant 0 : index
      %c0_38 = arith.constant 0 : index
      %36 = vector.load %arg7[%c0_37, %c0_38] : memref<5x128xf32, #tpu.memory_space<vmem>>, vector<5x128xf32>
      %c0_39 = arith.constant 0 : index
      %c0_40 = arith.constant 0 : index
      %37 = vector.load %arg5[%c0_39, %c0_40] : memref<1x128xf32, #tpu.memory_space<vmem>>, vector<1x128xf32>
      %38 = vector.broadcast %37 : vector<1x128xf32> to vector<5x128xf32>
      %39 = arith.addf %36, %38 : vector<5x128xf32>
      %40 = arith.truncf %39 : vector<5x128xf32> to vector<5x128xbf16>
      %c0_41 = arith.constant 0 : index
      %c0_42 = arith.constant 0 : index
      %c0_43 = arith.constant 0 : index
      %c0_44 = arith.constant 0 : index
      %41 = vector.load %arg6[%c0_41, %c0_42, %c0_43, %c0_44] : memref<1x1x5x128xbf16, #tpu.memory_space<vmem>>, vector<1x1x5x128xbf16>
      %42 = vector.shape_cast %41 : vector<1x1x5x128xbf16> to vector<5x128xbf16>
      %43 = vector.shape_cast %40 : vector<5x128xbf16> to vector<1x1x5x128xbf16>
      tpu.vector_store %arg6[%c0_41, %c0_42, %c0_43, %c0_44], %43 {strides = array<i32>} : memref<1x1x5x128xbf16, #tpu.memory_space<vmem>>, vector<1x1x5x128xbf16>,
    } else {
    }
    return
  }
  func.func @transform_0(%arg0: i32, %arg1: i32, %arg2: i32) -> (i32, i32, i32, i32, i32) {
    %c1_i32 = arith.constant 1 : i32
    %0 = arith.muli %arg1, %c1_i32 : i32
    %1 = arith.addi %0, %arg2 : i32
    %c0_i32 = arith.constant 0 : i32
    %c0_i32_0 = arith.constant 0 : i32
    %c0_i32_1 = arith.constant 0 : i32
    %c0_i32_2 = arith.constant 0 : i32
    return %arg0, %1, %c0_i32, %c0_i32_0, %c0_i32_1 : i32, i32, i32, i32, i32
  }
  func.func @transform_1(%arg0: i32, %arg1: i32, %arg2: i32) -> (i32, i32, i32, i32) {
    %c0_i32 = arith.constant 0 : i32
    %c0_i32_0 = arith.constant 0 : i32
    %c0_i32_1 = arith.constant 0 : i32
    %c0_i32_2 = arith.constant 0 : i32
    %c0_i32_3 = arith.constant 0 : i32
    return %c0_i32, %c0_i32_0, %c0_i32_1, %c0_i32_2 : i32, i32, i32, i32
  }
  func.func @transform_2(%arg0: i32, %arg1: i32, %arg2: i32) -> (i32, i32) {
    %c0_i32 = arith.constant 0 : i32
    %c0_i32_0 = arith.constant 0 : i32
    %c0_i32_1 = arith.constant 0 : i32
    return %c0_i32, %c0_i32_0 : i32, i32
  }
  func.func @transform_3(%arg0: i32, %arg1: i32, %arg2: i32) -> (i32, i32, i32, i32) {
    %c0_i32 = arith.constant 0 : i32
    %c0_i32_0 = arith.constant 0 : i32
    %c0_i32_1 = arith.constant 0 : i32
    return %arg0, %arg1, %c0_i32, %c0_i32_0 : i32, i32, i32, i32
  }
}

</mosaic_0001>

<llo_original>
// kernel: _forward_impl.5
$region0: #{_forward_impl.5}
  #allocation0 [shape = 'u32[]', space=smem, size = 0x4, offset = 0x4, fixed_abs, tag = 'smem constant byte address 0x4 - core index']
  #allocation1 [shape = 'u32[144,128]{1,0:T(1,128)}', space=vmem, size = 0x12000, scoped, tag = 'internal scratch']
  #allocation2 [shape = 'f32[9,128]{1,0:T(8,128)}', space=vmem, size = 0x2000, scoped, tag = 'scratch operand']
  %s0 = inlined_call_operand.vmem [shape: bf16[2,20,2,10,4], index: 0, kind: input, shape index: {}]
  %s1 = inlined_call_operand.vmem [shape: bf16[4,4,4,128], index: 1, kind: input, shape index: {}]
  %s2 = inlined_call_operand.vmem [shape: f32[1,128], index: 2, kind: input, shape index: {}]
  %s3 = inlined_call_operand.vmem [shape: bf16[2,9,9,128], index: 3, kind: output, shape index: {}]
  %s4 = sld [smem:[#allocation0]]
  $region53: #{_forward_impl.5} parent=0
    _
  %s6 = ssub.s32 1, %s4
  %s7 = scalar_select 0, %s6, %s4
  loop: start=0, step=1, limit=74
  $region2: #{_forward_impl.5} parent=0 // loop_pre_header
    _
  $region3: #{_forward_impl.5} parent=0 // loop_header
    %s9 = sphi 0, %s13
    %p10 = scmp.ge.s32.totalorder %s9, 74
    %s16 = sphi 0, %s35
    %s17 = sphi 0, %s31
    %s18 = sphi 0, %s27
    %s19 = sphi 0, %s16
    %s20 = sphi 0, %s17
    %s21 = sphi 0, %s18
    %s22 = sphi 0, %s19
    %s23 = sphi 0, %s20
    %s24 = sphi 0, %s21
    %s44 = sphi 0, %s46
    %s47 = sphi 0, %s44
    %s48 = sphi 0, %s47
    %s64 = sphi 0, %s48
    %s68 = sphi 0, %s68
    %s70 = sphi 0, %s68
    %s71 = sphi 0, %s70
    %s85 = sphi 0, %s71
    %s89 = sphi 0, %s89
    %s91 = sphi 0, %s89
    %s92 = sphi 0, %s91
    %s106 = sphi 0, %s92
    %s114 = sphi 0, %s116
    %s117 = sphi 0, %s114
    %s118 = sphi 0, %s117
    %s134 = sphi 0, %s118
  $region4: #{_forward_impl.5} parent=0 // loop_header_branch
    %12 = sbr.rel (%p10) target = $region8
  $region5: #{_forward_impl.5} parent=0 // loop_body
    %s14 = ssub.s32 %s9, 1
    %s15 = ssub.s32 %s9, 2
    %s25 = sadd.s32 1, %s18
    %p26 = scmp.ge.s32.totalorder %s25, 4
    %s27 = scalar_select %p26, 0, %s25
    %s28 = sadd.s32 1, %s17
    %s29 = scalar_select %p26, %s28, %s17
    %p30 = scmp.ge.s32.totalorder %s29, 9
    %s31 = scalar_select %p30, 0, %s29
    %s32 = sadd.s32 1, %s16
    %s33 = scalar_select %p30, %s32, %s16
    %p34 = scmp.ge.s32.totalorder %s33, 2
    %s35 = scalar_select %p34, 0, %s33
    %s36 = smul.u32 %s17, 2
    %s37 = sadd.s32 %s36, %s18
    %s38 = smul.u32 %s31, 2
    %s39 = sadd.s32 %s38, %s27
    %s40 = ssub.s32 %s16, %s35
    %s41 = ssub.s32 %s37, %s39
    %s42 = sor.u32 %s40, %s41
    %p43 = scmp.eq.s32.totalorder %s42, 0
    %s45 = sadd.s32 %s44, 1
    %s46 = scalar_select %p43, %s44, %s45
    %p49 = pneg %p43
    %p50 = scmp.eq.s32.totalorder %s9, 71
    %p51 = por %p49, %p50
    %p52 = scmp.ne.s32.totalorder %s44, %s47
    %p53 = scmp.eq.s32.totalorder %s9, 0
    %p54 = por %p52, %p53
    %p55 = scmp.ne.s32.totalorder %s44, %s47
    %p56 = scmp.eq.s32.totalorder %s14, 71
    %p57 = por %p55, %p56
    %p58 = scmp.ne.s32.totalorder %s47, %s48
    %p59 = scmp.eq.s32.totalorder %s14, 0
    %p60 = por %p58, %p59
    %p61 = scmp.ne.s32.totalorder %s47, %s48
    %p62 = scmp.eq.s32.totalorder %s15, 71
    %p63 = por %p61, %p62
    %p65 = scmp.ne.s32.totalorder %s48, %s64
    %p66 = scmp.eq.s32.totalorder %s15, 0
    %p67 = por %p65, %p66
    %s69 = sadd.s32 %s68, 1
    %p72 = scmp.eq.s32.totalorder %s9, 71
    %p73 = scmp.ne.s32.totalorder %s68, %s70
    %p74 = scmp.eq.s32.totalorder %s9, 0
    %p75 = por %p73, %p74
    %p76 = scmp.ne.s32.totalorder %s68, %s70
    %p77 = scmp.eq.s32.totalorder %s14, 71
    %p78 = por %p76, %p77
    %p79 = scmp.ne.s32.totalorder %s70, %s71
    %p80 = scmp.eq.s32.totalorder %s14, 0
    %p81 = por %p79, %p80
    %p82 = scmp.ne.s32.totalorder %s70, %s71
    %p83 = scmp.eq.s32.totalorder %s15, 71
    %p84 = por %p82, %p83
    %p86 = scmp.ne.s32.totalorder %s71, %s85
    %p87 = scmp.eq.s32.totalorder %s15, 0
    %p88 = por %p86, %p87
    %s90 = sadd.s32 %s89, 1
    %p93 = scmp.eq.s32.totalorder %s9, 71
    %p94 = scmp.ne.s32.totalorder %s89, %s91
    %p95 = scmp.eq.s32.totalorder %s9, 0
    %p96 = por %p94, %p95
    %p97 = scmp.ne.s32.totalorder %s89, %s91
    %p98 = scmp.eq.s32.totalorder %s14, 71
    %p99 = por %p97, %p98
    %p100 = scmp.ne.s32.totalorder %s91, %s92
    %p101 = scmp.eq.s32.totalorder %s14, 0
    %p102 = por %p100, %p101
    %p103 = scmp.ne.s32.totalorder %s91, %s92
    %p104 = scmp.eq.s32.totalorder %s15, 71
    %p105 = por %p103, %p104
    %p107 = scmp.ne.s32.totalorder %s92, %s106
    %p108 = scmp.eq.s32.totalorder %s15, 0
    %p109 = por %p107, %p108
    %s110 = ssub.s32 %s16, %s35
    %s111 = ssub.s32 %s17, %s31
    %s112 = sor.u32 %s110, %s111
    %p113 = scmp.eq.s32.totalorder %s112, 0
    %s115 = sadd.s32 %s114, 1
    %s116 = scalar_select %p113, %s114, %s115
    %p119 = pneg %p113
    %p120 = scmp.eq.s32.totalorder %s9, 71
    %p121 = por %p119, %p120
    %p122 = scmp.ne.s32.totalorder %s114, %s117
    %p123 = scmp.eq.s32.totalorder %s9, 0
    %p124 = por %p122, %p123
    %p125 = scmp.ne.s32.totalorder %s114, %s117
    %p126 = scmp.eq.s32.totalorder %s14, 71
    %p127 = por %p125, %p126
    %p128 = scmp.ne.s32.totalorder %s117, %s118
    %p129 = scmp.eq.s32.totalorder %s14, 0
    %p130 = por %p128, %p129
    %p131 = scmp.ne.s32.totalorder %s117, %s118
    %p132 = scmp.eq.s32.totalorder %s15, 71
    %p133 = por %p131, %p132
    %p135 = scmp.ne.s32.totalorder %s118, %s134
    %p136 = scmp.eq.s32.totalorder %s15, 0
    %p137 = por %p135, %p136
    %p138 = scmp.le.s32.totalorder 1, %s9
    %p139 = scmp.lt.s32.totalorder %s9, 73
    %p140 = pnand %p138, %p139
    %p141 = pneg %p140
    // Predicated region
    $region9: #{_forward_impl.5} parent=5 // pred_check
      _
    $region10: #{_forward_impl.5} parent=5 // pred_check_branch
      %143 = sbr.rel (%p140) target = $region12
    $region11: #{_forward_impl.5} parent=5 // pred_region
      %s144 = ssub.s32 %s9, 1
      // Predicated region
      $region13: #{_forward_impl.5} parent=11 // pred_check
        %p145 = pneg %p81
      $region14: #{_forward_impl.5} parent=11 // pred_check_branch
        %147 = sbr.rel (%p145) target = $region16
      $region15: #{_forward_impl.5} parent=11 // pred_region
        _
      $region16: #{_forward_impl.5} parent=11 // pred_fallthru
        _
      // Predicated region
      $region17: #{_forward_impl.5} parent=11 // pred_check
        %p148 = pneg %p102
      $region18: #{_forward_impl.5} parent=11 // pred_check_branch
        %150 = sbr.rel (%p148) target = $region20
      $region19: #{_forward_impl.5} parent=11 // pred_region
        _
      $region20: #{_forward_impl.5} parent=11 // pred_fallthru
        _
    $region12: #{_forward_impl.5} parent=5 // pred_fallthru
      _
    %p151 = scmp.lt.s32.totalorder %s9, 72
    // Predicated region
    $region21: #{_forward_impl.5} parent=5 // pred_check
      %p152 = pneg %p151
    $region22: #{_forward_impl.5} parent=5 // pred_check_branch
      %154 = sbr.rel (%p152) target = $region24
    $region23: #{_forward_impl.5} parent=5 // pred_region
      // Predicated region
      $region25: #{_forward_impl.5} parent=23 // pred_check
        %p155 = pneg %p54
      $region26: #{_forward_impl.5} parent=23 // pred_check_branch
        %157 = sbr.rel (%p155) target = $region28
      $region27: #{_forward_impl.5} parent=23 // pred_region
        %s158 = smul.u32 %s17, 2
        %s159 = sadd.s32 %s158, %s18
        %p160 = scmp.lt.s32.totalorder %s16, 1
        %s161 = scalar_select %p160, %s16, 1
        %p162 = scmp.lt.s32.totalorder %s159, 19
        %s163 = scalar_select %p162, %s159, 19
        %s164 = smul.addr %s163, 4
        %s165 = smul.addr %s161, 80
        %s166 = sadd.s32 %s164, %s165
        %s167 = smul.addr %s166, 4
        %s168 = scalar_lea.vmem %s0, %s167
        %s169 = smul.u32 %s17, 2
        %s170 = sadd.s32 %s169, %s18
      $region28: #{_forward_impl.5} parent=23 // pred_fallthru
        _
    $region24: #{_forward_impl.5} parent=5 // pred_fallthru
      _
    %p171 = scmp.le.s32.totalorder 1, %s9
    %p172 = scmp.lt.s32.totalorder %s9, 73
    %p173 = pnand %p171, %p172
    %p174 = pneg %p173
    // Predicated region
    $region29: #{_forward_impl.5} parent=5 // pred_check
      _
    $region30: #{_forward_impl.5} parent=5 // pred_check_branch
      %176 = sbr.rel (%p173) target = $region32
    $region31: #{_forward_impl.5} parent=5 // pred_region
      %s177 = ssub.s32 %s9, 1
      %s178 = smul.u32 %s20, 2
      %s179 = sadd.s32 %s178, %s21
      %p180 = scmp.lt.s32.totalorder %s19, 1
      %s181 = scalar_select %p180, %s19, 1
      %p182 = scmp.lt.s32.totalorder %s179, 19
      %s183 = scalar_select %p182, %s179, 19
      %s184 = smul.addr %s183, 4
      %s185 = smul.addr %s181, 80
      %s186 = sadd.s32 %s184, %s185
      %s187 = smul.addr %s186, 4
      %s188 = scalar_lea.vmem %s0, %s187
      %p189 = pneg %p60
      %p190 = pneg %p57
      %p191 = pneg %p81
      %p192 = pneg %p78
      %p193 = pneg %p102
      %p194 = pneg %p99
      %p195 = pneg %p130
      %p196 = pneg %p127
      %p197 = scmp.lt.s32.totalorder %s19, 1
      %s198 = scalar_select %p197, %s19, 1
      %p199 = scmp.lt.s32.totalorder %s20, 8
      %s200 = scalar_select %p199, %s20, 8
      %s201 = smul.addr %s200, 2
      %s202 = smul.addr %s198, 18
      %s203 = sadd.s32 %s201, %s202
      %s204 = smul.addr %s203, 4
      %s205 = scalar_lea.vmem %s3, %s204
      %s206 = smul.u32 %s20, 2
      %s207 = sadd.s32 %s206, %s21
      %p208 = scmp.lt.s32.totalorder %s19, 1
      %s209 = scalar_select %p208, %s19, 1
      %p210 = scmp.lt.s32.totalorder %s207, 19
      %s211 = scalar_select %p210, %s207, 19
      %s212 = smul.addr %s211, 4
      %s213 = smul.addr %s209, 80
      %s214 = sadd.s32 %s212, %s213
      %s215 = smul.addr %s214, 4
      %s216 = scalar_lea.vmem %s0, %s215
      %s217 = smul.u32 %s20, 2
      %s218 = sadd.s32 %s217, %s21
      %p219 = scmp.lt.s32.totalorder %s19, 1
      %s220 = scalar_select %p219, %s19, 1
      %p221 = scmp.lt.s32.totalorder %s20, 8
      %s222 = scalar_select %p221, %s20, 8
      %s223 = smul.addr %s222, 2
      %s224 = smul.addr %s220, 18
      %s225 = sadd.s32 %s223, %s224
      %s226 = smul.addr %s225, 4
      %s227 = scalar_lea.vmem %s3, %s226
      %p229 = scmp.eq.s32.totalorder %s21, 0
      // Predicated region
      $region33: #{_forward_impl.5} parent=31 // pred_check
        %p230 = pneg %p229
      $region34: #{_forward_impl.5} parent=31 // pred_check_branch
        %232 = sbr.rel (%p230) target = $region36
      $region35: #{_forward_impl.5} parent=31 // pred_region
        %233 = vst [vmem:[#allocation2] sm:$0xff] 0.0
        %234 = vst [vmem:[#allocation2 + $0x8] sm:$0x1] 0.0
      $region36: #{_forward_impl.5} parent=31 // pred_fallthru
        _
      %v235 = vld [vmem:[#allocation2] sm:$0xff]
      %v236 = vld [vmem:[#allocation2 + $0x8] sm:$0x1]
      %v237 = vld [vmem:[%s216] sm:$0xf]
      %v238 = vld [vmem:[%s216 + $0x4] sm:$0x1]
      %s239 = smul.u32 %s21, 4
      %s240 = smul.addr %s239, 2
      %s241 = scalar_lea.vmem %s1, %s240
      %v242 = vld [vmem:[%s241] sm:$0x3]
      %v245 = vunpack.c.l.b16 %v237
      %v246 = vunpack.c.l.b16 %v238
      %v247 = vpack.c.b16 %v246, %v245
      %vm248 = vcmask 31744
      %v250 = vsel %vm248, %v247, 0
      %vm252 = vcmask 1041408
      %v254 = vsel %vm252, %v242, 0
      %256 = vmatprep.subr.bf16.mxu0 0
      %257 = vmatpush1.bf16.msra.mxu0 0
      %258 = vmatprep.subr.bf16.mxu0 0
      %259 = vmatpush1.bf16.msra.mxu0 0
      %260 = vmatprep.subr.bf16.mxu0 0
      %261 = vmatpush1.bf16.msra.mxu0 0
      %262 = vmatprep.subr.bf16.mxu0 0
      %263 = vmatpush1.bf16.msra.mxu0 0
      %264 = vmatprep.subr.bf16.mxu0 0
      %265 = vmatpush1.bf16.msra.mxu0 0
      %266 = vmatprep.subr.bf16.mxu0 0
      %267 = vmatpush1.bf16.msra.mxu0 0
      %268 = vmatprep.subr.bf16.mxu0 0
      %269 = vmatpush1.bf16.msra.mxu0 0
      %270 = vmatprep.subr.bf16.mxu0 0
      %271 = vmatpush1.bf16.msra.mxu0 %v254
      %272 = vmatprep.subr.bf16.mxu0 0
      %273 = vmatpush2.bf16.msra.mxu0 0
      %274 = vmatprep.subr.bf16.mxu0 0
      %275 = vmatpush2.bf16.msra.mxu0 0
      %276 = vmatprep.subr.bf16.mxu0 0
      %277 = vmatpush2.bf16.msra.mxu0 0
      %278 = vmatprep.subr.bf16.mxu0 0
      %279 = vmatpush2.bf16.msra.mxu0 0
      %280 = vmatprep.subr.bf16.mxu0 0
      %281 = vmatpush2.bf16.msra.mxu0 0
      %282 = vmatprep.subr.bf16.mxu0 0
      %283 = vmatpush2.bf16.msra.mxu0 0
      %284 = vmatprep.subr.bf16.mxu0 0
      %285 = vmatpush2.bf16.msra.mxu0 0
      %286 = vmatprep.subr.bf16.mxu0 0
      %287 = vmatpush2.bf16.msra.mxu0 0
      %288 = vmatprep.mubr.bf16.mxu0 0
      %289 = vmatmul.mubr.bf16.gmra.mxu0 %v250
      %v290 = vpop.f32.mrf.mxu0
      %v291 = vadd.f32 0.0, %v290
      %v292 = vpop.f32.mrf.mxu0
      %v293 = vpop.f32.mrf.mxu0
      %v294 = vadd.f32 0.0, %v293
      %v295 = vpop.f32.mrf.mxu0
      %296 = vdwg.mxu0
      %v297 = vadd.f32 %v235, %v291
      %v298 = vadd.f32 %v236, %v294
      %s299 = scalar_lea.vmem %s216, 8
      %v300 = vld [vmem:[%s299] sm:$0xf]
      %v301 = vld [vmem:[%s299 + $0x4] sm:$0x1]
      %s302 = sadd.s32 1, %s239
      %s303 = smul.addr %s302, 2
      %s304 = scalar_lea.vmem %s1, %s303
      %v305 = vld [vmem:[%s304] sm:$0x3]
      %v308 = vunpack.c.l.b16 %v300
      %v309 = vunpack.c.l.b16 %v301
      %v310 = vpack.c.b16 %v309, %v308
      %v312 = vsel %vm248, %v310, 0
      %v315 = vsel %vm252, %v305, 0
      %317 = vmatprep.subr.bf16.mxu0 0
      %318 = vmatpush1.bf16.msra.mxu0 0
      %319 = vmatprep.subr.bf16.mxu0 0
      %320 = vmatpush1.bf16.msra.mxu0 0
      %321 = vmatprep.subr.bf16.mxu0 0
      %322 = vmatpush1.bf16.msra.mxu0 0
      %323 = vmatprep.subr.bf16.mxu0 0
      %324 = vmatpush1.bf16.msra.mxu0 0
      %325 = vmatprep.subr.bf16.mxu0 0
      %326 = vmatpush1.bf16.msra.mxu0 0
      %327 = vmatprep.subr.bf16.mxu0 0
      %328 = vmatpush1.bf16.msra.mxu0 0
      %329 = vmatprep.subr.bf16.mxu0 0
      %330 = vmatpush1.bf16.msra.mxu0 0
      %331 = vmatprep.subr.bf16.mxu0 0
      %332 = vmatpush1.bf16.msra.mxu0 %v315
      %333 = vmatprep.subr.bf16.mxu0 0
      %334 = vmatpush2.bf16.msra.mxu0 0
      %335 = vmatprep.subr.bf16.mxu0 0
      %336 = vmatpush2.bf16.msra.mxu0 0
      %337 = vmatprep.subr.bf16.mxu0 0
      %338 = vmatpush2.bf16.msra.mxu0 0
      %339 = vmatprep.subr.bf16.mxu0 0
      %340 = vmatpush2.bf16.msra.mxu0 0
      %341 = vmatprep.subr.bf16.mxu0 0
      %342 = vmatpush2.bf16.msra.mxu0 0
      %343 = vmatprep.subr.bf16.mxu0 0
      %344 = vmatpush2.bf16.msra.mxu0 0
      %345 = vmatprep.subr.bf16.mxu0 0
      %346 = vmatpush2.bf16.msra.mxu0 0
      %347 = vmatprep.subr.bf16.mxu0 0
      %348 = vmatpush2.bf16.msra.mxu0 0
      %349 = vmatprep.mubr.bf16.mxu0 0
      %350 = vmatmul.mubr.bf16.gmra.mxu0 %v312
      %v351 = vpop.f32.mrf.mxu0
      %v352 = vadd.f32 0.0, %v351
      %v353 = vpop.f32.mrf.mxu0
      %v354 = vpop.f32.mrf.mxu0
      %v355 = vadd.f32 0.0, %v354
      %v356 = vpop.f32.mrf.mxu0
      %357 = vdwg.mxu0
      %v358 = vadd.f32 %v297, %v352
      %v359 = vadd.f32 %v298, %v355
      %s360 = sadd.s32 2, %s239
      %s361 = smul.addr %s360, 2
      %s362 = scalar_lea.vmem %s1, %s361
      %v363 = vld [vmem:[%s362] sm:$0x3]
      %v364 = vshrl.u32 %v247, 16
      %v366 = vshll.u32 %v247, 16
      %v368 = vrot.slane %v366, 1
      %v369 = vor.u32 %v364, %v368
      %v371 = vsel %vm248, %v369, 0
      %v374 = vsel %vm252, %v363, 0
      %376 = vmatprep.subr.bf16.mxu0 0
      %377 = vmatpush1.bf16.msra.mxu0 0
      %378 = vmatprep.subr.bf16.mxu0 0
      %379 = vmatpush1.bf16.msra.mxu0 0
      %380 = vmatprep.subr.bf16.mxu0 0
      %381 = vmatpush1.bf16.msra.mxu0 0
      %382 = vmatprep.subr.bf16.mxu0 0
      %383 = vmatpush1.bf16.msra.mxu0 0
      %384 = vmatprep.subr.bf16.mxu0 0
      %385 = vmatpush1.bf16.msra.mxu0 0
      %386 = vmatprep.subr.bf16.mxu0 0
      %387 = vmatpush1.bf16.msra.mxu0 0
      %388 = vmatprep.subr.bf16.mxu0 0
      %389 = vmatpush1.bf16.msra.mxu0 0
      %390 = vmatprep.subr.bf16.mxu0 0
      %391 = vmatpush1.bf16.msra.mxu0 %v374
      %392 = vmatprep.subr.bf16.mxu0 0
      %393 = vmatpush2.bf16.msra.mxu0 0
      %394 = vmatprep.subr.bf16.mxu0 0
      %395 = vmatpush2.bf16.msra.mxu0 0
      %396 = vmatprep.subr.bf16.mxu0 0
      %397 = vmatpush2.bf16.msra.mxu0 0
      %398 = vmatprep.subr.bf16.mxu0 0
      %399 = vmatpush2.bf16.msra.mxu0 0
      %400 = vmatprep.subr.bf16.mxu0 0
      %401 = vmatpush2.bf16.msra.mxu0 0
      %402 = vmatprep.subr.bf16.mxu0 0
      %403 = vmatpush2.bf16.msra.mxu0 0
      %404 = vmatprep.subr.bf16.mxu0 0
      %405 = vmatpush2.bf16.msra.mxu0 0
      %406 = vmatprep.subr.bf16.mxu0 0
      %407 = vmatpush2.bf16.msra.mxu0 0
      %408 = vmatprep.mubr.bf16.mxu0 0
      %409 = vmatmul.mubr.bf16.gmra.mxu0 %v371
      %v410 = vpop.f32.mrf.mxu0
      %v411 = vadd.f32 0.0, %v410
      %v412 = vpop.f32.mrf.mxu0
      %v413 = vpop.f32.mrf.mxu0
      %v414 = vadd.f32 0.0, %v413
      %v415 = vpop.f32.mrf.mxu0
      %416 = vdwg.mxu0
      %v417 = vadd.f32 %v358, %v411
      %v418 = vadd.f32 %v359, %v414
      %s419 = sadd.s32 3, %s239
      %s420 = smul.addr %s419, 2
      %s421 = scalar_lea.vmem %s1, %s420
      %v422 = vld [vmem:[%s421] sm:$0x3]
      %v423 = vshrl.u32 %v310, 16
      %v425 = vshll.u32 %v310, 16
      %v427 = vrot.slane %v425, 1
      %v428 = vor.u32 %v423, %v427
      %v430 = vsel %vm248, %v428, 0
      %v433 = vsel %vm252, %v422, 0
      %435 = vmatprep.subr.bf16.mxu0 0
      %436 = vmatpush1.bf16.msra.mxu0 0
      %437 = vmatprep.subr.bf16.mxu0 0
      %438 = vmatpush1.bf16.msra.mxu0 0
      %439 = vmatprep.subr.bf16.mxu0 0
      %440 = vmatpush1.bf16.msra.mxu0 0
      %441 = vmatprep.subr.bf16.mxu0 0
      %442 = vmatpush1.bf16.msra.mxu0 0
      %443 = vmatprep.subr.bf16.mxu0 0
      %444 = vmatpush1.bf16.msra.mxu0 0
      %445 = vmatprep.subr.bf16.mxu0 0
      %446 = vmatpush1.bf16.msra.mxu0 0
      %447 = vmatprep.subr.bf16.mxu0 0
      %448 = vmatpush1.bf16.msra.mxu0 0
      %449 = vmatprep.subr.bf16.mxu0 0
      %450 = vmatpush1.bf16.msra.mxu0 %v433
      %451 = vmatprep.subr.bf16.mxu0 0
      %452 = vmatpush2.bf16.msra.mxu0 0
      %453 = vmatprep.subr.bf16.mxu0 0
      %454 = vmatpush2.bf16.msra.mxu0 0
      %455 = vmatprep.subr.bf16.mxu0 0
      %456 = vmatpush2.bf16.msra.mxu0 0
      %457 = vmatprep.subr.bf16.mxu0 0
      %458 = vmatpush2.bf16.msra.mxu0 0
      %459 = vmatprep.subr.bf16.mxu0 0
      %460 = vmatpush2.bf16.msra.mxu0 0
      %461 = vmatprep.subr.bf16.mxu0 0
      %462 = vmatpush2.bf16.msra.mxu0 0
      %463 = vmatprep.subr.bf16.mxu0 0
      %464 = vmatpush2.bf16.msra.mxu0 0
      %465 = vmatprep.subr.bf16.mxu0 0
      %466 = vmatpush2.bf16.msra.mxu0 0
      %467 = vmatprep.mubr.bf16.mxu0 0
      %468 = vmatmul.mubr.bf16.gmra.mxu0 %v430
      %v469 = vpop.f32.mrf.mxu0
      %v470 = vadd.f32 0.0, %v469
      %v471 = vpop.f32.mrf.mxu0
      %v472 = vpop.f32.mrf.mxu0
      %v473 = vadd.f32 0.0, %v472
      %v474 = vpop.f32.mrf.mxu0
      %475 = vdwg.mxu0
      %v476 = vadd.f32 %v417, %v470
      %v477 = vadd.f32 %v418, %v473
      %478 = vst [vmem:[#allocation2] sm:$0xff] %v476
      %479 = vst [vmem:[#allocation2 + $0x8] sm:$0x1] %v477
      %p480 = scmp.eq.s32.totalorder %s21, 3
      // Predicated region
      $region37: #{_forward_impl.5} parent=31 // pred_check
        %p481 = pneg %p480
      $region38: #{_forward_impl.5} parent=31 // pred_check_branch
        %483 = sbr.rel (%p481) target = $region40
      $region39: #{_forward_impl.5} parent=31 // pred_region
        %v484 = vld [vmem:[#allocation2] sm:$0xff]
        %v485 = vld [vmem:[#allocation2 + $0x8] sm:$0x1]
        %v486 = vld [vmem:[%s2] sm:$0x1]
        %v488 = vlaneseq
        %v489 = vshrl.u32 %v488, 7
        %v490 = vsub.s32 0, %v489
        %v491 = vrot.slane %v486, %v490
        %v493 = vadd.f32 %v484, %v491
        %v494 = vadd.f32 %v485, %v491
        %vm495 = vcmp.gt.f32.partialorder %v493, 0.0
        %vm496 = vcmp.gt.f32.partialorder %v494, 0.0
        %v497 = vmul.f32 %v493, 0.2
        %v498 = vmul.f32 %v494, 0.2
        %v499 = vsel %vm495, %v493, %v497
        %v500 = vsel %vm496, %v494, %v498
        %v501 = vpack.c.bf16 %v500, %v499
        %v503 = vunpack.c.l.b16 %v501
        %v504 = vunpack.c.h.b16 %v501
        %v505 = vpack.c.b16 %v503, %v503
        %v506 = vpack.c.b16 %v504, %v504
        %509 = vst [vmem:[%s227] sm:$0xf] %v505
        %vm510 = vcmask 1040384
        %vm511 = vsmask.f32 256
        %vm512 = vmand %vm510, %vm511
        %v513 = vld [vmem:[%s227 + $0x4] sm:$0x1]
        %v514 = vsel %vm512, %v506, %v513
        %515 = vst [vmem:[%s227 + $0x4] sm:$0x1] %v514
      $region40: #{_forward_impl.5} parent=31 // pred_fallthru
        _
      %p516 = scmp.lt.s32.totalorder %s19, 1
      %s517 = scalar_select %p516, %s19, 1
      %p518 = scmp.lt.s32.totalorder %s20, 8
      %s519 = scalar_select %p518, %s20, 8
      %s520 = smul.addr %s519, 2
      %s521 = smul.addr %s517, 18
      %s522 = sadd.s32 %s520, %s521
      %s523 = smul.addr %s522, 4
      %s524 = scalar_lea.vmem %s3, %s523
      // Predicated region
      $region41: #{_forward_impl.5} parent=31 // pred_check
        %p525 = pneg %p127
      $region42: #{_forward_impl.5} parent=31 // pred_check_branch
        %527 = sbr.rel (%p525) target = $region44
      $region43: #{_forward_impl.5} parent=31 // pred_region
        _
      $region44: #{_forward_impl.5} parent=31 // pred_fallthru
        _
    $region32: #{_forward_impl.5} parent=5 // pred_fallthru
      _
    %p528 = scmp.le.s32.totalorder 2, %s9
    // Predicated region
    $region45: #{_forward_impl.5} parent=5 // pred_check
      %p529 = pneg %p528
    $region46: #{_forward_impl.5} parent=5 // pred_check_branch
      %531 = sbr.rel (%p529) target = $region48
    $region47: #{_forward_impl.5} parent=5 // pred_region
      %s532 = ssub.s32 %s9, 2
      // Predicated region
      $region49: #{_forward_impl.5} parent=47 // pred_check
        %p533 = pneg %p133
      $region50: #{_forward_impl.5} parent=47 // pred_check_branch
        %535 = sbr.rel (%p533) target = $region52
      $region51: #{_forward_impl.5} parent=47 // pred_region
        %p536 = scmp.lt.s32.totalorder %s22, 1
        %s537 = scalar_select %p536, %s22, 1
        %p538 = scmp.lt.s32.totalorder %s23, 8
        %s539 = scalar_select %p538, %s23, 8
        %s540 = smul.addr %s539, 2
        %s541 = smul.addr %s537, 18
        %s542 = sadd.s32 %s540, %s541
        %s543 = smul.addr %s542, 4
        %s544 = scalar_lea.vmem %s3, %s543
      $region52: #{_forward_impl.5} parent=47 // pred_fallthru
        _
    $region48: #{_forward_impl.5} parent=5 // pred_fallthru
      _
  $region6: #{_forward_impl.5} parent=0 // loop_footer
    %s13 = sadd.s32 1, %s9
  $region7: #{_forward_impl.5} parent=0 // loop_footer_branch
    %8 = sbr.rel target = $region3
  $region8: #{_forward_impl.5} parent=0 // loop_exit
    _

// kernel: _forward_impl.6
$region0: #{_forward_impl.6}
  #allocation0 [shape = 'u32[]', space=smem, size = 0x4, offset = 0x4, fixed_abs, tag = 'smem constant byte address 0x4 - core index']
  #allocation1 [shape = 'u32[144,128]{1,0:T(1,128)}', space=vmem, size = 0x12000, scoped, tag = 'internal scratch']
  #allocation2 [shape = 'f32[5,128]{1,0:T(8,128)}', space=vmem, size = 0x1000, scoped, tag = 'scratch operand']
  %s0 = inlined_call_operand.vmem [shape: bf16[2,13,2,7,128], index: 0, kind: input, shape index: {}]
  %s1 = inlined_call_operand.vmem [shape: bf16[4,4,128,128], index: 1, kind: input, shape index: {}]
  %s2 = inlined_call_operand.vmem [shape: f32[1,128], index: 2, kind: input, shape index: {}]
  %s3 = inlined_call_operand.vmem [shape: bf16[2,5,5,128], index: 3, kind: output, shape index: {}]
  %s4 = sld [smem:[#allocation0]]
  $region53: #{_forward_impl.6} parent=0
    _
  %s6 = ssub.s32 1, %s4
  %s7 = scalar_select 0, %s6, %s4
  loop: start=0, step=1, limit=42
  $region2: #{_forward_impl.6} parent=0 // loop_pre_header
    _
  $region3: #{_forward_impl.6} parent=0 // loop_header
    %s9 = sphi 0, %s13
    %p10 = scmp.ge.s32.totalorder %s9, 42
    %s16 = sphi 0, %s35
    %s17 = sphi 0, %s31
    %s18 = sphi 0, %s27
    %s19 = sphi 0, %s16
    %s20 = sphi 0, %s17
    %s21 = sphi 0, %s18
    %s22 = sphi 0, %s19
    %s23 = sphi 0, %s20
    %s24 = sphi 0, %s21
    %s44 = sphi 0, %s46
    %s47 = sphi 0, %s44
    %s48 = sphi 0, %s47
    %s64 = sphi 0, %s48
    %s68 = sphi 0, %s68
    %s70 = sphi 0, %s68
    %s71 = sphi 0, %s70
    %s85 = sphi 0, %s71
    %s89 = sphi 0, %s89
    %s91 = sphi 0, %s89
    %s92 = sphi 0, %s91
    %s106 = sphi 0, %s92
    %s114 = sphi 0, %s116
    %s117 = sphi 0, %s114
    %s118 = sphi 0, %s117
    %s134 = sphi 0, %s118
  $region4: #{_forward_impl.6} parent=0 // loop_header_branch
    %12 = sbr.rel (%p10) target = $region8
  $region5: #{_forward_impl.6} parent=0 // loop_body
    %s14 = ssub.s32 %s9, 1
    %s15 = ssub.s32 %s9, 2
    %s25 = sadd.s32 1, %s18
    %p26 = scmp.ge.s32.totalorder %s25, 4
    %s27 = scalar_select %p26, 0, %s25
    %s28 = sadd.s32 1, %s17
    %s29 = scalar_select %p26, %s28, %s17
    %p30 = scmp.ge.s32.totalorder %s29, 5
    %s31 = scalar_select %p30, 0, %s29
    %s32 = sadd.s32 1, %s16
    %s33 = scalar_select %p30, %s32, %s16
    %p34 = scmp.ge.s32.totalorder %s33, 2
    %s35 = scalar_select %p34, 0, %s33
    %s36 = smul.u32 %s17, 2
    %s37 = sadd.s32 %s36, %s18
    %s38 = smul.u32 %s31, 2
    %s39 = sadd.s32 %s38, %s27
    %s40 = ssub.s32 %s16, %s35
    %s41 = ssub.s32 %s37, %s39
    %s42 = sor.u32 %s40, %s41
    %p43 = scmp.eq.s32.totalorder %s42, 0
    %s45 = sadd.s32 %s44, 1
    %s46 = scalar_select %p43, %s44, %s45
    %p49 = pneg %p43
    %p50 = scmp.eq.s32.totalorder %s9, 39
    %p51 = por %p49, %p50
    %p52 = scmp.ne.s32.totalorder %s44, %s47
    %p53 = scmp.eq.s32.totalorder %s9, 0
    %p54 = por %p52, %p53
    %p55 = scmp.ne.s32.totalorder %s44, %s47
    %p56 = scmp.eq.s32.totalorder %s14, 39
    %p57 = por %p55, %p56
    %p58 = scmp.ne.s32.totalorder %s47, %s48
    %p59 = scmp.eq.s32.totalorder %s14, 0
    %p60 = por %p58, %p59
    %p61 = scmp.ne.s32.totalorder %s47, %s48
    %p62 = scmp.eq.s32.totalorder %s15, 39
    %p63 = por %p61, %p62
    %p65 = scmp.ne.s32.totalorder %s48, %s64
    %p66 = scmp.eq.s32.totalorder %s15, 0
    %p67 = por %p65, %p66
    %s69 = sadd.s32 %s68, 1
    %p72 = scmp.eq.s32.totalorder %s9, 39
    %p73 = scmp.ne.s32.totalorder %s68, %s70
    %p74 = scmp.eq.s32.totalorder %s9, 0
    %p75 = por %p73, %p74
    %p76 = scmp.ne.s32.totalorder %s68, %s70
    %p77 = scmp.eq.s32.totalorder %s14, 39
    %p78 = por %p76, %p77
    %p79 = scmp.ne.s32.totalorder %s70, %s71
    %p80 = scmp.eq.s32.totalorder %s14, 0
    %p81 = por %p79, %p80
    %p82 = scmp.ne.s32.totalorder %s70, %s71
    %p83 = scmp.eq.s32.totalorder %s15, 39
    %p84 = por %p82, %p83
    %p86 = scmp.ne.s32.totalorder %s71, %s85
    %p87 = scmp.eq.s32.totalorder %s15, 0
    %p88 = por %p86, %p87
    %s90 = sadd.s32 %s89, 1
    %p93 = scmp.eq.s32.totalorder %s9, 39
    %p94 = scmp.ne.s32.totalorder %s89, %s91
    %p95 = scmp.eq.s32.totalorder %s9, 0
    %p96 = por %p94, %p95
    %p97 = scmp.ne.s32.totalorder %s89, %s91
    %p98 = scmp.eq.s32.totalorder %s14, 39
    %p99 = por %p97, %p98
    %p100 = scmp.ne.s32.totalorder %s91, %s92
    %p101 = scmp.eq.s32.totalorder %s14, 0
    %p102 = por %p100, %p101
    %p103 = scmp.ne.s32.totalorder %s91, %s92
    %p104 = scmp.eq.s32.totalorder %s15, 39
    %p105 = por %p103, %p104
    %p107 = scmp.ne.s32.totalorder %s92, %s106
    %p108 = scmp.eq.s32.totalorder %s15, 0
    %p109 = por %p107, %p108
    %s110 = ssub.s32 %s16, %s35
    %s111 = ssub.s32 %s17, %s31
    %s112 = sor.u32 %s110, %s111
    %p113 = scmp.eq.s32.totalorder %s112, 0
    %s115 = sadd.s32 %s114, 1
    %s116 = scalar_select %p113, %s114, %s115
    %p119 = pneg %p113
    %p120 = scmp.eq.s32.totalorder %s9, 39
    %p121 = por %p119, %p120
    %p122 = scmp.ne.s32.totalorder %s114, %s117
    %p123 = scmp.eq.s32.totalorder %s9, 0
    %p124 = por %p122, %p123
    %p125 = scmp.ne.s32.totalorder %s114, %s117
    %p126 = scmp.eq.s32.totalorder %s14, 39
    %p127 = por %p125, %p126
    %p128 = scmp.ne.s32.totalorder %s117, %s118
    %p129 = scmp.eq.s32.totalorder %s14, 0
    %p130 = por %p128, %p129
    %p131 = scmp.ne.s32.totalorder %s117, %s118
    %p132 = scmp.eq.s32.totalorder %s15, 39
    %p133 = por %p131, %p132
    %p135 = scmp.ne.s32.totalorder %s118, %s134
    %p136 = scmp.eq.s32.totalorder %s15, 0
    %p137 = por %p135, %p136
    %p138 = scmp.le.s32.totalorder 1, %s9
    %p139 = scmp.lt.s32.totalorder %s9, 41
    %p140 = pnand %p138, %p139
    %p141 = pneg %p140
    // Predicated region
    $region9: #{_forward_impl.6} parent=5 // pred_check
      _
    $region10: #{_forward_impl.6} parent=5 // pred_check_branch
      %143 = sbr.rel (%p140) target = $region12
    $region11: #{_forward_impl.6} parent=5 // pred_region
      %s144 = ssub.s32 %s9, 1
      // Predicated region
      $region13: #{_forward_impl.6} parent=11 // pred_check
        %p145 = pneg %p81
      $region14: #{_forward_impl.6} parent=11 // pred_check_branch
        %147 = sbr.rel (%p145) target = $region16
      $region15: #{_forward_impl.6} parent=11 // pred_region
        _
      $region16: #{_forward_impl.6} parent=11 // pred_fallthru
        _
      // Predicated region
      $region17: #{_forward_impl.6} parent=11 // pred_check
        %p148 = pneg %p102
      $region18: #{_forward_impl.6} parent=11 // pred_check_branch
        %150 = sbr.rel (%p148) target = $region20
      $region19: #{_forward_impl.6} parent=11 // pred_region
        _
      $region20: #{_forward_impl.6} parent=11 // pred_fallthru
        _
    $region12: #{_forward_impl.6} parent=5 // pred_fallthru
      _
    %p151 = scmp.lt.s32.totalorder %s9, 40
    // Predicated region
    $region21: #{_forward_impl.6} parent=5 // pred_check
      %p152 = pneg %p151
    $region22: #{_forward_impl.6} parent=5 // pred_check_branch
      %154 = sbr.rel (%p152) target = $region24
    $region23: #{_forward_impl.6} parent=5 // pred_region
      // Predicated region
      $region25: #{_forward_impl.6} parent=23 // pred_check
        %p155 = pneg %p54
      $region26: #{_forward_impl.6} parent=23 // pred_check_branch
        %157 = sbr.rel (%p155) target = $region28
      $region27: #{_forward_impl.6} parent=23 // pred_region
        %s158 = smul.u32 %s17, 2
        %s159 = sadd.s32 %s158, %s18
        %p160 = scmp.lt.s32.totalorder %s16, 1
        %s161 = scalar_select %p160, %s16, 1
        %p162 = scmp.lt.s32.totalorder %s159, 12
        %s163 = scalar_select %p162, %s159, 12
        %s164 = smul.addr %s163, 2
        %s165 = smul.addr %s161, 26
        %s166 = sadd.s32 %s164, %s165
        %s167 = smul.addr %s166, 4
        %s168 = scalar_lea.vmem %s0, %s167
        %s169 = smul.u32 %s17, 2
        %s170 = sadd.s32 %s169, %s18
      $region28: #{_forward_impl.6} parent=23 // pred_fallthru
        _
    $region24: #{_forward_impl.6} parent=5 // pred_fallthru
      _
    %p171 = scmp.le.s32.totalorder 1, %s9
    %p172 = scmp.lt.s32.totalorder %s9, 41
    %p173 = pnand %p171, %p172
    %p174 = pneg %p173
    // Predicated region
    $region29: #{_forward_impl.6} parent=5 // pred_check
      _
    $region30: #{_forward_impl.6} parent=5 // pred_check_branch
      %176 = sbr.rel (%p173) target = $region32
    $region31: #{_forward_impl.6} parent=5 // pred_region
      %s177 = ssub.s32 %s9, 1
      %s178 = smul.u32 %s20, 2
      %s179 = sadd.s32 %s178, %s21
      %p180 = scmp.lt.s32.totalorder %s19, 1
      %s181 = scalar_select %p180, %s19, 1
      %p182 = scmp.lt.s32.totalorder %s179, 12
      %s183 = scalar_select %p182, %s179, 12
      %s184 = smul.addr %s183, 2
      %s185 = smul.addr %s181, 26
      %s186 = sadd.s32 %s184, %s185
      %s187 = smul.addr %s186, 4
      %s188 = scalar_lea.vmem %s0, %s187
      %p189 = pneg %p60
      %p190 = pneg %p57
      %p191 = pneg %p81
      %p192 = pneg %p78
      %p193 = pneg %p102
      %p194 = pneg %p99
      %p195 = pneg %p130
      %p196 = pneg %p127
      %p197 = scmp.lt.s32.totalorder %s19, 1
      %s198 = scalar_select %p197, %s19, 1
      %p199 = scmp.lt.s32.totalorder %s20, 4
      %s200 = scalar_select %p199, %s20, 4
      %s201 = smul.addr %s198, 5
      %s202 = sadd.s32 %s200, %s201
      %s203 = smul.addr %s202, 4
      %s204 = scalar_lea.vmem %s3, %s203
      %s205 = smul.u32 %s20, 2
      %s206 = sadd.s32 %s205, %s21
      %p207 = scmp.lt.s32.totalorder %s19, 1
      %s208 = scalar_select %p207, %s19, 1
      %p209 = scmp.lt.s32.totalorder %s206, 12
      %s210 = scalar_select %p209, %s206, 12
      %s211 = smul.addr %s210, 2
      %s212 = smul.addr %s208, 26
      %s213 = sadd.s32 %s211, %s212
      %s214 = smul.addr %s213, 4
      %s215 = scalar_lea.vmem %s0, %s214
      %s216 = smul.u32 %s20, 2
      %s217 = sadd.s32 %s216, %s21
      %p218 = scmp.lt.s32.totalorder %s19, 1
      %s219 = scalar_select %p218, %s19, 1
      %p220 = scmp.lt.s32.totalorder %s20, 4
      %s221 = scalar_select %p220, %s20, 4
      %s222 = smul.addr %s219, 5
      %s223 = sadd.s32 %s221, %s222
      %s224 = smul.addr %s223, 4
      %s225 = scalar_lea.vmem %s3, %s224
      %p227 = scmp.eq.s32.totalorder %s21, 0
      // Predicated region
      $region33: #{_forward_impl.6} parent=31 // pred_check
        %p228 = pneg %p227
      $region34: #{_forward_impl.6} parent=31 // pred_check_branch
        %230 = sbr.rel (%p228) target = $region36
      $region35: #{_forward_impl.6} parent=31 // pred_region
        %231 = vst [vmem:[#allocation2] sm:$0x1f] 0.0
      $region36: #{_forward_impl.6} parent=31 // pred_fallthru
        _
      %v232 = vld [vmem:[#allocation2] sm:$0x1f]
      %v233 = vld [vmem:[%s215] sm:$0x7]
      %s234 = smul.u32 %s21, 64
      %s235 = smul.addr %s234, 4
      %s236 = scalar_lea.vmem %s1, %s235
      %v237 = vld [vmem:[%s236] sm:$0xf]
      %v238 = vld [vmem:[%s236 + $0x4] sm:$0xf]
      %v239 = vld [vmem:[%s236 + $0x8] sm:$0xf]
      %v240 = vld [vmem:[%s236 + $0xc] sm:$0xf]
      %v241 = vld [vmem:[%s236 + $0x10] sm:$0xf]
      %v242 = vld [vmem:[%s236 + $0x14] sm:$0xf]
      %v243 = vld [vmem:[%s236 + $0x18] sm:$0xf]
      %v244 = vld [vmem:[%s236 + $0x1c] sm:$0xf]
      %v245 = vld [vmem:[%s236 + $0x20] sm:$0xf]
      %v246 = vld [vmem:[%s236 + $0x24] sm:$0xf]
      %v247 = vld [vmem:[%s236 + $0x28] sm:$0xf]
      %v248 = vld [vmem:[%s236 + $0x2c] sm:$0xf]
      %v249 = vld [vmem:[%s236 + $0x30] sm:$0xf]
      %v250 = vld [vmem:[%s236 + $0x34] sm:$0xf]
      %v251 = vld [vmem:[%s236 + $0x38] sm:$0xf]
      %v252 = vld [vmem:[%s236 + $0x3c] sm:$0xf]
      %v269 = vunpack.c.l.b16 %v237
      %v270 = vunpack.c.l.b16 %v238
      %v271 = vunpack.c.l.b16 %v239
      %v272 = vunpack.c.l.b16 %v240
      %v273 = vunpack.c.l.b16 %v241
      %v274 = vunpack.c.l.b16 %v242
      %v275 = vunpack.c.l.b16 %v243
      %v276 = vunpack.c.l.b16 %v244
      %v277 = vunpack.c.l.b16 %v245
      %v278 = vunpack.c.l.b16 %v246
      %v279 = vunpack.c.l.b16 %v247
      %v280 = vunpack.c.l.b16 %v248
      %v281 = vunpack.c.l.b16 %v249
      %v282 = vunpack.c.l.b16 %v250
      %v283 = vunpack.c.l.b16 %v251
      %v284 = vunpack.c.l.b16 %v252
      %v285 = vpack.c.b16 %v270, %v269
      %v286 = vpack.c.b16 %v272, %v271
      %v287 = vpack.c.b16 %v274, %v273
      %v288 = vpack.c.b16 %v276, %v275
      %v289 = vpack.c.b16 %v278, %v277
      %v290 = vpack.c.b16 %v280, %v279
      %v291 = vpack.c.b16 %v282, %v281
      %v292 = vpack.c.b16 %v284, %v283
      %301 = vmatprep.subr.bf16.mxu0 0
      %302 = vmatpush1.bf16.msra.mxu0 %v292
      %303 = vmatprep.subr.bf16.mxu0 0
      %304 = vmatpush1.bf16.msra.mxu0 %v291
      %305 = vmatprep.subr.bf16.mxu0 0
      %306 = vmatpush1.bf16.msra.mxu0 %v290
      %307 = vmatprep.subr.bf16.mxu0 0
      %308 = vmatpush1.bf16.msra.mxu0 %v289
      %309 = vmatprep.subr.bf16.mxu0 0
      %310 = vmatpush1.bf16.msra.mxu0 %v288
      %311 = vmatprep.subr.bf16.mxu0 0
      %312 = vmatpush1.bf16.msra.mxu0 %v287
      %313 = vmatprep.subr.bf16.mxu0 0
      %314 = vmatpush1.bf16.msra.mxu0 %v286
      %315 = vmatprep.subr.bf16.mxu0 0
      %316 = vmatpush1.bf16.msra.mxu0 %v285
      %317 = vmatprep.subr.bf16.mxu0 0
      %318 = vmatpush2.bf16.msra.mxu0 0
      %319 = vmatprep.subr.bf16.mxu0 0
      %320 = vmatpush2.bf16.msra.mxu0 0
      %321 = vmatprep.subr.bf16.mxu0 0
      %322 = vmatpush2.bf16.msra.mxu0 0
      %323 = vmatprep.subr.bf16.mxu0 0
      %324 = vmatpush2.bf16.msra.mxu0 0
      %325 = vmatprep.subr.bf16.mxu0 0
      %326 = vmatpush2.bf16.msra.mxu0 0
      %327 = vmatprep.subr.bf16.mxu0 0
      %328 = vmatpush2.bf16.msra.mxu0 0
      %329 = vmatprep.subr.bf16.mxu0 0
      %330 = vmatpush2.bf16.msra.mxu0 0
      %331 = vmatprep.subr.bf16.mxu0 0
      %332 = vmatpush2.bf16.msra.mxu0 0
      %333 = vmatprep.mubr.bf16.mxu0 0
      %334 = vmatmul.mubr.bf16.gmra.mxu0 %v233
      %v335 = vpop.f32.mrf.mxu0
      %v336 = vadd.f32 0.0, %v335
      %v337 = vpop.f32.mrf.mxu0
      %v338 = vpop.f32.mrf.mxu0
      %v339 = vpop.f32.mrf.mxu0
      %340 = vdwg.mxu0
      %v341 = vadd.f32 %v232, %v336
      %s342 = scalar_lea.vmem %s215, 4
      %v343 = vld [vmem:[%s342] sm:$0x7]
      %s344 = sadd.s32 16, %s234
      %s345 = smul.addr %s344, 4
      %s346 = scalar_lea.vmem %s1, %s345
      %v347 = vld [vmem:[%s346] sm:$0xf]
      %v348 = vld [vmem:[%s346 + $0x4] sm:$0xf]
      %v349 = vld [vmem:[%s346 + $0x8] sm:$0xf]
      %v350 = vld [vmem:[%s346 + $0xc] sm:$0xf]
      %v351 = vld [vmem:[%s346 + $0x10] sm:$0xf]
      %v352 = vld [vmem:[%s346 + $0x14] sm:$0xf]
      %v353 = vld [vmem:[%s346 + $0x18] sm:$0xf]
      %v354 = vld [vmem:[%s346 + $0x1c] sm:$0xf]
      %v355 = vld [vmem:[%s346 + $0x20] sm:$0xf]
      %v356 = vld [vmem:[%s346 + $0x24] sm:$0xf]
      %v357 = vld [vmem:[%s346 + $0x28] sm:$0xf]
      %v358 = vld [vmem:[%s346 + $0x2c] sm:$0xf]
      %v359 = vld [vmem:[%s346 + $0x30] sm:$0xf]
      %v360 = vld [vmem:[%s346 + $0x34] sm:$0xf]
      %v361 = vld [vmem:[%s346 + $0x38] sm:$0xf]
      %v362 = vld [vmem:[%s346 + $0x3c] sm:$0xf]
      %v379 = vunpack.c.l.b16 %v347
      %v380 = vunpack.c.l.b16 %v348
      %v381 = vunpack.c.l.b16 %v349
      %v382 = vunpack.c.l.b16 %v350
      %v383 = vunpack.c.l.b16 %v351
      %v384 = vunpack.c.l.b16 %v352
      %v385 = vunpack.c.l.b16 %v353
      %v386 = vunpack.c.l.b16 %v354
      %v387 = vunpack.c.l.b16 %v355
      %v388 = vunpack.c.l.b16 %v356
      %v389 = vunpack.c.l.b16 %v357
      %v390 = vunpack.c.l.b16 %v358
      %v391 = vunpack.c.l.b16 %v359
      %v392 = vunpack.c.l.b16 %v360
      %v393 = vunpack.c.l.b16 %v361
      %v394 = vunpack.c.l.b16 %v362
      %v395 = vpack.c.b16 %v380, %v379
      %v396 = vpack.c.b16 %v382, %v381
      %v397 = vpack.c.b16 %v384, %v383
      %v398 = vpack.c.b16 %v386, %v385
      %v399 = vpack.c.b16 %v388, %v387
      %v400 = vpack.c.b16 %v390, %v389
      %v401 = vpack.c.b16 %v392, %v391
      %v402 = vpack.c.b16 %v394, %v393
      %411 = vmatprep.subr.bf16.mxu0 0
      %412 = vmatpush1.bf16.msra.mxu0 %v402
      %413 = vmatprep.subr.bf16.mxu0 0
      %414 = vmatpush1.bf16.msra.mxu0 %v401
      %415 = vmatprep.subr.bf16.mxu0 0
      %416 = vmatpush1.bf16.msra.mxu0 %v400
      %417 = vmatprep.subr.bf16.mxu0 0
      %418 = vmatpush1.bf16.msra.mxu0 %v399
      %419 = vmatprep.subr.bf16.mxu0 0
      %420 = vmatpush1.bf16.msra.mxu0 %v398
      %421 = vmatprep.subr.bf16.mxu0 0
      %422 = vmatpush1.bf16.msra.mxu0 %v397
      %423 = vmatprep.subr.bf16.mxu0 0
      %424 = vmatpush1.bf16.msra.mxu0 %v396
      %425 = vmatprep.subr.bf16.mxu0 0
      %426 = vmatpush1.bf16.msra.mxu0 %v395
      %427 = vmatprep.subr.bf16.mxu0 0
      %428 = vmatpush2.bf16.msra.mxu0 0
      %429 = vmatprep.subr.bf16.mxu0 0
      %430 = vmatpush2.bf16.msra.mxu0 0
      %431 = vmatprep.subr.bf16.mxu0 0
      %432 = vmatpush2.bf16.msra.mxu0 0
      %433 = vmatprep.subr.bf16.mxu0 0
      %434 = vmatpush2.bf16.msra.mxu0 0
      %435 = vmatprep.subr.bf16.mxu0 0
      %436 = vmatpush2.bf16.msra.mxu0 0
      %437 = vmatprep.subr.bf16.mxu0 0
      %438 = vmatpush2.bf16.msra.mxu0 0
      %439 = vmatprep.subr.bf16.mxu0 0
      %440 = vmatpush2.bf16.msra.mxu0 0
      %441 = vmatprep.subr.bf16.mxu0 0
      %442 = vmatpush2.bf16.msra.mxu0 0
      %443 = vmatprep.mubr.bf16.mxu0 0
      %444 = vmatmul.mubr.bf16.gmra.mxu0 %v343
      %v445 = vpop.f32.mrf.mxu0
      %v446 = vadd.f32 0.0, %v445
      %v447 = vpop.f32.mrf.mxu0
      %v448 = vpop.f32.mrf.mxu0
      %v449 = vpop.f32.mrf.mxu0
      %450 = vdwg.mxu0
      %v451 = vadd.f32 %v341, %v446
      %s452 = sadd.s32 32, %s234
      %s453 = smul.addr %s452, 4
      %s454 = scalar_lea.vmem %s1, %s453
      %v455 = vld [vmem:[%s454] sm:$0xf]
      %v456 = vld [vmem:[%s454 + $0x4] sm:$0xf]
      %v457 = vld [vmem:[%s454 + $0x8] sm:$0xf]
      %v458 = vld [vmem:[%s454 + $0xc] sm:$0xf]
      %v459 = vld [vmem:[%s454 + $0x10] sm:$0xf]
      %v460 = vld [vmem:[%s454 + $0x14] sm:$0xf]
      %v461 = vld [vmem:[%s454 + $0x18] sm:$0xf]
      %v462 = vld [vmem:[%s454 + $0x1c] sm:$0xf]
      %v463 = vld [vmem:[%s454 + $0x20] sm:$0xf]
      %v464 = vld [vmem:[%s454 + $0x24] sm:$0xf]
      %v465 = vld [vmem:[%s454 + $0x28] sm:$0xf]
      %v466 = vld [vmem:[%s454 + $0x2c] sm:$0xf]
      %v467 = vld [vmem:[%s454 + $0x30] sm:$0xf]
      %v468 = vld [vmem:[%s454 + $0x34] sm:$0xf]
      %v469 = vld [vmem:[%s454 + $0x38] sm:$0xf]
      %v470 = vld [vmem:[%s454 + $0x3c] sm:$0xf]
      %v472 = vunpack.c.l.b16 %v233
      %v473 = vpack.c.b16 %v472, %v472
      %v475 = vshrl.u32 %v473, 16
      %v477 = vshll.u32 %v473, 16
      %v479 = vrot.slane %v477, 1
      %v480 = vor.u32 %v475, %v479
      %v498 = vunpack.c.l.b16 %v455
      %v499 = vunpack.c.l.b16 %v456
      %v500 = vunpack.c.l.b16 %v457
      %v501 = vunpack.c.l.b16 %v458
      %v502 = vunpack.c.l.b16 %v459
      %v503 = vunpack.c.l.b16 %v460
      %v504 = vunpack.c.l.b16 %v461
      %v505 = vunpack.c.l.b16 %v462
      %v506 = vunpack.c.l.b16 %v463
      %v507 = vunpack.c.l.b16 %v464
      %v508 = vunpack.c.l.b16 %v465
      %v509 = vunpack.c.l.b16 %v466
      %v510 = vunpack.c.l.b16 %v467
      %v511 = vunpack.c.l.b16 %v468
      %v512 = vunpack.c.l.b16 %v469
      %v513 = vunpack.c.l.b16 %v470
      %v514 = vpack.c.b16 %v499, %v498
      %v515 = vpack.c.b16 %v501, %v500
      %v516 = vpack.c.b16 %v503, %v502
      %v517 = vpack.c.b16 %v505, %v504
      %v518 = vpack.c.b16 %v507, %v506
      %v519 = vpack.c.b16 %v509, %v508
      %v520 = vpack.c.b16 %v511, %v510
      %v521 = vpack.c.b16 %v513, %v512
      %530 = vmatprep.subr.bf16.mxu0 0
      %531 = vmatpush1.bf16.msra.mxu0 %v521
      %532 = vmatprep.subr.bf16.mxu0 0
      %533 = vmatpush1.bf16.msra.mxu0 %v520
      %534 = vmatprep.subr.bf16.mxu0 0
      %535 = vmatpush1.bf16.msra.mxu0 %v519
      %536 = vmatprep.subr.bf16.mxu0 0
      %537 = vmatpush1.bf16.msra.mxu0 %v518
      %538 = vmatprep.subr.bf16.mxu0 0
      %539 = vmatpush1.bf16.msra.mxu0 %v517
      %540 = vmatprep.subr.bf16.mxu0 0
      %541 = vmatpush1.bf16.msra.mxu0 %v516
      %542 = vmatprep.subr.bf16.mxu0 0
      %543 = vmatpush1.bf16.msra.mxu0 %v515
      %544 = vmatprep.subr.bf16.mxu0 0
      %545 = vmatpush1.bf16.msra.mxu0 %v514
      %546 = vmatprep.subr.bf16.mxu0 0
      %547 = vmatpush2.bf16.msra.mxu0 0
      %548 = vmatprep.subr.bf16.mxu0 0
      %549 = vmatpush2.bf16.msra.mxu0 0
      %550 = vmatprep.subr.bf16.mxu0 0
      %551 = vmatpush2.bf16.msra.mxu0 0
      %552 = vmatprep.subr.bf16.mxu0 0
      %553 = vmatpush2.bf16.msra.mxu0 0
      %554 = vmatprep.subr.bf16.mxu0 0
      %555 = vmatpush2.bf16.msra.mxu0 0
      %556 = vmatprep.subr.bf16.mxu0 0
      %557 = vmatpush2.bf16.msra.mxu0 0
      %558 = vmatprep.subr.bf16.mxu0 0
      %559 = vmatpush2.bf16.msra.mxu0 0
      %560 = vmatprep.subr.bf16.mxu0 0
      %561 = vmatpush2.bf16.msra.mxu0 0
      %562 = vmatprep.mubr.bf16.mxu0 0
      %563 = vmatmul.mubr.bf16.gmra.mxu0 %v480
      %v564 = vpop.f32.mrf.mxu0
      %v565 = vadd.f32 0.0, %v564
      %v566 = vpop.f32.mrf.mxu0
      %v567 = vpop.f32.mrf.mxu0
      %v568 = vpop.f32.mrf.mxu0
      %569 = vdwg.mxu0
      %v570 = vadd.f32 %v451, %v565
      %s571 = sadd.s32 48, %s234
      %s572 = smul.addr %s571, 4
      %s573 = scalar_lea.vmem %s1, %s572
      %v574 = vld [vmem:[%s573] sm:$0xf]
      %v575 = vld [vmem:[%s573 + $0x4] sm:$0xf]
      %v576 = vld [vmem:[%s573 + $0x8] sm:$0xf]
      %v577 = vld [vmem:[%s573 + $0xc] sm:$0xf]
      %v578 = vld [vmem:[%s573 + $0x10] sm:$0xf]
      %v579 = vld [vmem:[%s573 + $0x14] sm:$0xf]
      %v580 = vld [vmem:[%s573 + $0x18] sm:$0xf]
      %v581 = vld [vmem:[%s573 + $0x1c] sm:$0xf]
      %v582 = vld [vmem:[%s573 + $0x20] sm:$0xf]
      %v583 = vld [vmem:[%s573 + $0x24] sm:$0xf]
      %v584 = vld [vmem:[%s573 + $0x28] sm:$0xf]
      %v585 = vld [vmem:[%s573 + $0x2c] sm:$0xf]
      %v586 = vld [vmem:[%s573 + $0x30] sm:$0xf]
      %v587 = vld [vmem:[%s573 + $0x34] sm:$0xf]
      %v588 = vld [vmem:[%s573 + $0x38] sm:$0xf]
      %v589 = vld [vmem:[%s573 + $0x3c] sm:$0xf]
      %v591 = vunpack.c.l.b16 %v343
      %v592 = vpack.c.b16 %v591, %v591
      %v594 = vshrl.u32 %v592, 16
      %v596 = vshll.u32 %v592, 16
      %v598 = vrot.slane %v596, 1
      %v599 = vor.u32 %v594, %v598
      %v617 = vunpack.c.l.b16 %v574
      %v618 = vunpack.c.l.b16 %v575
      %v619 = vunpack.c.l.b16 %v576
      %v620 = vunpack.c.l.b16 %v577
      %v621 = vunpack.c.l.b16 %v578
      %v622 = vunpack.c.l.b16 %v579
      %v623 = vunpack.c.l.b16 %v580
      %v624 = vunpack.c.l.b16 %v581
      %v625 = vunpack.c.l.b16 %v582
      %v626 = vunpack.c.l.b16 %v583
      %v627 = vunpack.c.l.b16 %v584
      %v628 = vunpack.c.l.b16 %v585
      %v629 = vunpack.c.l.b16 %v586
      %v630 = vunpack.c.l.b16 %v587
      %v631 = vunpack.c.l.b16 %v588
      %v632 = vunpack.c.l.b16 %v589
      %v633 = vpack.c.b16 %v618, %v617
      %v634 = vpack.c.b16 %v620, %v619
      %v635 = vpack.c.b16 %v622, %v621
      %v636 = vpack.c.b16 %v624, %v623
      %v637 = vpack.c.b16 %v626, %v625
      %v638 = vpack.c.b16 %v628, %v627
      %v639 = vpack.c.b16 %v630, %v629
      %v640 = vpack.c.b16 %v632, %v631
      %649 = vmatprep.subr.bf16.mxu0 0
      %650 = vmatpush1.bf16.msra.mxu0 %v640
      %651 = vmatprep.subr.bf16.mxu0 0
      %652 = vmatpush1.bf16.msra.mxu0 %v639
      %653 = vmatprep.subr.bf16.mxu0 0
      %654 = vmatpush1.bf16.msra.mxu0 %v638
      %655 = vmatprep.subr.bf16.mxu0 0
      %656 = vmatpush1.bf16.msra.mxu0 %v637
      %657 = vmatprep.subr.bf16.mxu0 0
      %658 = vmatpush1.bf16.msra.mxu0 %v636
      %659 = vmatprep.subr.bf16.mxu0 0
      %660 = vmatpush1.bf16.msra.mxu0 %v635
      %661 = vmatprep.subr.bf16.mxu0 0
      %662 = vmatpush1.bf16.msra.mxu0 %v634
      %663 = vmatprep.subr.bf16.mxu0 0
      %664 = vmatpush1.bf16.msra.mxu0 %v633
      %665 = vmatprep.subr.bf16.mxu0 0
      %666 = vmatpush2.bf16.msra.mxu0 0
      %667 = vmatprep.subr.bf16.mxu0 0
      %668 = vmatpush2.bf16.msra.mxu0 0
      %669 = vmatprep.subr.bf16.mxu0 0
      %670 = vmatpush2.bf16.msra.mxu0 0
      %671 = vmatprep.subr.bf16.mxu0 0
      %672 = vmatpush2.bf16.msra.mxu0 0
      %673 = vmatprep.subr.bf16.mxu0 0
      %674 = vmatpush2.bf16.msra.mxu0 0
      %675 = vmatprep.subr.bf16.mxu0 0
      %676 = vmatpush2.bf16.msra.mxu0 0
      %677 = vmatprep.subr.bf16.mxu0 0
      %678 = vmatpush2.bf16.msra.mxu0 0
      %679 = vmatprep.subr.bf16.mxu0 0
      %680 = vmatpush2.bf16.msra.mxu0 0
      %681 = vmatprep.mubr.bf16.mxu0 0
      %682 = vmatmul.mubr.bf16.gmra.mxu0 %v599
      %v683 = vpop.f32.mrf.mxu0
      %v684 = vadd.f32 0.0, %v683
      %v685 = vpop.f32.mrf.mxu0
      %v686 = vpop.f32.mrf.mxu0
      %v687 = vpop.f32.mrf.mxu0
      %688 = vdwg.mxu0
      %v689 = vadd.f32 %v570, %v684
      %690 = vst [vmem:[#allocation2] sm:$0x1f] %v689
      %p691 = scmp.eq.s32.totalorder %s21, 3
      // Predicated region
      $region37: #{_forward_impl.6} parent=31 // pred_check
        %p692 = pneg %p691
      $region38: #{_forward_impl.6} parent=31 // pred_check_branch
        %694 = sbr.rel (%p692) target = $region40
      $region39: #{_forward_impl.6} parent=31 // pred_region
        %v695 = vld [vmem:[#allocation2] sm:$0x1f]
        %v696 = vld [vmem:[%s2] sm:$0x1]
        %v698 = vlaneseq
        %v699 = vshrl.u32 %v698, 7
        %v700 = vsub.s32 0, %v699
        %v701 = vrot.slane %v696, %v700
        %v703 = vadd.f32 %v695, %v701
        %vm704 = vcmp.gt.f32.partialorder %v703, 0.0
        %v705 = vmul.f32 %v703, 0.2
        %v706 = vsel %vm704, %v703, %v705
        %v707 = vpack.c.bf16 %v706, %v706
        %vm708 = vcmask 1042432
        %vm709 = vsmask.f32 2304
        %vm710 = vmand %vm708, %vm709
        %v711 = vld [vmem:[%s225] sm:$0x7]
        %v712 = vsel %vm710, %v707, %v711
        %713 = vst [vmem:[%s225] sm:$0x7] %v712
      $region40: #{_forward_impl.6} parent=31 // pred_fallthru
        _
      %p714 = scmp.lt.s32.totalorder %s19, 1
      %s715 = scalar_select %p714, %s19, 1
      %p716 = scmp.lt.s32.totalorder %s20, 4
      %s717 = scalar_select %p716, %s20, 4
      %s718 = smul.addr %s715, 5
      %s719 = sadd.s32 %s717, %s718
      %s720 = smul.addr %s719, 4
      %s721 = scalar_lea.vmem %s3, %s720
      // Predicated region
      $region41: #{_forward_impl.6} parent=31 // pred_check
        %p722 = pneg %p127
      $region42: #{_forward_impl.6} parent=31 // pred_check_branch
        %724 = sbr.rel (%p722) target = $region44
      $region43: #{_forward_impl.6} parent=31 // pred_region
        _
      $region44: #{_forward_impl.6} parent=31 // pred_fallthru
        _
    $region32: #{_forward_impl.6} parent=5 // pred_fallthru
      _
    %p725 = scmp.le.s32.totalorder 2, %s9
    // Predicated region
    $region45: #{_forward_impl.6} parent=5 // pred_check
      %p726 = pneg %p725
    $region46: #{_forward_impl.6} parent=5 // pred_check_branch
      %728 = sbr.rel (%p726) target = $region48
    $region47: #{_forward_impl.6} parent=5 // pred_region
      %s729 = ssub.s32 %s9, 2
      // Predicated region
      $region49: #{_forward_impl.6} parent=47 // pred_check
        %p730 = pneg %p133
      $region50: #{_forward_impl.6} parent=47 // pred_check_branch
        %732 = sbr.rel (%p730) target = $region52
      $region51: #{_forward_impl.6} parent=47 // pred_region
        %p733 = scmp.lt.s32.totalorder %s22, 1
        %s734 = scalar_select %p733, %s22, 1
        %p735 = scmp.lt.s32.totalorder %s23, 4
        %s736 = scalar_select %p735, %s23, 4
        %s737 = smul.addr %s734, 5
        %s738 = sadd.s32 %s736, %s737
        %s739 = smul.addr %s738, 4
        %s740 = scalar_lea.vmem %s3, %s739
      $region52: #{_forward_impl.6} parent=47 // pred_fallthru
        _
    $region48: #{_forward_impl.6} parent=5 // pred_fallthru
      _
  $region6: #{_forward_impl.6} parent=0 // loop_footer
    %s13 = sadd.s32 1, %s9
  $region7: #{_forward_impl.6} parent=0 // loop_footer_branch
    %8 = sbr.rel target = $region3
  $region8: #{_forward_impl.6} parent=0 // loop_exit
    _

// kernel: _forward_impl.7
$region0: #{_forward_impl.7}
  #allocation0 [shape = 'u32[]', space=smem, size = 0x4, offset = 0x4, fixed_abs, tag = 'smem constant byte address 0x4 - core index']
  #allocation1 [shape = 'u32[144,128]{1,0:T(1,128)}', space=vmem, size = 0x12000, scoped, tag = 'internal scratch']
  #allocation2 [shape = 'f32[3,128]{1,0:T(4,128)}', space=vmem, size = 0x800, scoped, tag = 'scratch operand']
  %s0 = inlined_call_operand.vmem [shape: bf16[2,9,2,5,128], index: 0, kind: input, shape index: {}]
  %s1 = inlined_call_operand.vmem [shape: bf16[4,4,128,128], index: 1, kind: input, shape index: {}]
  %s2 = inlined_call_operand.vmem [shape: f32[1,128], index: 2, kind: input, shape index: {}]
  %s3 = inlined_call_operand.vmem [shape: bf16[2,3,3,128], index: 3, kind: output, shape index: {}]
  %s4 = sld [smem:[#allocation0]]
  $region53: #{_forward_impl.7} parent=0
    _
  %s6 = ssub.s32 1, %s4
  %s7 = scalar_select 0, %s6, %s4
  loop: start=0, step=1, limit=26
  $region2: #{_forward_impl.7} parent=0 // loop_pre_header
    _
  $region3: #{_forward_impl.7} parent=0 // loop_header
    %s9 = sphi 0, %s13
    %p10 = scmp.ge.s32.totalorder %s9, 26
    %s16 = sphi 0, %s35
    %s17 = sphi 0, %s31
    %s18 = sphi 0, %s27
    %s19 = sphi 0, %s16
    %s20 = sphi 0, %s17
    %s21 = sphi 0, %s18
    %s22 = sphi 0, %s19
    %s23 = sphi 0, %s20
    %s24 = sphi 0, %s21
    %s44 = sphi 0, %s46
    %s47 = sphi 0, %s44
    %s48 = sphi 0, %s47
    %s64 = sphi 0, %s48
    %s68 = sphi 0, %s68
    %s70 = sphi 0, %s68
    %s71 = sphi 0, %s70
    %s85 = sphi 0, %s71
    %s89 = sphi 0, %s89
    %s91 = sphi 0, %s89
    %s92 = sphi 0, %s91
    %s106 = sphi 0, %s92
    %s114 = sphi 0, %s116
    %s117 = sphi 0, %s114
    %s118 = sphi 0, %s117
    %s134 = sphi 0, %s118
  $region4: #{_forward_impl.7} parent=0 // loop_header_branch
    %12 = sbr.rel (%p10) target = $region8
  $region5: #{_forward_impl.7} parent=0 // loop_body
    %s14 = ssub.s32 %s9, 1
    %s15 = ssub.s32 %s9, 2
    %s25 = sadd.s32 1, %s18
    %p26 = scmp.ge.s32.totalorder %s25, 4
    %s27 = scalar_select %p26, 0, %s25
    %s28 = sadd.s32 1, %s17
    %s29 = scalar_select %p26, %s28, %s17
    %p30 = scmp.ge.s32.totalorder %s29, 3
    %s31 = scalar_select %p30, 0, %s29
    %s32 = sadd.s32 1, %s16
    %s33 = scalar_select %p30, %s32, %s16
    %p34 = scmp.ge.s32.totalorder %s33, 2
    %s35 = scalar_select %p34, 0, %s33
    %s36 = smul.u32 %s17, 2
    %s37 = sadd.s32 %s36, %s18
    %s38 = smul.u32 %s31, 2
    %s39 = sadd.s32 %s38, %s27
    %s40 = ssub.s32 %s16, %s35
    %s41 = ssub.s32 %s37, %s39
    %s42 = sor.u32 %s40, %s41
    %p43 = scmp.eq.s32.totalorder %s42, 0
    %s45 = sadd.s32 %s44, 1
    %s46 = scalar_select %p43, %s44, %s45
    %p49 = pneg %p43
    %p50 = scmp.eq.s32.totalorder %s9, 23
    %p51 = por %p49, %p50
    %p52 = scmp.ne.s32.totalorder %s44, %s47
    %p53 = scmp.eq.s32.totalorder %s9, 0
    %p54 = por %p52, %p53
    %p55 = scmp.ne.s32.totalorder %s44, %s47
    %p56 = scmp.eq.s32.totalorder %s14, 23
    %p57 = por %p55, %p56
    %p58 = scmp.ne.s32.totalorder %s47, %s48
    %p59 = scmp.eq.s32.totalorder %s14, 0
    %p60 = por %p58, %p59
    %p61 = scmp.ne.s32.totalorder %s47, %s48
    %p62 = scmp.eq.s32.totalorder %s15, 23
    %p63 = por %p61, %p62
    %p65 = scmp.ne.s32.totalorder %s48, %s64
    %p66 = scmp.eq.s32.totalorder %s15, 0
    %p67 = por %p65, %p66
    %s69 = sadd.s32 %s68, 1
    %p72 = scmp.eq.s32.totalorder %s9, 23
    %p73 = scmp.ne.s32.totalorder %s68, %s70
    %p74 = scmp.eq.s32.totalorder %s9, 0
    %p75 = por %p73, %p74
    %p76 = scmp.ne.s32.totalorder %s68, %s70
    %p77 = scmp.eq.s32.totalorder %s14, 23
    %p78 = por %p76, %p77
    %p79 = scmp.ne.s32.totalorder %s70, %s71
    %p80 = scmp.eq.s32.totalorder %s14, 0
    %p81 = por %p79, %p80
    %p82 = scmp.ne.s32.totalorder %s70, %s71
    %p83 = scmp.eq.s32.totalorder %s15, 23
    %p84 = por %p82, %p83
    %p86 = scmp.ne.s32.totalorder %s71, %s85
    %p87 = scmp.eq.s32.totalorder %s15, 0
    %p88 = por %p86, %p87
    %s90 = sadd.s32 %s89, 1
    %p93 = scmp.eq.s32.totalorder %s9, 23
    %p94 = scmp.ne.s32.totalorder %s89, %s91
    %p95 = scmp.eq.s32.totalorder %s9, 0
    %p96 = por %p94, %p95
    %p97 = scmp.ne.s32.totalorder %s89, %s91
    %p98 = scmp.eq.s32.totalorder %s14, 23
    %p99 = por %p97, %p98
    %p100 = scmp.ne.s32.totalorder %s91, %s92
    %p101 = scmp.eq.s32.totalorder %s14, 0
    %p102 = por %p100, %p101
    %p103 = scmp.ne.s32.totalorder %s91, %s92
    %p104 = scmp.eq.s32.totalorder %s15, 23
    %p105 = por %p103, %p104
    %p107 = scmp.ne.s32.totalorder %s92, %s106
    %p108 = scmp.eq.s32.totalorder %s15, 0
    %p109 = por %p107, %p108
    %s110 = ssub.s32 %s16, %s35
    %s111 = ssub.s32 %s17, %s31
    %s112 = sor.u32 %s110, %s111
    %p113 = scmp.eq.s32.totalorder %s112, 0
    %s115 = sadd.s32 %s114, 1
    %s116 = scalar_select %p113, %s114, %s115
    %p119 = pneg %p113
    %p120 = scmp.eq.s32.totalorder %s9, 23
    %p121 = por %p119, %p120
    %p122 = scmp.ne.s32.totalorder %s114, %s117
    %p123 = scmp.eq.s32.totalorder %s9, 0
    %p124 = por %p122, %p123
    %p125 = scmp.ne.s32.totalorder %s114, %s117
    %p126 = scmp.eq.s32.totalorder %s14, 23
    %p127 = por %p125, %p126
    %p128 = scmp.ne.s32.totalorder %s117, %s118
    %p129 = scmp.eq.s32.totalorder %s14, 0
    %p130 = por %p128, %p129
    %p131 = scmp.ne.s32.totalorder %s117, %s118
    %p132 = scmp.eq.s32.totalorder %s15, 23
    %p133 = por %p131, %p132
    %p135 = scmp.ne.s32.totalorder %s118, %s134
    %p136 = scmp.eq.s32.totalorder %s15, 0
    %p137 = por %p135, %p136
    %p138 = scmp.le.s32.totalorder 1, %s9
    %p139 = scmp.lt.s32.totalorder %s9, 25
    %p140 = pnand %p138, %p139
    %p141 = pneg %p140
    // Predicated region
    $region9: #{_forward_impl.7} parent=5 // pred_check
      _
    $region10: #{_forward_impl.7} parent=5 // pred_check_branch
      %143 = sbr.rel (%p140) target = $region12
    $region11: #{_forward_impl.7} parent=5 // pred_region
      %s144 = ssub.s32 %s9, 1
      // Predicated region
      $region13: #{_forward_impl.7} parent=11 // pred_check
        %p145 = pneg %p81
      $region14: #{_forward_impl.7} parent=11 // pred_check_branch
        %147 = sbr.rel (%p145) target = $region16
      $region15: #{_forward_impl.7} parent=11 // pred_region
        _
      $region16: #{_forward_impl.7} parent=11 // pred_fallthru
        _
      // Predicated region
      $region17: #{_forward_impl.7} parent=11 // pred_check
        %p148 = pneg %p102
      $region18: #{_forward_impl.7} parent=11 // pred_check_branch
        %150 = sbr.rel (%p148) target = $region20
      $region19: #{_forward_impl.7} parent=11 // pred_region
        _
      $region20: #{_forward_impl.7} parent=11 // pred_fallthru
        _
    $region12: #{_forward_impl.7} parent=5 // pred_fallthru
      _
    %p151 = scmp.lt.s32.totalorder %s9, 24
    // Predicated region
    $region21: #{_forward_impl.7} parent=5 // pred_check
      %p152 = pneg %p151
    $region22: #{_forward_impl.7} parent=5 // pred_check_branch
      %154 = sbr.rel (%p152) target = $region24
    $region23: #{_forward_impl.7} parent=5 // pred_region
      // Predicated region
      $region25: #{_forward_impl.7} parent=23 // pred_check
        %p155 = pneg %p54
      $region26: #{_forward_impl.7} parent=23 // pred_check_branch
        %157 = sbr.rel (%p155) target = $region28
      $region27: #{_forward_impl.7} parent=23 // pred_region
        %s158 = smul.u32 %s17, 2
        %s159 = sadd.s32 %s158, %s18
        %p160 = scmp.lt.s32.totalorder %s16, 1
        %s161 = scalar_select %p160, %s16, 1
        %p162 = scmp.lt.s32.totalorder %s159, 8
        %s163 = scalar_select %p162, %s159, 8
        %s164 = smul.addr %s163, 2
        %s165 = smul.addr %s161, 18
        %s166 = sadd.s32 %s164, %s165
        %s167 = smul.addr %s166, 4
        %s168 = scalar_lea.vmem %s0, %s167
        %s169 = smul.u32 %s17, 2
        %s170 = sadd.s32 %s169, %s18
      $region28: #{_forward_impl.7} parent=23 // pred_fallthru
        _
    $region24: #{_forward_impl.7} parent=5 // pred_fallthru
      _
    %p171 = scmp.le.s32.totalorder 1, %s9
    %p172 = scmp.lt.s32.totalorder %s9, 25
    %p173 = pnand %p171, %p172
    %p174 = pneg %p173
    // Predicated region
    $region29: #{_forward_impl.7} parent=5 // pred_check
      _
    $region30: #{_forward_impl.7} parent=5 // pred_check_branch
      %176 = sbr.rel (%p173) target = $region32
    $region31: #{_forward_impl.7} parent=5 // pred_region
      %s177 = ssub.s32 %s9, 1
      %s178 = smul.u32 %s20, 2
      %s179 = sadd.s32 %s178, %s21
      %p180 = scmp.lt.s32.totalorder %s19, 1
      %s181 = scalar_select %p180, %s19, 1
      %p182 = scmp.lt.s32.totalorder %s179, 8
      %s183 = scalar_select %p182, %s179, 8
      %s184 = smul.addr %s183, 2
      %s185 = smul.addr %s181, 18
      %s186 = sadd.s32 %s184, %s185
      %s187 = smul.addr %s186, 4
      %s188 = scalar_lea.vmem %s0, %s187
      %p189 = pneg %p60
      %p190 = pneg %p57
      %p191 = pneg %p81
      %p192 = pneg %p78
      %p193 = pneg %p102
      %p194 = pneg %p99
      %p195 = pneg %p130
      %p196 = pneg %p127
      %p197 = scmp.lt.s32.totalorder %s19, 1
      %s198 = scalar_select %p197, %s19, 1
      %p199 = scmp.lt.s32.totalorder %s20, 2
      %s200 = scalar_select %p199, %s20, 2
      %s201 = smul.addr %s198, 3
      %s202 = sadd.s32 %s200, %s201
      %s203 = smul.addr %s202, 2
      %s204 = scalar_lea.vmem %s3, %s203
      %s205 = smul.u32 %s20, 2
      %s206 = sadd.s32 %s205, %s21
      %p207 = scmp.lt.s32.totalorder %s19, 1
      %s208 = scalar_select %p207, %s19, 1
      %p209 = scmp.lt.s32.totalorder %s206, 8
      %s210 = scalar_select %p209, %s206, 8
      %s211 = smul.addr %s210, 2
      %s212 = smul.addr %s208, 18
      %s213 = sadd.s32 %s211, %s212
      %s214 = smul.addr %s213, 4
      %s215 = scalar_lea.vmem %s0, %s214
      %s216 = smul.u32 %s20, 2
      %s217 = sadd.s32 %s216, %s21
      %p218 = scmp.lt.s32.totalorder %s19, 1
      %s219 = scalar_select %p218, %s19, 1
      %p220 = scmp.lt.s32.totalorder %s20, 2
      %s221 = scalar_select %p220, %s20, 2
      %s222 = smul.addr %s219, 3
      %s223 = sadd.s32 %s221, %s222
      %s224 = smul.addr %s223, 2
      %s225 = scalar_lea.vmem %s3, %s224
      %p227 = scmp.eq.s32.totalorder %s21, 0
      // Predicated region
      $region33: #{_forward_impl.7} parent=31 // pred_check
        %p228 = pneg %p227
      $region34: #{_forward_impl.7} parent=31 // pred_check_branch
        %230 = sbr.rel (%p228) target = $region36
      $region35: #{_forward_impl.7} parent=31 // pred_region
        %231 = vst [vmem:[#allocation2] sm:$0x7] 0.0
      $region36: #{_forward_impl.7} parent=31 // pred_fallthru
        _
      %v232 = vld [vmem:[#allocation2] sm:$0x7]
      %v233 = vld [vmem:[%s215] sm:$0x3]
      %s234 = smul.u32 %s21, 64
      %s235 = smul.addr %s234, 4
      %s236 = scalar_lea.vmem %s1, %s235
      %v237 = vld [vmem:[%s236] sm:$0xf]
      %v238 = vld [vmem:[%s236 + $0x4] sm:$0xf]
      %v239 = vld [vmem:[%s236 + $0x8] sm:$0xf]
      %v240 = vld [vmem:[%s236 + $0xc] sm:$0xf]
      %v241 = vld [vmem:[%s236 + $0x10] sm:$0xf]
      %v242 = vld [vmem:[%s236 + $0x14] sm:$0xf]
      %v243 = vld [vmem:[%s236 + $0x18] sm:$0xf]
      %v244 = vld [vmem:[%s236 + $0x1c] sm:$0xf]
      %v245 = vld [vmem:[%s236 + $0x20] sm:$0xf]
      %v246 = vld [vmem:[%s236 + $0x24] sm:$0xf]
      %v247 = vld [vmem:[%s236 + $0x28] sm:$0xf]
      %v248 = vld [vmem:[%s236 + $0x2c] sm:$0xf]
      %v249 = vld [vmem:[%s236 + $0x30] sm:$0xf]
      %v250 = vld [vmem:[%s236 + $0x34] sm:$0xf]
      %v251 = vld [vmem:[%s236 + $0x38] sm:$0xf]
      %v252 = vld [vmem:[%s236 + $0x3c] sm:$0xf]
      %v269 = vunpack.c.l.b16 %v237
      %v270 = vunpack.c.l.b16 %v238
      %v271 = vunpack.c.l.b16 %v239
      %v272 = vunpack.c.l.b16 %v240
      %v273 = vunpack.c.l.b16 %v241
      %v274 = vunpack.c.l.b16 %v242
      %v275 = vunpack.c.l.b16 %v243
      %v276 = vunpack.c.l.b16 %v244
      %v277 = vunpack.c.l.b16 %v245
      %v278 = vunpack.c.l.b16 %v246
      %v279 = vunpack.c.l.b16 %v247
      %v280 = vunpack.c.l.b16 %v248
      %v281 = vunpack.c.l.b16 %v249
      %v282 = vunpack.c.l.b16 %v250
      %v283 = vunpack.c.l.b16 %v251
      %v284 = vunpack.c.l.b16 %v252
      %v285 = vpack.c.b16 %v270, %v269
      %v286 = vpack.c.b16 %v272, %v271
      %v287 = vpack.c.b16 %v274, %v273
      %v288 = vpack.c.b16 %v276, %v275
      %v289 = vpack.c.b16 %v278, %v277
      %v290 = vpack.c.b16 %v280, %v279
      %v291 = vpack.c.b16 %v282, %v281
      %v292 = vpack.c.b16 %v284, %v283
      %301 = vmatprep.subr.bf16.mxu0 0
      %302 = vmatpush1.bf16.msra.mxu0 %v292
      %303 = vmatprep.subr.bf16.mxu0 0
      %304 = vmatpush1.bf16.msra.mxu0 %v291
      %305 = vmatprep.subr.bf16.mxu0 0
      %306 = vmatpush1.bf16.msra.mxu0 %v290
      %307 = vmatprep.subr.bf16.mxu0 0
      %308 = vmatpush1.bf16.msra.mxu0 %v289
      %309 = vmatprep.subr.bf16.mxu0 0
      %310 = vmatpush1.bf16.msra.mxu0 %v288
      %311 = vmatprep.subr.bf16.mxu0 0
      %312 = vmatpush1.bf16.msra.mxu0 %v287
      %313 = vmatprep.subr.bf16.mxu0 0
      %314 = vmatpush1.bf16.msra.mxu0 %v286
      %315 = vmatprep.subr.bf16.mxu0 0
      %316 = vmatpush1.bf16.msra.mxu0 %v285
      %317 = vmatprep.subr.bf16.mxu0 0
      %318 = vmatpush2.bf16.msra.mxu0 0
      %319 = vmatprep.subr.bf16.mxu0 0
      %320 = vmatpush2.bf16.msra.mxu0 0
      %321 = vmatprep.subr.bf16.mxu0 0
      %322 = vmatpush2.bf16.msra.mxu0 0
      %323 = vmatprep.subr.bf16.mxu0 0
      %324 = vmatpush2.bf16.msra.mxu0 0
      %325 = vmatprep.subr.bf16.mxu0 0
      %326 = vmatpush2.bf16.msra.mxu0 0
      %327 = vmatprep.subr.bf16.mxu0 0
      %328 = vmatpush2.bf16.msra.mxu0 0
      %329 = vmatprep.subr.bf16.mxu0 0
      %330 = vmatpush2.bf16.msra.mxu0 0
      %331 = vmatprep.subr.bf16.mxu0 0
      %332 = vmatpush2.bf16.msra.mxu0 0
      %333 = vmatprep.mubr.bf16.mxu0 0
      %334 = vmatmul.mubr.bf16.gmra.mxu0 %v233
      %v335 = vpop.f32.mrf.mxu0
      %v336 = vadd.f32 0.0, %v335
      %v337 = vpop.f32.mrf.mxu0
      %v338 = vpop.f32.mrf.mxu0
      %v339 = vpop.f32.mrf.mxu0
      %340 = vdwg.mxu0
      %v341 = vadd.f32 %v232, %v336
      %s342 = scalar_lea.vmem %s215, 4
      %v343 = vld [vmem:[%s342] sm:$0x3]
      %s344 = sadd.s32 16, %s234
      %s345 = smul.addr %s344, 4
      %s346 = scalar_lea.vmem %s1, %s345
      %v347 = vld [vmem:[%s346] sm:$0xf]
      %v348 = vld [vmem:[%s346 + $0x4] sm:$0xf]
      %v349 = vld [vmem:[%s346 + $0x8] sm:$0xf]
      %v350 = vld [vmem:[%s346 + $0xc] sm:$0xf]
      %v351 = vld [vmem:[%s346 + $0x10] sm:$0xf]
      %v352 = vld [vmem:[%s346 + $0x14] sm:$0xf]
      %v353 = vld [vmem:[%s346 + $0x18] sm:$0xf]
      %v354 = vld [vmem:[%s346 + $0x1c] sm:$0xf]
      %v355 = vld [vmem:[%s346 + $0x20] sm:$0xf]
      %v356 = vld [vmem:[%s346 + $0x24] sm:$0xf]
      %v357 = vld [vmem:[%s346 + $0x28] sm:$0xf]
      %v358 = vld [vmem:[%s346 + $0x2c] sm:$0xf]
      %v359 = vld [vmem:[%s346 + $0x30] sm:$0xf]
      %v360 = vld [vmem:[%s346 + $0x34] sm:$0xf]
      %v361 = vld [vmem:[%s346 + $0x38] sm:$0xf]
      %v362 = vld [vmem:[%s346 + $0x3c] sm:$0xf]
      %v379 = vunpack.c.l.b16 %v347
      %v380 = vunpack.c.l.b16 %v348
      %v381 = vunpack.c.l.b16 %v349
      %v382 = vunpack.c.l.b16 %v350
      %v383 = vunpack.c.l.b16 %v351
      %v384 = vunpack.c.l.b16 %v352
      %v385 = vunpack.c.l.b16 %v353
      %v386 = vunpack.c.l.b16 %v354
      %v387 = vunpack.c.l.b16 %v355
      %v388 = vunpack.c.l.b16 %v356
      %v389 = vunpack.c.l.b16 %v357
      %v390 = vunpack.c.l.b16 %v358
      %v391 = vunpack.c.l.b16 %v359
      %v392 = vunpack.c.l.b16 %v360
      %v393 = vunpack.c.l.b16 %v361
      %v394 = vunpack.c.l.b16 %v362
      %v395 = vpack.c.b16 %v380, %v379
      %v396 = vpack.c.b16 %v382, %v381
      %v397 = vpack.c.b16 %v384, %v383
      %v398 = vpack.c.b16 %v386, %v385
      %v399 = vpack.c.b16 %v388, %v387
      %v400 = vpack.c.b16 %v390, %v389
      %v401 = vpack.c.b16 %v392, %v391
      %v402 = vpack.c.b16 %v394, %v393
      %411 = vmatprep.subr.bf16.mxu0 0
      %412 = vmatpush1.bf16.msra.mxu0 %v402
      %413 = vmatprep.subr.bf16.mxu0 0
      %414 = vmatpush1.bf16.msra.mxu0 %v401
      %415 = vmatprep.subr.bf16.mxu0 0
      %416 = vmatpush1.bf16.msra.mxu0 %v400
      %417 = vmatprep.subr.bf16.mxu0 0
      %418 = vmatpush1.bf16.msra.mxu0 %v399
      %419 = vmatprep.subr.bf16.mxu0 0
      %420 = vmatpush1.bf16.msra.mxu0 %v398
      %421 = vmatprep.subr.bf16.mxu0 0
      %422 = vmatpush1.bf16.msra.mxu0 %v397
      %423 = vmatprep.subr.bf16.mxu0 0
      %424 = vmatpush1.bf16.msra.mxu0 %v396
      %425 = vmatprep.subr.bf16.mxu0 0
      %426 = vmatpush1.bf16.msra.mxu0 %v395
      %427 = vmatprep.subr.bf16.mxu0 0
      %428 = vmatpush2.bf16.msra.mxu0 0
      %429 = vmatprep.subr.bf16.mxu0 0
      %430 = vmatpush2.bf16.msra.mxu0 0
      %431 = vmatprep.subr.bf16.mxu0 0
      %432 = vmatpush2.bf16.msra.mxu0 0
      %433 = vmatprep.subr.bf16.mxu0 0
      %434 = vmatpush2.bf16.msra.mxu0 0
      %435 = vmatprep.subr.bf16.mxu0 0
      %436 = vmatpush2.bf16.msra.mxu0 0
      %437 = vmatprep.subr.bf16.mxu0 0
      %438 = vmatpush2.bf16.msra.mxu0 0
      %439 = vmatprep.subr.bf16.mxu0 0
      %440 = vmatpush2.bf16.msra.mxu0 0
      %441 = vmatprep.subr.bf16.mxu0 0
      %442 = vmatpush2.bf16.msra.mxu0 0
      %443 = vmatprep.mubr.bf16.mxu0 0
      %444 = vmatmul.mubr.bf16.gmra.mxu0 %v343
      %v445 = vpop.f32.mrf.mxu0
      %v446 = vadd.f32 0.0, %v445
      %v447 = vpop.f32.mrf.mxu0
      %v448 = vpop.f32.mrf.mxu0
      %v449 = vpop.f32.mrf.mxu0
      %450 = vdwg.mxu0
      %v451 = vadd.f32 %v341, %v446
      %s452 = sadd.s32 32, %s234
      %s453 = smul.addr %s452, 4
      %s454 = scalar_lea.vmem %s1, %s453
      %v455 = vld [vmem:[%s454] sm:$0xf]
      %v456 = vld [vmem:[%s454 + $0x4] sm:$0xf]
      %v457 = vld [vmem:[%s454 + $0x8] sm:$0xf]
      %v458 = vld [vmem:[%s454 + $0xc] sm:$0xf]
      %v459 = vld [vmem:[%s454 + $0x10] sm:$0xf]
      %v460 = vld [vmem:[%s454 + $0x14] sm:$0xf]
      %v461 = vld [vmem:[%s454 + $0x18] sm:$0xf]
      %v462 = vld [vmem:[%s454 + $0x1c] sm:$0xf]
      %v463 = vld [vmem:[%s454 + $0x20] sm:$0xf]
      %v464 = vld [vmem:[%s454 + $0x24] sm:$0xf]
      %v465 = vld [vmem:[%s454 + $0x28] sm:$0xf]
      %v466 = vld [vmem:[%s454 + $0x2c] sm:$0xf]
      %v467 = vld [vmem:[%s454 + $0x30] sm:$0xf]
      %v468 = vld [vmem:[%s454 + $0x34] sm:$0xf]
      %v469 = vld [vmem:[%s454 + $0x38] sm:$0xf]
      %v470 = vld [vmem:[%s454 + $0x3c] sm:$0xf]
      %v472 = vunpack.c.l.b16 %v233
      %v473 = vpack.c.b16 %v472, %v472
      %v475 = vshrl.u32 %v473, 16
      %v477 = vshll.u32 %v473, 16
      %v479 = vrot.slane %v477, 1
      %v480 = vor.u32 %v475, %v479
      %v498 = vunpack.c.l.b16 %v455
      %v499 = vunpack.c.l.b16 %v456
      %v500 = vunpack.c.l.b16 %v457
      %v501 = vunpack.c.l.b16 %v458
      %v502 = vunpack.c.l.b16 %v459
      %v503 = vunpack.c.l.b16 %v460
      %v504 = vunpack.c.l.b16 %v461
      %v505 = vunpack.c.l.b16 %v462
      %v506 = vunpack.c.l.b16 %v463
      %v507 = vunpack.c.l.b16 %v464
      %v508 = vunpack.c.l.b16 %v465
      %v509 = vunpack.c.l.b16 %v466
      %v510 = vunpack.c.l.b16 %v467
      %v511 = vunpack.c.l.b16 %v468
      %v512 = vunpack.c.l.b16 %v469
      %v513 = vunpack.c.l.b16 %v470
      %v514 = vpack.c.b16 %v499, %v498
      %v515 = vpack.c.b16 %v501, %v500
      %v516 = vpack.c.b16 %v503, %v502
      %v517 = vpack.c.b16 %v505, %v504
      %v518 = vpack.c.b16 %v507, %v506
      %v519 = vpack.c.b16 %v509, %v508
      %v520 = vpack.c.b16 %v511, %v510
      %v521 = vpack.c.b16 %v513, %v512
      %530 = vmatprep.subr.bf16.mxu0 0
      %531 = vmatpush1.bf16.msra.mxu0 %v521
      %532 = vmatprep.subr.bf16.mxu0 0
      %533 = vmatpush1.bf16.msra.mxu0 %v520
      %534 = vmatprep.subr.bf16.mxu0 0
      %535 = vmatpush1.bf16.msra.mxu0 %v519
      %536 = vmatprep.subr.bf16.mxu0 0
      %537 = vmatpush1.bf16.msra.mxu0 %v518
      %538 = vmatprep.subr.bf16.mxu0 0
      %539 = vmatpush1.bf16.msra.mxu0 %v517
      %540 = vmatprep.subr.bf16.mxu0 0
      %541 = vmatpush1.bf16.msra.mxu0 %v516
      %542 = vmatprep.subr.bf16.mxu0 0
      %543 = vmatpush1.bf16.msra.mxu0 %v515
      %544 = vmatprep.subr.bf16.mxu0 0
      %545 = vmatpush1.bf16.msra.mxu0 %v514
      %546 = vmatprep.subr.bf16.mxu0 0
      %547 = vmatpush2.bf16.msra.mxu0 0
      %548 = vmatprep.subr.bf16.mxu0 0
      %549 = vmatpush2.bf16.msra.mxu0 0
      %550 = vmatprep.subr.bf16.mxu0 0
      %551 = vmatpush2.bf16.msra.mxu0 0
      %552 = vmatprep.subr.bf16.mxu0 0
      %553 = vmatpush2.bf16.msra.mxu0 0
      %554 = vmatprep.subr.bf16.mxu0 0
      %555 = vmatpush2.bf16.msra.mxu0 0
      %556 = vmatprep.subr.bf16.mxu0 0
      %557 = vmatpush2.bf16.msra.mxu0 0
      %558 = vmatprep.subr.bf16.mxu0 0
      %559 = vmatpush2.bf16.msra.mxu0 0
      %560 = vmatprep.subr.bf16.mxu0 0
      %561 = vmatpush2.bf16.msra.mxu0 0
      %562 = vmatprep.mubr.bf16.mxu0 0
      %563 = vmatmul.mubr.bf16.gmra.mxu0 %v480
      %v564 = vpop.f32.mrf.mxu0
      %v565 = vadd.f32 0.0, %v564
      %v566 = vpop.f32.mrf.mxu0
      %v567 = vpop.f32.mrf.mxu0
      %v568 = vpop.f32.mrf.mxu0
      %569 = vdwg.mxu0
      %v570 = vadd.f32 %v451, %v565
      %s571 = sadd.s32 48, %s234
      %s572 = smul.addr %s571, 4
      %s573 = scalar_lea.vmem %s1, %s572
      %v574 = vld [vmem:[%s573] sm:$0xf]
      %v575 = vld [vmem:[%s573 + $0x4] sm:$0xf]
      %v576 = vld [vmem:[%s573 + $0x8] sm:$0xf]
      %v577 = vld [vmem:[%s573 + $0xc] sm:$0xf]
      %v578 = vld [vmem:[%s573 + $0x10] sm:$0xf]
      %v579 = vld [vmem:[%s573 + $0x14] sm:$0xf]
      %v580 = vld [vmem:[%s573 + $0x18] sm:$0xf]
      %v581 = vld [vmem:[%s573 + $0x1c] sm:$0xf]
      %v582 = vld [vmem:[%s573 + $0x20] sm:$0xf]
      %v583 = vld [vmem:[%s573 + $0x24] sm:$0xf]
      %v584 = vld [vmem:[%s573 + $0x28] sm:$0xf]
      %v585 = vld [vmem:[%s573 + $0x2c] sm:$0xf]
      %v586 = vld [vmem:[%s573 + $0x30] sm:$0xf]
      %v587 = vld [vmem:[%s573 + $0x34] sm:$0xf]
      %v588 = vld [vmem:[%s573 + $0x38] sm:$0xf]
      %v589 = vld [vmem:[%s573 + $0x3c] sm:$0xf]
      %v591 = vunpack.c.l.b16 %v343
      %v592 = vpack.c.b16 %v591, %v591
      %v594 = vshrl.u32 %v592, 16
      %v596 = vshll.u32 %v592, 16
      %v598 = vrot.slane %v596, 1
      %v599 = vor.u32 %v594, %v598
      %v617 = vunpack.c.l.b16 %v574
      %v618 = vunpack.c.l.b16 %v575
      %v619 = vunpack.c.l.b16 %v576
      %v620 = vunpack.c.l.b16 %v577
      %v621 = vunpack.c.l.b16 %v578
      %v622 = vunpack.c.l.b16 %v579
      %v623 = vunpack.c.l.b16 %v580
      %v624 = vunpack.c.l.b16 %v581
      %v625 = vunpack.c.l.b16 %v582
      %v626 = vunpack.c.l.b16 %v583
      %v627 = vunpack.c.l.b16 %v584
      %v628 = vunpack.c.l.b16 %v585
      %v629 = vunpack.c.l.b16 %v586
      %v630 = vunpack.c.l.b16 %v587
      %v631 = vunpack.c.l.b16 %v588
      %v632 = vunpack.c.l.b16 %v589
      %v633 = vpack.c.b16 %v618, %v617
      %v634 = vpack.c.b16 %v620, %v619
      %v635 = vpack.c.b16 %v622, %v621
      %v636 = vpack.c.b16 %v624, %v623
      %v637 = vpack.c.b16 %v626, %v625
      %v638 = vpack.c.b16 %v628, %v627
      %v639 = vpack.c.b16 %v630, %v629
      %v640 = vpack.c.b16 %v632, %v631
      %649 = vmatprep.subr.bf16.mxu0 0
      %650 = vmatpush1.bf16.msra.mxu0 %v640
      %651 = vmatprep.subr.bf16.mxu0 0
      %652 = vmatpush1.bf16.msra.mxu0 %v639
      %653 = vmatprep.subr.bf16.mxu0 0
      %654 = vmatpush1.bf16.msra.mxu0 %v638
      %655 = vmatprep.subr.bf16.mxu0 0
      %656 = vmatpush1.bf16.msra.mxu0 %v637
      %657 = vmatprep.subr.bf16.mxu0 0
      %658 = vmatpush1.bf16.msra.mxu0 %v636
      %659 = vmatprep.subr.bf16.mxu0 0
      %660 = vmatpush1.bf16.msra.mxu0 %v635
      %661 = vmatprep.subr.bf16.mxu0 0
      %662 = vmatpush1.bf16.msra.mxu0 %v634
      %663 = vmatprep.subr.bf16.mxu0 0
      %664 = vmatpush1.bf16.msra.mxu0 %v633
      %665 = vmatprep.subr.bf16.mxu0 0
      %666 = vmatpush2.bf16.msra.mxu0 0
      %667 = vmatprep.subr.bf16.mxu0 0
      %668 = vmatpush2.bf16.msra.mxu0 0
      %669 = vmatprep.subr.bf16.mxu0 0
      %670 = vmatpush2.bf16.msra.mxu0 0
      %671 = vmatprep.subr.bf16.mxu0 0
      %672 = vmatpush2.bf16.msra.mxu0 0
      %673 = vmatprep.subr.bf16.mxu0 0
      %674 = vmatpush2.bf16.msra.mxu0 0
      %675 = vmatprep.subr.bf16.mxu0 0
      %676 = vmatpush2.bf16.msra.mxu0 0
      %677 = vmatprep.subr.bf16.mxu0 0
      %678 = vmatpush2.bf16.msra.mxu0 0
      %679 = vmatprep.subr.bf16.mxu0 0
      %680 = vmatpush2.bf16.msra.mxu0 0
      %681 = vmatprep.mubr.bf16.mxu0 0
      %682 = vmatmul.mubr.bf16.gmra.mxu0 %v599
      %v683 = vpop.f32.mrf.mxu0
      %v684 = vadd.f32 0.0, %v683
      %v685 = vpop.f32.mrf.mxu0
      %v686 = vpop.f32.mrf.mxu0
      %v687 = vpop.f32.mrf.mxu0
      %688 = vdwg.mxu0
      %v689 = vadd.f32 %v570, %v684
      %690 = vst [vmem:[#allocation2] sm:$0x7] %v689
      %p691 = scmp.eq.s32.totalorder %s21, 3
      // Predicated region
      $region37: #{_forward_impl.7} parent=31 // pred_check
        %p692 = pneg %p691
      $region38: #{_forward_impl.7} parent=31 // pred_check_branch
        %694 = sbr.rel (%p692) target = $region40
      $region39: #{_forward_impl.7} parent=31 // pred_region
        %v695 = vld [vmem:[#allocation2] sm:$0x7]
        %v696 = vld [vmem:[%s2] sm:$0x1]
        %v698 = vlaneseq
        %v699 = vshrl.u32 %v698, 7
        %v700 = vsub.s32 0, %v699
        %v701 = vrot.slane %v696, %v700
        %v703 = vadd.f32 %v695, %v701
        %vm704 = vcmp.gt.f32.partialorder %v703, 0.0
        %v705 = vmul.f32 %v703, 0.2
        %v706 = vsel %vm704, %v703, %v705
        %v707 = vpack.c.bf16 %v706, %v706
        %vm708 = vcmask 1041408
        %vm709 = vsmask.f32 1280
        %vm710 = vmand %vm708, %vm709
        %v711 = vld [vmem:[%s225] sm:$0x3]
        %v712 = vsel %vm710, %v707, %v711
        %713 = vst [vmem:[%s225] sm:$0x3] %v712
      $region40: #{_forward_impl.7} parent=31 // pred_fallthru
        _
      %p714 = scmp.lt.s32.totalorder %s19, 1
      %s715 = scalar_select %p714, %s19, 1
      %p716 = scmp.lt.s32.totalorder %s20, 2
      %s717 = scalar_select %p716, %s20, 2
      %s718 = smul.addr %s715, 3
      %s719 = sadd.s32 %s717, %s718
      %s720 = smul.addr %s719, 2
      %s721 = scalar_lea.vmem %s3, %s720
      // Predicated region
      $region41: #{_forward_impl.7} parent=31 // pred_check
        %p722 = pneg %p127
      $region42: #{_forward_impl.7} parent=31 // pred_check_branch
        %724 = sbr.rel (%p722) target = $region44
      $region43: #{_forward_impl.7} parent=31 // pred_region
        _
      $region44: #{_forward_impl.7} parent=31 // pred_fallthru
        _
    $region32: #{_forward_impl.7} parent=5 // pred_fallthru
      _
    %p725 = scmp.le.s32.totalorder 2, %s9
    // Predicated region
    $region45: #{_forward_impl.7} parent=5 // pred_check
      %p726 = pneg %p725
    $region46: #{_forward_impl.7} parent=5 // pred_check_branch
      %728 = sbr.rel (%p726) target = $region48
    $region47: #{_forward_impl.7} parent=5 // pred_region
      %s729 = ssub.s32 %s9, 2
      // Predicated region
      $region49: #{_forward_impl.7} parent=47 // pred_check
        %p730 = pneg %p133
      $region50: #{_forward_impl.7} parent=47 // pred_check_branch
        %732 = sbr.rel (%p730) target = $region52
      $region51: #{_forward_impl.7} parent=47 // pred_region
        %p733 = scmp.lt.s32.totalorder %s22, 1
        %s734 = scalar_select %p733, %s22, 1
        %p735 = scmp.lt.s32.totalorder %s23, 2
        %s736 = scalar_select %p735, %s23, 2
        %s737 = smul.addr %s734, 3
        %s738 = sadd.s32 %s736, %s737
        %s739 = smul.addr %s738, 2
        %s740 = scalar_lea.vmem %s3, %s739
      $region52: #{_forward_impl.7} parent=47 // pred_fallthru
        _
    $region48: #{_forward_impl.7} parent=5 // pred_fallthru
      _
  $region6: #{_forward_impl.7} parent=0 // loop_footer
    %s13 = sadd.s32 1, %s9
  $region7: #{_forward_impl.7} parent=0 // loop_footer_branch
    %8 = sbr.rel target = $region3
  $region8: #{_forward_impl.7} parent=0 // loop_exit
    _

// kernel: _forward_impl.8
$region0: #{_forward_impl.8}
  #allocation0 [shape = 'u32[]', space=smem, size = 0x4, offset = 0x4, fixed_abs, tag = 'smem constant byte address 0x4 - core index']
  #allocation1 [shape = 'u32[144,128]{1,0:T(1,128)}', space=vmem, size = 0x12000, scoped, tag = 'internal scratch']
  #allocation2 [shape = 'f32[4,128]{1,0:T(4,128)}', space=vmem, size = 0x800, scoped, tag = 'scratch operand']
  %s0 = inlined_call_operand.vmem [shape: bf16[2,7,1,7,128], index: 0, kind: input, shape index: {}]
  %s1 = inlined_call_operand.vmem [shape: bf16[4,4,128,128], index: 1, kind: input, shape index: {}]
  %s2 = inlined_call_operand.vmem [shape: f32[1,128], index: 2, kind: input, shape index: {}]
  %s3 = inlined_call_operand.vmem [shape: bf16[2,4,4,128], index: 3, kind: output, shape index: {}]
  %s4 = sld [smem:[#allocation0]]
  $region53: #{_forward_impl.8} parent=0
    _
  %s6 = ssub.s32 1, %s4
  %s7 = scalar_select 0, %s6, %s4
  loop: start=0, step=1, limit=34
  $region2: #{_forward_impl.8} parent=0 // loop_pre_header
    _
  $region3: #{_forward_impl.8} parent=0 // loop_header
    %s9 = sphi 0, %s13
    %p10 = scmp.ge.s32.totalorder %s9, 34
    %s16 = sphi 0, %s35
    %s17 = sphi 0, %s31
    %s18 = sphi 0, %s27
    %s19 = sphi 0, %s16
    %s20 = sphi 0, %s17
    %s21 = sphi 0, %s18
    %s22 = sphi 0, %s19
    %s23 = sphi 0, %s20
    %s24 = sphi 0, %s21
    %s42 = sphi 0, %s44
    %s45 = sphi 0, %s42
    %s46 = sphi 0, %s45
    %s62 = sphi 0, %s46
    %s66 = sphi 0, %s66
    %s68 = sphi 0, %s66
    %s69 = sphi 0, %s68
    %s83 = sphi 0, %s69
    %s87 = sphi 0, %s87
    %s89 = sphi 0, %s87
    %s90 = sphi 0, %s89
    %s104 = sphi 0, %s90
    %s112 = sphi 0, %s114
    %s115 = sphi 0, %s112
    %s116 = sphi 0, %s115
    %s132 = sphi 0, %s116
  $region4: #{_forward_impl.8} parent=0 // loop_header_branch
    %12 = sbr.rel (%p10) target = $region8
  $region5: #{_forward_impl.8} parent=0 // loop_body
    %s14 = ssub.s32 %s9, 1
    %s15 = ssub.s32 %s9, 2
    %s25 = sadd.s32 1, %s18
    %p26 = scmp.ge.s32.totalorder %s25, 4
    %s27 = scalar_select %p26, 0, %s25
    %s28 = sadd.s32 1, %s17
    %s29 = scalar_select %p26, %s28, %s17
    %p30 = scmp.ge.s32.totalorder %s29, 4
    %s31 = scalar_select %p30, 0, %s29
    %s32 = sadd.s32 1, %s16
    %s33 = scalar_select %p30, %s32, %s16
    %p34 = scmp.ge.s32.totalorder %s33, 2
    %s35 = scalar_select %p34, 0, %s33
    %s36 = sadd.s32 %s17, %s18
    %s37 = sadd.s32 %s31, %s27
    %s38 = ssub.s32 %s16, %s35
    %s39 = ssub.s32 %s36, %s37
    %s40 = sor.u32 %s38, %s39
    %p41 = scmp.eq.s32.totalorder %s40, 0
    %s43 = sadd.s32 %s42, 1
    %s44 = scalar_select %p41, %s42, %s43
    %p47 = pneg %p41
    %p48 = scmp.eq.s32.totalorder %s9, 31
    %p49 = por %p47, %p48
    %p50 = scmp.ne.s32.totalorder %s42, %s45
    %p51 = scmp.eq.s32.totalorder %s9, 0
    %p52 = por %p50, %p51
    %p53 = scmp.ne.s32.totalorder %s42, %s45
    %p54 = scmp.eq.s32.totalorder %s14, 31
    %p55 = por %p53, %p54
    %p56 = scmp.ne.s32.totalorder %s45, %s46
    %p57 = scmp.eq.s32.totalorder %s14, 0
    %p58 = por %p56, %p57
    %p59 = scmp.ne.s32.totalorder %s45, %s46
    %p60 = scmp.eq.s32.totalorder %s15, 31
    %p61 = por %p59, %p60
    %p63 = scmp.ne.s32.totalorder %s46, %s62
    %p64 = scmp.eq.s32.totalorder %s15, 0
    %p65 = por %p63, %p64
    %s67 = sadd.s32 %s66, 1
    %p70 = scmp.eq.s32.totalorder %s9, 31
    %p71 = scmp.ne.s32.totalorder %s66, %s68
    %p72 = scmp.eq.s32.totalorder %s9, 0
    %p73 = por %p71, %p72
    %p74 = scmp.ne.s32.totalorder %s66, %s68
    %p75 = scmp.eq.s32.totalorder %s14, 31
    %p76 = por %p74, %p75
    %p77 = scmp.ne.s32.totalorder %s68, %s69
    %p78 = scmp.eq.s32.totalorder %s14, 0
    %p79 = por %p77, %p78
    %p80 = scmp.ne.s32.totalorder %s68, %s69
    %p81 = scmp.eq.s32.totalorder %s15, 31
    %p82 = por %p80, %p81
    %p84 = scmp.ne.s32.totalorder %s69, %s83
    %p85 = scmp.eq.s32.totalorder %s15, 0
    %p86 = por %p84, %p85
    %s88 = sadd.s32 %s87, 1
    %p91 = scmp.eq.s32.totalorder %s9, 31
    %p92 = scmp.ne.s32.totalorder %s87, %s89
    %p93 = scmp.eq.s32.totalorder %s9, 0
    %p94 = por %p92, %p93
    %p95 = scmp.ne.s32.totalorder %s87, %s89
    %p96 = scmp.eq.s32.totalorder %s14, 31
    %p97 = por %p95, %p96
    %p98 = scmp.ne.s32.totalorder %s89, %s90
    %p99 = scmp.eq.s32.totalorder %s14, 0
    %p100 = por %p98, %p99
    %p101 = scmp.ne.s32.totalorder %s89, %s90
    %p102 = scmp.eq.s32.totalorder %s15, 31
    %p103 = por %p101, %p102
    %p105 = scmp.ne.s32.totalorder %s90, %s104
    %p106 = scmp.eq.s32.totalorder %s15, 0
    %p107 = por %p105, %p106
    %s108 = ssub.s32 %s16, %s35
    %s109 = ssub.s32 %s17, %s31
    %s110 = sor.u32 %s108, %s109
    %p111 = scmp.eq.s32.totalorder %s110, 0
    %s113 = sadd.s32 %s112, 1
    %s114 = scalar_select %p111, %s112, %s113
    %p117 = pneg %p111
    %p118 = scmp.eq.s32.totalorder %s9, 31
    %p119 = por %p117, %p118
    %p120 = scmp.ne.s32.totalorder %s112, %s115
    %p121 = scmp.eq.s32.totalorder %s9, 0
    %p122 = por %p120, %p121
    %p123 = scmp.ne.s32.totalorder %s112, %s115
    %p124 = scmp.eq.s32.totalorder %s14, 31
    %p125 = por %p123, %p124
    %p126 = scmp.ne.s32.totalorder %s115, %s116
    %p127 = scmp.eq.s32.totalorder %s14, 0
    %p128 = por %p126, %p127
    %p129 = scmp.ne.s32.totalorder %s115, %s116
    %p130 = scmp.eq.s32.totalorder %s15, 31
    %p131 = por %p129, %p130
    %p133 = scmp.ne.s32.totalorder %s116, %s132
    %p134 = scmp.eq.s32.totalorder %s15, 0
    %p135 = por %p133, %p134
    %p136 = scmp.le.s32.totalorder 1, %s9
    %p137 = scmp.lt.s32.totalorder %s9, 33
    %p138 = pnand %p136, %p137
    %p139 = pneg %p138
    // Predicated region
    $region9: #{_forward_impl.8} parent=5 // pred_check
      _
    $region10: #{_forward_impl.8} parent=5 // pred_check_branch
      %141 = sbr.rel (%p138) target = $region12
    $region11: #{_forward_impl.8} parent=5 // pred_region
      %s142 = ssub.s32 %s9, 1
      // Predicated region
      $region13: #{_forward_impl.8} parent=11 // pred_check
        %p143 = pneg %p79
      $region14: #{_forward_impl.8} parent=11 // pred_check_branch
        %145 = sbr.rel (%p143) target = $region16
      $region15: #{_forward_impl.8} parent=11 // pred_region
        _
      $region16: #{_forward_impl.8} parent=11 // pred_fallthru
        _
      // Predicated region
      $region17: #{_forward_impl.8} parent=11 // pred_check
        %p146 = pneg %p100
      $region18: #{_forward_impl.8} parent=11 // pred_check_branch
        %148 = sbr.rel (%p146) target = $region20
      $region19: #{_forward_impl.8} parent=11 // pred_region
        _
      $region20: #{_forward_impl.8} parent=11 // pred_fallthru
        _
    $region12: #{_forward_impl.8} parent=5 // pred_fallthru
      _
    %p149 = scmp.lt.s32.totalorder %s9, 32
    // Predicated region
    $region21: #{_forward_impl.8} parent=5 // pred_check
      %p150 = pneg %p149
    $region22: #{_forward_impl.8} parent=5 // pred_check_branch
      %152 = sbr.rel (%p150) target = $region24
    $region23: #{_forward_impl.8} parent=5 // pred_region
      // Predicated region
      $region25: #{_forward_impl.8} parent=23 // pred_check
        %p153 = pneg %p52
      $region26: #{_forward_impl.8} parent=23 // pred_check_branch
        %155 = sbr.rel (%p153) target = $region28
      $region27: #{_forward_impl.8} parent=23 // pred_region
        %s156 = sadd.s32 %s17, %s18
        %p157 = scmp.lt.s32.totalorder %s16, 1
        %s158 = scalar_select %p157, %s16, 1
        %p159 = scmp.lt.s32.totalorder %s156, 6
        %s160 = scalar_select %p159, %s156, 6
        %s161 = smul.addr %s158, 7
        %s162 = sadd.s32 %s160, %s161
        %s163 = smul.addr %s162, 4
        %s164 = scalar_lea.vmem %s0, %s163
        %s165 = sadd.s32 %s17, %s18
      $region28: #{_forward_impl.8} parent=23 // pred_fallthru
        _
    $region24: #{_forward_impl.8} parent=5 // pred_fallthru
      _
    %p166 = scmp.le.s32.totalorder 1, %s9
    %p167 = scmp.lt.s32.totalorder %s9, 33
    %p168 = pnand %p166, %p167
    %p169 = pneg %p168
    // Predicated region
    $region29: #{_forward_impl.8} parent=5 // pred_check
      _
    $region30: #{_forward_impl.8} parent=5 // pred_check_branch
      %171 = sbr.rel (%p168) target = $region32
    $region31: #{_forward_impl.8} parent=5 // pred_region
      %s172 = ssub.s32 %s9, 1
      %s173 = sadd.s32 %s20, %s21
      %p174 = scmp.lt.s32.totalorder %s19, 1
      %s175 = scalar_select %p174, %s19, 1
      %p176 = scmp.lt.s32.totalorder %s173, 6
      %s177 = scalar_select %p176, %s173, 6
      %s178 = smul.addr %s175, 7
      %s179 = sadd.s32 %s177, %s178
      %s180 = smul.addr %s179, 4
      %s181 = scalar_lea.vmem %s0, %s180
      %p182 = pneg %p58
      %p183 = pneg %p55
      %p184 = pneg %p79
      %p185 = pneg %p76
      %p186 = pneg %p100
      %p187 = pneg %p97
      %p188 = pneg %p128
      %p189 = pneg %p125
      %p190 = scmp.lt.s32.totalorder %s19, 1
      %s191 = scalar_select %p190, %s19, 1
      %p192 = scmp.lt.s32.totalorder %s20, 3
      %s193 = scalar_select %p192, %s20, 3
      %s194 = smul.addr %s191, 4
      %s195 = sadd.s32 %s193, %s194
      %s196 = smul.addr %s195, 2
      %s197 = scalar_lea.vmem %s3, %s196
      %s198 = sadd.s32 %s20, %s21
      %p199 = scmp.lt.s32.totalorder %s19, 1
      %s200 = scalar_select %p199, %s19, 1
      %p201 = scmp.lt.s32.totalorder %s198, 6
      %s202 = scalar_select %p201, %s198, 6
      %s203 = smul.addr %s200, 7
      %s204 = sadd.s32 %s202, %s203
      %s205 = smul.addr %s204, 4
      %s206 = scalar_lea.vmem %s0, %s205
      %s207 = sadd.s32 %s20, %s21
      %p208 = scmp.lt.s32.totalorder %s19, 1
      %s209 = scalar_select %p208, %s19, 1
      %p210 = scmp.lt.s32.totalorder %s20, 3
      %s211 = scalar_select %p210, %s20, 3
      %s212 = smul.addr %s209, 4
      %s213 = sadd.s32 %s211, %s212
      %s214 = smul.addr %s213, 2
      %s215 = scalar_lea.vmem %s3, %s214
      %p217 = scmp.eq.s32.totalorder %s21, 0
      // Predicated region
      $region33: #{_forward_impl.8} parent=31 // pred_check
        %p218 = pneg %p217
      $region34: #{_forward_impl.8} parent=31 // pred_check_branch
        %220 = sbr.rel (%p218) target = $region36
      $region35: #{_forward_impl.8} parent=31 // pred_region
        %221 = vst [vmem:[#allocation2] sm:$0xf] 0.0
      $region36: #{_forward_impl.8} parent=31 // pred_fallthru
        _
      %v222 = vld [vmem:[#allocation2] sm:$0xf]
      %v223 = vld [vmem:[%s206] sm:$0x3]
      %s224 = smul.u32 %s21, 64
      %s225 = smul.addr %s224, 4
      %s226 = scalar_lea.vmem %s1, %s225
      %v227 = vld [vmem:[%s226] sm:$0xf]
      %v228 = vld [vmem:[%s226 + $0x4] sm:$0xf]
      %v229 = vld [vmem:[%s226 + $0x8] sm:$0xf]
      %v230 = vld [vmem:[%s226 + $0xc] sm:$0xf]
      %v231 = vld [vmem:[%s226 + $0x10] sm:$0xf]
      %v232 = vld [vmem:[%s226 + $0x14] sm:$0xf]
      %v233 = vld [vmem:[%s226 + $0x18] sm:$0xf]
      %v234 = vld [vmem:[%s226 + $0x1c] sm:$0xf]
      %v235 = vld [vmem:[%s226 + $0x20] sm:$0xf]
      %v236 = vld [vmem:[%s226 + $0x24] sm:$0xf]
      %v237 = vld [vmem:[%s226 + $0x28] sm:$0xf]
      %v238 = vld [vmem:[%s226 + $0x2c] sm:$0xf]
      %v239 = vld [vmem:[%s226 + $0x30] sm:$0xf]
      %v240 = vld [vmem:[%s226 + $0x34] sm:$0xf]
      %v241 = vld [vmem:[%s226 + $0x38] sm:$0xf]
      %v242 = vld [vmem:[%s226 + $0x3c] sm:$0xf]
      %v259 = vunpack.c.l.b16 %v227
      %v260 = vunpack.c.l.b16 %v228
      %v261 = vunpack.c.l.b16 %v229
      %v262 = vunpack.c.l.b16 %v230
      %v263 = vunpack.c.l.b16 %v231
      %v264 = vunpack.c.l.b16 %v232
      %v265 = vunpack.c.l.b16 %v233
      %v266 = vunpack.c.l.b16 %v234
      %v267 = vunpack.c.l.b16 %v235
      %v268 = vunpack.c.l.b16 %v236
      %v269 = vunpack.c.l.b16 %v237
      %v270 = vunpack.c.l.b16 %v238
      %v271 = vunpack.c.l.b16 %v239
      %v272 = vunpack.c.l.b16 %v240
      %v273 = vunpack.c.l.b16 %v241
      %v274 = vunpack.c.l.b16 %v242
      %v275 = vpack.c.b16 %v260, %v259
      %v276 = vpack.c.b16 %v262, %v261
      %v277 = vpack.c.b16 %v264, %v263
      %v278 = vpack.c.b16 %v266, %v265
      %v279 = vpack.c.b16 %v268, %v267
      %v280 = vpack.c.b16 %v270, %v269
      %v281 = vpack.c.b16 %v272, %v271
      %v282 = vpack.c.b16 %v274, %v273
      %291 = vmatprep.subr.bf16.mxu0 0
      %292 = vmatpush1.bf16.msra.mxu0 %v282
      %293 = vmatprep.subr.bf16.mxu0 0
      %294 = vmatpush1.bf16.msra.mxu0 %v281
      %295 = vmatprep.subr.bf16.mxu0 0
      %296 = vmatpush1.bf16.msra.mxu0 %v280
      %297 = vmatprep.subr.bf16.mxu0 0
      %298 = vmatpush1.bf16.msra.mxu0 %v279
      %299 = vmatprep.subr.bf16.mxu0 0
      %300 = vmatpush1.bf16.msra.mxu0 %v278
      %301 = vmatprep.subr.bf16.mxu0 0
      %302 = vmatpush1.bf16.msra.mxu0 %v277
      %303 = vmatprep.subr.bf16.mxu0 0
      %304 = vmatpush1.bf16.msra.mxu0 %v276
      %305 = vmatprep.subr.bf16.mxu0 0
      %306 = vmatpush1.bf16.msra.mxu0 %v275
      %307 = vmatprep.subr.bf16.mxu0 0
      %308 = vmatpush2.bf16.msra.mxu0 0
      %309 = vmatprep.subr.bf16.mxu0 0
      %310 = vmatpush2.bf16.msra.mxu0 0
      %311 = vmatprep.subr.bf16.mxu0 0
      %312 = vmatpush2.bf16.msra.mxu0 0
      %313 = vmatprep.subr.bf16.mxu0 0
      %314 = vmatpush2.bf16.msra.mxu0 0
      %315 = vmatprep.subr.bf16.mxu0 0
      %316 = vmatpush2.bf16.msra.mxu0 0
      %317 = vmatprep.subr.bf16.mxu0 0
      %318 = vmatpush2.bf16.msra.mxu0 0
      %319 = vmatprep.subr.bf16.mxu0 0
      %320 = vmatpush2.bf16.msra.mxu0 0
      %321 = vmatprep.subr.bf16.mxu0 0
      %322 = vmatpush2.bf16.msra.mxu0 0
      %323 = vmatprep.mubr.bf16.mxu0 0
      %324 = vmatmul.mubr.bf16.gmra.mxu0 %v223
      %v325 = vpop.f32.mrf.mxu0
      %v326 = vadd.f32 0.0, %v325
      %v327 = vpop.f32.mrf.mxu0
      %v328 = vpop.f32.mrf.mxu0
      %v329 = vpop.f32.mrf.mxu0
      %330 = vdwg.mxu0
      %v331 = vadd.f32 %v222, %v326
      %v332 = vld [vmem:[%s206] sm:$0x7]
      %s333 = sadd.s32 16, %s224
      %s334 = smul.addr %s333, 4
      %s335 = scalar_lea.vmem %s1, %s334
      %v336 = vld [vmem:[%s335] sm:$0xf]
      %v337 = vld [vmem:[%s335 + $0x4] sm:$0xf]
      %v338 = vld [vmem:[%s335 + $0x8] sm:$0xf]
      %v339 = vld [vmem:[%s335 + $0xc] sm:$0xf]
      %v340 = vld [vmem:[%s335 + $0x10] sm:$0xf]
      %v341 = vld [vmem:[%s335 + $0x14] sm:$0xf]
      %v342 = vld [vmem:[%s335 + $0x18] sm:$0xf]
      %v343 = vld [vmem:[%s335 + $0x1c] sm:$0xf]
      %v344 = vld [vmem:[%s335 + $0x20] sm:$0xf]
      %v345 = vld [vmem:[%s335 + $0x24] sm:$0xf]
      %v346 = vld [vmem:[%s335 + $0x28] sm:$0xf]
      %v347 = vld [vmem:[%s335 + $0x2c] sm:$0xf]
      %v348 = vld [vmem:[%s335 + $0x30] sm:$0xf]
      %v349 = vld [vmem:[%s335 + $0x34] sm:$0xf]
      %v350 = vld [vmem:[%s335 + $0x38] sm:$0xf]
      %v351 = vld [vmem:[%s335 + $0x3c] sm:$0xf]
      %v353 = vunpack.c.l.b16 %v332
      %v354 = vpack.c.b16 %v353, %v353
      %v356 = vshrl.u32 %v354, 16
      %v358 = vshll.u32 %v354, 16
      %v360 = vrot.slane %v358, 1
      %v361 = vor.u32 %v356, %v360
      %v379 = vunpack.c.l.b16 %v336
      %v380 = vunpack.c.l.b16 %v337
      %v381 = vunpack.c.l.b16 %v338
      %v382 = vunpack.c.l.b16 %v339
      %v383 = vunpack.c.l.b16 %v340
      %v384 = vunpack.c.l.b16 %v341
      %v385 = vunpack.c.l.b16 %v342
      %v386 = vunpack.c.l.b16 %v343
      %v387 = vunpack.c.l.b16 %v344
      %v388 = vunpack.c.l.b16 %v345
      %v389 = vunpack.c.l.b16 %v346
      %v390 = vunpack.c.l.b16 %v347
      %v391 = vunpack.c.l.b16 %v348
      %v392 = vunpack.c.l.b16 %v349
      %v393 = vunpack.c.l.b16 %v350
      %v394 = vunpack.c.l.b16 %v351
      %v395 = vpack.c.b16 %v380, %v379
      %v396 = vpack.c.b16 %v382, %v381
      %v397 = vpack.c.b16 %v384, %v383
      %v398 = vpack.c.b16 %v386, %v385
      %v399 = vpack.c.b16 %v388, %v387
      %v400 = vpack.c.b16 %v390, %v389
      %v401 = vpack.c.b16 %v392, %v391
      %v402 = vpack.c.b16 %v394, %v393
      %411 = vmatprep.subr.bf16.mxu0 0
      %412 = vmatpush1.bf16.msra.mxu0 %v402
      %413 = vmatprep.subr.bf16.mxu0 0
      %414 = vmatpush1.bf16.msra.mxu0 %v401
      %415 = vmatprep.subr.bf16.mxu0 0
      %416 = vmatpush1.bf16.msra.mxu0 %v400
      %417 = vmatprep.subr.bf16.mxu0 0
      %418 = vmatpush1.bf16.msra.mxu0 %v399
      %419 = vmatprep.subr.bf16.mxu0 0
      %420 = vmatpush1.bf16.msra.mxu0 %v398
      %421 = vmatprep.subr.bf16.mxu0 0
      %422 = vmatpush1.bf16.msra.mxu0 %v397
      %423 = vmatprep.subr.bf16.mxu0 0
      %424 = vmatpush1.bf16.msra.mxu0 %v396
      %425 = vmatprep.subr.bf16.mxu0 0
      %426 = vmatpush1.bf16.msra.mxu0 %v395
      %427 = vmatprep.subr.bf16.mxu0 0
      %428 = vmatpush2.bf16.msra.mxu0 0
      %429 = vmatprep.subr.bf16.mxu0 0
      %430 = vmatpush2.bf16.msra.mxu0 0
      %431 = vmatprep.subr.bf16.mxu0 0
      %432 = vmatpush2.bf16.msra.mxu0 0
      %433 = vmatprep.subr.bf16.mxu0 0
      %434 = vmatpush2.bf16.msra.mxu0 0
      %435 = vmatprep.subr.bf16.mxu0 0
      %436 = vmatpush2.bf16.msra.mxu0 0
      %437 = vmatprep.subr.bf16.mxu0 0
      %438 = vmatpush2.bf16.msra.mxu0 0
      %439 = vmatprep.subr.bf16.mxu0 0
      %440 = vmatpush2.bf16.msra.mxu0 0
      %441 = vmatprep.subr.bf16.mxu0 0
      %442 = vmatpush2.bf16.msra.mxu0 0
      %443 = vmatprep.mubr.bf16.mxu0 0
      %444 = vmatmul.mubr.bf16.gmra.mxu0 %v361
      %v445 = vpop.f32.mrf.mxu0
      %v446 = vadd.f32 0.0, %v445
      %v447 = vpop.f32.mrf.mxu0
      %v448 = vpop.f32.mrf.mxu0
      %v449 = vpop.f32.mrf.mxu0
      %450 = vdwg.mxu0
      %v451 = vadd.f32 %v331, %v446
      %v452 = vld [vmem:[%s206] sm:$0x6]
      %s453 = sadd.s32 32, %s224
      %s454 = smul.addr %s453, 4
      %s455 = scalar_lea.vmem %s1, %s454
      %v456 = vld [vmem:[%s455] sm:$0xf]
      %v457 = vld [vmem:[%s455 + $0x4] sm:$0xf]
      %v458 = vld [vmem:[%s455 + $0x8] sm:$0xf]
      %v459 = vld [vmem:[%s455 + $0xc] sm:$0xf]
      %v460 = vld [vmem:[%s455 + $0x10] sm:$0xf]
      %v461 = vld [vmem:[%s455 + $0x14] sm:$0xf]
      %v462 = vld [vmem:[%s455 + $0x18] sm:$0xf]
      %v463 = vld [vmem:[%s455 + $0x1c] sm:$0xf]
      %v464 = vld [vmem:[%s455 + $0x20] sm:$0xf]
      %v465 = vld [vmem:[%s455 + $0x24] sm:$0xf]
      %v466 = vld [vmem:[%s455 + $0x28] sm:$0xf]
      %v467 = vld [vmem:[%s455 + $0x2c] sm:$0xf]
      %v468 = vld [vmem:[%s455 + $0x30] sm:$0xf]
      %v469 = vld [vmem:[%s455 + $0x34] sm:$0xf]
      %v470 = vld [vmem:[%s455 + $0x38] sm:$0xf]
      %v471 = vld [vmem:[%s455 + $0x3c] sm:$0xf]
      %v473 = vunpack.c.l.b16 %v452
      %v474 = vpack.c.b16 %v473, %v473
      %v475 = vrot.slane %v474, 1
      %v493 = vunpack.c.l.b16 %v456
      %v494 = vunpack.c.l.b16 %v457
      %v495 = vunpack.c.l.b16 %v458
      %v496 = vunpack.c.l.b16 %v459
      %v497 = vunpack.c.l.b16 %v460
      %v498 = vunpack.c.l.b16 %v461
      %v499 = vunpack.c.l.b16 %v462
      %v500 = vunpack.c.l.b16 %v463
      %v501 = vunpack.c.l.b16 %v464
      %v502 = vunpack.c.l.b16 %v465
      %v503 = vunpack.c.l.b16 %v466
      %v504 = vunpack.c.l.b16 %v467
      %v505 = vunpack.c.l.b16 %v468
      %v506 = vunpack.c.l.b16 %v469
      %v507 = vunpack.c.l.b16 %v470
      %v508 = vunpack.c.l.b16 %v471
      %v509 = vpack.c.b16 %v494, %v493
      %v510 = vpack.c.b16 %v496, %v495
      %v511 = vpack.c.b16 %v498, %v497
      %v512 = vpack.c.b16 %v500, %v499
      %v513 = vpack.c.b16 %v502, %v501
      %v514 = vpack.c.b16 %v504, %v503
      %v515 = vpack.c.b16 %v506, %v505
      %v516 = vpack.c.b16 %v508, %v507
      %525 = vmatprep.subr.bf16.mxu0 0
      %526 = vmatpush1.bf16.msra.mxu0 %v516
      %527 = vmatprep.subr.bf16.mxu0 0
      %528 = vmatpush1.bf16.msra.mxu0 %v515
      %529 = vmatprep.subr.bf16.mxu0 0
      %530 = vmatpush1.bf16.msra.mxu0 %v514
      %531 = vmatprep.subr.bf16.mxu0 0
      %532 = vmatpush1.bf16.msra.mxu0 %v513
      %533 = vmatprep.subr.bf16.mxu0 0
      %534 = vmatpush1.bf16.msra.mxu0 %v512
      %535 = vmatprep.subr.bf16.mxu0 0
      %536 = vmatpush1.bf16.msra.mxu0 %v511
      %537 = vmatprep.subr.bf16.mxu0 0
      %538 = vmatpush1.bf16.msra.mxu0 %v510
      %539 = vmatprep.subr.bf16.mxu0 0
      %540 = vmatpush1.bf16.msra.mxu0 %v509
      %541 = vmatprep.subr.bf16.mxu0 0
      %542 = vmatpush2.bf16.msra.mxu0 0
      %543 = vmatprep.subr.bf16.mxu0 0
      %544 = vmatpush2.bf16.msra.mxu0 0
      %545 = vmatprep.subr.bf16.mxu0 0
      %546 = vmatpush2.bf16.msra.mxu0 0
      %547 = vmatprep.subr.bf16.mxu0 0
      %548 = vmatpush2.bf16.msra.mxu0 0
      %549 = vmatprep.subr.bf16.mxu0 0
      %550 = vmatpush2.bf16.msra.mxu0 0
      %551 = vmatprep.subr.bf16.mxu0 0
      %552 = vmatpush2.bf16.msra.mxu0 0
      %553 = vmatprep.subr.bf16.mxu0 0
      %554 = vmatpush2.bf16.msra.mxu0 0
      %555 = vmatprep.subr.bf16.mxu0 0
      %556 = vmatpush2.bf16.msra.mxu0 0
      %557 = vmatprep.mubr.bf16.mxu0 0
      %558 = vmatmul.mubr.bf16.gmra.mxu0 %v475
      %v559 = vpop.f32.mrf.mxu0
      %v560 = vadd.f32 0.0, %v559
      %v561 = vpop.f32.mrf.mxu0
      %v562 = vpop.f32.mrf.mxu0
      %v563 = vpop.f32.mrf.mxu0
      %564 = vdwg.mxu0
      %v565 = vadd.f32 %v451, %v560
      %v566 = vld [vmem:[%s206] sm:$0xe]
      %s567 = sadd.s32 48, %s224
      %s568 = smul.addr %s567, 4
      %s569 = scalar_lea.vmem %s1, %s568
      %v570 = vld [vmem:[%s569] sm:$0xf]
      %v571 = vld [vmem:[%s569 + $0x4] sm:$0xf]
      %v572 = vld [vmem:[%s569 + $0x8] sm:$0xf]
      %v573 = vld [vmem:[%s569 + $0xc] sm:$0xf]
      %v574 = vld [vmem:[%s569 + $0x10] sm:$0xf]
      %v575 = vld [vmem:[%s569 + $0x14] sm:$0xf]
      %v576 = vld [vmem:[%s569 + $0x18] sm:$0xf]
      %v577 = vld [vmem:[%s569 + $0x1c] sm:$0xf]
      %v578 = vld [vmem:[%s569 + $0x20] sm:$0xf]
      %v579 = vld [vmem:[%s569 + $0x24] sm:$0xf]
      %v580 = vld [vmem:[%s569 + $0x28] sm:$0xf]
      %v581 = vld [vmem:[%s569 + $0x2c] sm:$0xf]
      %v582 = vld [vmem:[%s569 + $0x30] sm:$0xf]
      %v583 = vld [vmem:[%s569 + $0x34] sm:$0xf]
      %v584 = vld [vmem:[%s569 + $0x38] sm:$0xf]
      %v585 = vld [vmem:[%s569 + $0x3c] sm:$0xf]
      %v587 = vunpack.c.l.b16 %v566
      %v588 = vpack.c.b16 %v587, %v587
      %v590 = vshrl.u32 %v588, 16
      %v592 = vrot.slane %v590, 1
      %v593 = vshll.u32 %v588, 16
      %v595 = vrot.slane %v593, 2
      %v596 = vor.u32 %v592, %v595
      %v614 = vunpack.c.l.b16 %v570
      %v615 = vunpack.c.l.b16 %v571
      %v616 = vunpack.c.l.b16 %v572
      %v617 = vunpack.c.l.b16 %v573
      %v618 = vunpack.c.l.b16 %v574
      %v619 = vunpack.c.l.b16 %v575
      %v620 = vunpack.c.l.b16 %v576
      %v621 = vunpack.c.l.b16 %v577
      %v622 = vunpack.c.l.b16 %v578
      %v623 = vunpack.c.l.b16 %v579
      %v624 = vunpack.c.l.b16 %v580
      %v625 = vunpack.c.l.b16 %v581
      %v626 = vunpack.c.l.b16 %v582
      %v627 = vunpack.c.l.b16 %v583
      %v628 = vunpack.c.l.b16 %v584
      %v629 = vunpack.c.l.b16 %v585
      %v630 = vpack.c.b16 %v615, %v614
      %v631 = vpack.c.b16 %v617, %v616
      %v632 = vpack.c.b16 %v619, %v618
      %v633 = vpack.c.b16 %v621, %v620
      %v634 = vpack.c.b16 %v623, %v622
      %v635 = vpack.c.b16 %v625, %v624
      %v636 = vpack.c.b16 %v627, %v626
      %v637 = vpack.c.b16 %v629, %v628
      %646 = vmatprep.subr.bf16.mxu0 0
      %647 = vmatpush1.bf16.msra.mxu0 %v637
      %648 = vmatprep.subr.bf16.mxu0 0
      %649 = vmatpush1.bf16.msra.mxu0 %v636
      %650 = vmatprep.subr.bf16.mxu0 0
      %651 = vmatpush1.bf16.msra.mxu0 %v635
      %652 = vmatprep.subr.bf16.mxu0 0
      %653 = vmatpush1.bf16.msra.mxu0 %v634
      %654 = vmatprep.subr.bf16.mxu0 0
      %655 = vmatpush1.bf16.msra.mxu0 %v633
      %656 = vmatprep.subr.bf16.mxu0 0
      %657 = vmatpush1.bf16.msra.mxu0 %v632
      %658 = vmatprep.subr.bf16.mxu0 0
      %659 = vmatpush1.bf16.msra.mxu0 %v631
      %660 = vmatprep.subr.bf16.mxu0 0
      %661 = vmatpush1.bf16.msra.mxu0 %v630
      %662 = vmatprep.subr.bf16.mxu0 0
      %663 = vmatpush2.bf16.msra.mxu0 0
      %664 = vmatprep.subr.bf16.mxu0 0
      %665 = vmatpush2.bf16.msra.mxu0 0
      %666 = vmatprep.subr.bf16.mxu0 0
      %667 = vmatpush2.bf16.msra.mxu0 0
      %668 = vmatprep.subr.bf16.mxu0 0
      %669 = vmatpush2.bf16.msra.mxu0 0
      %670 = vmatprep.subr.bf16.mxu0 0
      %671 = vmatpush2.bf16.msra.mxu0 0
      %672 = vmatprep.subr.bf16.mxu0 0
      %673 = vmatpush2.bf16.msra.mxu0 0
      %674 = vmatprep.subr.bf16.mxu0 0
      %675 = vmatpush2.bf16.msra.mxu0 0
      %676 = vmatprep.subr.bf16.mxu0 0
      %677 = vmatpush2.bf16.msra.mxu0 0
      %678 = vmatprep.mubr.bf16.mxu0 0
      %679 = vmatmul.mubr.bf16.gmra.mxu0 %v596
      %v680 = vpop.f32.mrf.mxu0
      %v681 = vadd.f32 0.0, %v680
      %v682 = vpop.f32.mrf.mxu0
      %v683 = vpop.f32.mrf.mxu0
      %v684 = vpop.f32.mrf.mxu0
      %685 = vdwg.mxu0
      %v686 = vadd.f32 %v565, %v681
      %687 = vst [vmem:[#allocation2] sm:$0xf] %v686
      %p688 = scmp.eq.s32.totalorder %s21, 3
      // Predicated region
      $region37: #{_forward_impl.8} parent=31 // pred_check
        %p689 = pneg %p688
      $region38: #{_forward_impl.8} parent=31 // pred_check_branch
        %691 = sbr.rel (%p689) target = $region40
      $region39: #{_forward_impl.8} parent=31 // pred_region
        %v692 = vld [vmem:[#allocation2] sm:$0xf]
        %v693 = vld [vmem:[%s2] sm:$0x1]
        %v695 = vlaneseq
        %v696 = vshrl.u32 %v695, 7
        %v697 = vsub.s32 0, %v696
        %v698 = vrot.slane %v693, %v697
        %v700 = vadd.f32 %v692, %v698
        %vm701 = vcmp.gt.f32.partialorder %v700, 0.0
        %v702 = vmul.f32 %v700, 0.2
        %v703 = vsel %vm701, %v700, %v702
        %v704 = vpack.c.bf16 %v703, %v703
        %705 = vst [vmem:[%s215] sm:$0x3] %v704
      $region40: #{_forward_impl.8} parent=31 // pred_fallthru
        _
      %p706 = scmp.lt.s32.totalorder %s19, 1
      %s707 = scalar_select %p706, %s19, 1
      %p708 = scmp.lt.s32.totalorder %s20, 3
      %s709 = scalar_select %p708, %s20, 3
      %s710 = smul.addr %s707, 4
      %s711 = sadd.s32 %s709, %s710
      %s712 = smul.addr %s711, 2
      %s713 = scalar_lea.vmem %s3, %s712
      // Predicated region
      $region41: #{_forward_impl.8} parent=31 // pred_check
        %p714 = pneg %p125
      $region42: #{_forward_impl.8} parent=31 // pred_check_branch
        %716 = sbr.rel (%p714) target = $region44
      $region43: #{_forward_impl.8} parent=31 // pred_region
        _
      $region44: #{_forward_impl.8} parent=31 // pred_fallthru
        _
    $region32: #{_forward_impl.8} parent=5 // pred_fallthru
      _
    %p717 = scmp.le.s32.totalorder 2, %s9
    // Predicated region
    $region45: #{_forward_impl.8} parent=5 // pred_check
      %p718 = pneg %p717
    $region46: #{_forward_impl.8} parent=5 // pred_check_branch
      %720 = sbr.rel (%p718) target = $region48
    $region47: #{_forward_impl.8} parent=5 // pred_region
      %s721 = ssub.s32 %s9, 2
      // Predicated region
      $region49: #{_forward_impl.8} parent=47 // pred_check
        %p722 = pneg %p131
      $region50: #{_forward_impl.8} parent=47 // pred_check_branch
        %724 = sbr.rel (%p722) target = $region52
      $region51: #{_forward_impl.8} parent=47 // pred_region
        %p725 = scmp.lt.s32.totalorder %s22, 1
        %s726 = scalar_select %p725, %s22, 1
        %p727 = scmp.lt.s32.totalorder %s23, 3
        %s728 = scalar_select %p727, %s23, 3
        %s729 = smul.addr %s726, 4
        %s730 = sadd.s32 %s728, %s729
        %s731 = smul.addr %s730, 2
        %s732 = scalar_lea.vmem %s3, %s731
      $region52: #{_forward_impl.8} parent=47 // pred_fallthru
        _
    $region48: #{_forward_impl.8} parent=5 // pred_fallthru
      _
  $region6: #{_forward_impl.8} parent=0 // loop_footer
    %s13 = sadd.s32 1, %s9
  $region7: #{_forward_impl.8} parent=0 // loop_footer_branch
    %8 = sbr.rel target = $region3
  $region8: #{_forward_impl.8} parent=0 // loop_exit
    _

// kernel: _forward_impl.9
$region0: #{_forward_impl.9}
  #allocation0 [shape = 'u32[]', space=smem, size = 0x4, offset = 0x4, fixed_abs, tag = 'smem constant byte address 0x4 - core index']
  #allocation1 [shape = 'u32[144,128]{1,0:T(1,128)}', space=vmem, size = 0x12000, scoped, tag = 'internal scratch']
  #allocation2 [shape = 'f32[5,128]{1,0:T(8,128)}', space=vmem, size = 0x1000, scoped, tag = 'scratch operand']
  %s0 = inlined_call_operand.vmem [shape: bf16[2,8,1,8,128], index: 0, kind: input, shape index: {}]
  %s1 = inlined_call_operand.vmem [shape: bf16[4,4,128,128], index: 1, kind: input, shape index: {}]
  %s2 = inlined_call_operand.vmem [shape: f32[1,128], index: 2, kind: input, shape index: {}]
  %s3 = inlined_call_operand.vmem [shape: bf16[2,5,5,128], index: 3, kind: output, shape index: {}]
  %s4 = sld [smem:[#allocation0]]
  $region53: #{_forward_impl.9} parent=0
    _
  %s6 = ssub.s32 1, %s4
  %s7 = scalar_select 0, %s6, %s4
  loop: start=0, step=1, limit=42
  $region2: #{_forward_impl.9} parent=0 // loop_pre_header
    _
  $region3: #{_forward_impl.9} parent=0 // loop_header
    %s9 = sphi 0, %s13
    %p10 = scmp.ge.s32.totalorder %s9, 42
    %s16 = sphi 0, %s35
    %s17 = sphi 0, %s31
    %s18 = sphi 0, %s27
    %s19 = sphi 0, %s16
    %s20 = sphi 0, %s17
    %s21 = sphi 0, %s18
    %s22 = sphi 0, %s19
    %s23 = sphi 0, %s20
    %s24 = sphi 0, %s21
    %s42 = sphi 0, %s44
    %s45 = sphi 0, %s42
    %s46 = sphi 0, %s45
    %s62 = sphi 0, %s46
    %s66 = sphi 0, %s66
    %s68 = sphi 0, %s66
    %s69 = sphi 0, %s68
    %s83 = sphi 0, %s69
    %s87 = sphi 0, %s87
    %s89 = sphi 0, %s87
    %s90 = sphi 0, %s89
    %s104 = sphi 0, %s90
    %s112 = sphi 0, %s114
    %s115 = sphi 0, %s112
    %s116 = sphi 0, %s115
    %s132 = sphi 0, %s116
  $region4: #{_forward_impl.9} parent=0 // loop_header_branch
    %12 = sbr.rel (%p10) target = $region8
  $region5: #{_forward_impl.9} parent=0 // loop_body
    %s14 = ssub.s32 %s9, 1
    %s15 = ssub.s32 %s9, 2
    %s25 = sadd.s32 1, %s18
    %p26 = scmp.ge.s32.totalorder %s25, 4
    %s27 = scalar_select %p26, 0, %s25
    %s28 = sadd.s32 1, %s17
    %s29 = scalar_select %p26, %s28, %s17
    %p30 = scmp.ge.s32.totalorder %s29, 5
    %s31 = scalar_select %p30, 0, %s29
    %s32 = sadd.s32 1, %s16
    %s33 = scalar_select %p30, %s32, %s16
    %p34 = scmp.ge.s32.totalorder %s33, 2
    %s35 = scalar_select %p34, 0, %s33
    %s36 = sadd.s32 %s17, %s18
    %s37 = sadd.s32 %s31, %s27
    %s38 = ssub.s32 %s16, %s35
    %s39 = ssub.s32 %s36, %s37
    %s40 = sor.u32 %s38, %s39
    %p41 = scmp.eq.s32.totalorder %s40, 0
    %s43 = sadd.s32 %s42, 1
    %s44 = scalar_select %p41, %s42, %s43
    %p47 = pneg %p41
    %p48 = scmp.eq.s32.totalorder %s9, 39
    %p49 = por %p47, %p48
    %p50 = scmp.ne.s32.totalorder %s42, %s45
    %p51 = scmp.eq.s32.totalorder %s9, 0
    %p52 = por %p50, %p51
    %p53 = scmp.ne.s32.totalorder %s42, %s45
    %p54 = scmp.eq.s32.totalorder %s14, 39
    %p55 = por %p53, %p54
    %p56 = scmp.ne.s32.totalorder %s45, %s46
    %p57 = scmp.eq.s32.totalorder %s14, 0
    %p58 = por %p56, %p57
    %p59 = scmp.ne.s32.totalorder %s45, %s46
    %p60 = scmp.eq.s32.totalorder %s15, 39
    %p61 = por %p59, %p60
    %p63 = scmp.ne.s32.totalorder %s46, %s62
    %p64 = scmp.eq.s32.totalorder %s15, 0
    %p65 = por %p63, %p64
    %s67 = sadd.s32 %s66, 1
    %p70 = scmp.eq.s32.totalorder %s9, 39
    %p71 = scmp.ne.s32.totalorder %s66, %s68
    %p72 = scmp.eq.s32.totalorder %s9, 0
    %p73 = por %p71, %p72
    %p74 = scmp.ne.s32.totalorder %s66, %s68
    %p75 = scmp.eq.s32.totalorder %s14, 39
    %p76 = por %p74, %p75
    %p77 = scmp.ne.s32.totalorder %s68, %s69
    %p78 = scmp.eq.s32.totalorder %s14, 0
    %p79 = por %p77, %p78
    %p80 = scmp.ne.s32.totalorder %s68, %s69
    %p81 = scmp.eq.s32.totalorder %s15, 39
    %p82 = por %p80, %p81
    %p84 = scmp.ne.s32.totalorder %s69, %s83
    %p85 = scmp.eq.s32.totalorder %s15, 0
    %p86 = por %p84, %p85
    %s88 = sadd.s32 %s87, 1
    %p91 = scmp.eq.s32.totalorder %s9, 39
    %p92 = scmp.ne.s32.totalorder %s87, %s89
    %p93 = scmp.eq.s32.totalorder %s9, 0
    %p94 = por %p92, %p93
    %p95 = scmp.ne.s32.totalorder %s87, %s89
    %p96 = scmp.eq.s32.totalorder %s14, 39
    %p97 = por %p95, %p96
    %p98 = scmp.ne.s32.totalorder %s89, %s90
    %p99 = scmp.eq.s32.totalorder %s14, 0
    %p100 = por %p98, %p99
    %p101 = scmp.ne.s32.totalorder %s89, %s90
    %p102 = scmp.eq.s32.totalorder %s15, 39
    %p103 = por %p101, %p102
    %p105 = scmp.ne.s32.totalorder %s90, %s104
    %p106 = scmp.eq.s32.totalorder %s15, 0
    %p107 = por %p105, %p106
    %s108 = ssub.s32 %s16, %s35
    %s109 = ssub.s32 %s17, %s31
    %s110 = sor.u32 %s108, %s109
    %p111 = scmp.eq.s32.totalorder %s110, 0
    %s113 = sadd.s32 %s112, 1
    %s114 = scalar_select %p111, %s112, %s113
    %p117 = pneg %p111
    %p118 = scmp.eq.s32.totalorder %s9, 39
    %p119 = por %p117, %p118
    %p120 = scmp.ne.s32.totalorder %s112, %s115
    %p121 = scmp.eq.s32.totalorder %s9, 0
    %p122 = por %p120, %p121
    %p123 = scmp.ne.s32.totalorder %s112, %s115
    %p124 = scmp.eq.s32.totalorder %s14, 39
    %p125 = por %p123, %p124
    %p126 = scmp.ne.s32.totalorder %s115, %s116
    %p127 = scmp.eq.s32.totalorder %s14, 0
    %p128 = por %p126, %p127
    %p129 = scmp.ne.s32.totalorder %s115, %s116
    %p130 = scmp.eq.s32.totalorder %s15, 39
    %p131 = por %p129, %p130
    %p133 = scmp.ne.s32.totalorder %s116, %s132
    %p134 = scmp.eq.s32.totalorder %s15, 0
    %p135 = por %p133, %p134
    %p136 = scmp.le.s32.totalorder 1, %s9
    %p137 = scmp.lt.s32.totalorder %s9, 41
    %p138 = pnand %p136, %p137
    %p139 = pneg %p138
    // Predicated region
    $region9: #{_forward_impl.9} parent=5 // pred_check
      _
    $region10: #{_forward_impl.9} parent=5 // pred_check_branch
      %141 = sbr.rel (%p138) target = $region12
    $region11: #{_forward_impl.9} parent=5 // pred_region
      %s142 = ssub.s32 %s9, 1
      // Predicated region
      $region13: #{_forward_impl.9} parent=11 // pred_check
        %p143 = pneg %p79
      $region14: #{_forward_impl.9} parent=11 // pred_check_branch
        %145 = sbr.rel (%p143) target = $region16
      $region15: #{_forward_impl.9} parent=11 // pred_region
        _
      $region16: #{_forward_impl.9} parent=11 // pred_fallthru
        _
      // Predicated region
      $region17: #{_forward_impl.9} parent=11 // pred_check
        %p146 = pneg %p100
      $region18: #{_forward_impl.9} parent=11 // pred_check_branch
        %148 = sbr.rel (%p146) target = $region20
      $region19: #{_forward_impl.9} parent=11 // pred_region
        _
      $region20: #{_forward_impl.9} parent=11 // pred_fallthru
        _
    $region12: #{_forward_impl.9} parent=5 // pred_fallthru
      _
    %p149 = scmp.lt.s32.totalorder %s9, 40
    // Predicated region
    $region21: #{_forward_impl.9} parent=5 // pred_check
      %p150 = pneg %p149
    $region22: #{_forward_impl.9} parent=5 // pred_check_branch
      %152 = sbr.rel (%p150) target = $region24
    $region23: #{_forward_impl.9} parent=5 // pred_region
      // Predicated region
      $region25: #{_forward_impl.9} parent=23 // pred_check
        %p153 = pneg %p52
      $region26: #{_forward_impl.9} parent=23 // pred_check_branch
        %155 = sbr.rel (%p153) target = $region28
      $region27: #{_forward_impl.9} parent=23 // pred_region
        %s156 = sadd.s32 %s17, %s18
        %p157 = scmp.lt.s32.totalorder %s16, 1
        %s158 = scalar_select %p157, %s16, 1
        %p159 = scmp.lt.s32.totalorder %s156, 7
        %s160 = scalar_select %p159, %s156, 7
        %s161 = smul.addr %s158, 8
        %s162 = sadd.s32 %s160, %s161
        %s163 = smul.addr %s162, 4
        %s164 = scalar_lea.vmem %s0, %s163
        %s165 = sadd.s32 %s17, %s18
      $region28: #{_forward_impl.9} parent=23 // pred_fallthru
        _
    $region24: #{_forward_impl.9} parent=5 // pred_fallthru
      _
    %p166 = scmp.le.s32.totalorder 1, %s9
    %p167 = scmp.lt.s32.totalorder %s9, 41
    %p168 = pnand %p166, %p167
    %p169 = pneg %p168
    // Predicated region
    $region29: #{_forward_impl.9} parent=5 // pred_check
      _
    $region30: #{_forward_impl.9} parent=5 // pred_check_branch
      %171 = sbr.rel (%p168) target = $region32
    $region31: #{_forward_impl.9} parent=5 // pred_region
      %s172 = ssub.s32 %s9, 1
      %s173 = sadd.s32 %s20, %s21
      %p174 = scmp.lt.s32.totalorder %s19, 1
      %s175 = scalar_select %p174, %s19, 1
      %p176 = scmp.lt.s32.totalorder %s173, 7
      %s177 = scalar_select %p176, %s173, 7
      %s178 = smul.addr %s175, 8
      %s179 = sadd.s32 %s177, %s178
      %s180 = smul.addr %s179, 4
      %s181 = scalar_lea.vmem %s0, %s180
      %p182 = pneg %p58
      %p183 = pneg %p55
      %p184 = pneg %p79
      %p185 = pneg %p76
      %p186 = pneg %p100
      %p187 = pneg %p97
      %p188 = pneg %p128
      %p189 = pneg %p125
      %p190 = scmp.lt.s32.totalorder %s19, 1
      %s191 = scalar_select %p190, %s19, 1
      %p192 = scmp.lt.s32.totalorder %s20, 4
      %s193 = scalar_select %p192, %s20, 4
      %s194 = smul.addr %s191, 5
      %s195 = sadd.s32 %s193, %s194
      %s196 = smul.addr %s195, 4
      %s197 = scalar_lea.vmem %s3, %s196
      %s198 = sadd.s32 %s20, %s21
      %p199 = scmp.lt.s32.totalorder %s19, 1
      %s200 = scalar_select %p199, %s19, 1
      %p201 = scmp.lt.s32.totalorder %s198, 7
      %s202 = scalar_select %p201, %s198, 7
      %s203 = smul.addr %s200, 8
      %s204 = sadd.s32 %s202, %s203
      %s205 = smul.addr %s204, 4
      %s206 = scalar_lea.vmem %s0, %s205
      %s207 = sadd.s32 %s20, %s21
      %p208 = scmp.lt.s32.totalorder %s19, 1
      %s209 = scalar_select %p208, %s19, 1
      %p210 = scmp.lt.s32.totalorder %s20, 4
      %s211 = scalar_select %p210, %s20, 4
      %s212 = smul.addr %s209, 5
      %s213 = sadd.s32 %s211, %s212
      %s214 = smul.addr %s213, 4
      %s215 = scalar_lea.vmem %s3, %s214
      %p217 = scmp.eq.s32.totalorder %s21, 0
      // Predicated region
      $region33: #{_forward_impl.9} parent=31 // pred_check
        %p218 = pneg %p217
      $region34: #{_forward_impl.9} parent=31 // pred_check_branch
        %220 = sbr.rel (%p218) target = $region36
      $region35: #{_forward_impl.9} parent=31 // pred_region
        %221 = vst [vmem:[#allocation2] sm:$0x1f] 0.0
      $region36: #{_forward_impl.9} parent=31 // pred_fallthru
        _
      %v222 = vld [vmem:[#allocation2] sm:$0x1f]
      %v223 = vld [vmem:[%s206] sm:$0x7]
      %s224 = smul.u32 %s21, 64
      %s225 = smul.addr %s224, 4
      %s226 = scalar_lea.vmem %s1, %s225
      %v227 = vld [vmem:[%s226] sm:$0xf]
      %v228 = vld [vmem:[%s226 + $0x4] sm:$0xf]
      %v229 = vld [vmem:[%s226 + $0x8] sm:$0xf]
      %v230 = vld [vmem:[%s226 + $0xc] sm:$0xf]
      %v231 = vld [vmem:[%s226 + $0x10] sm:$0xf]
      %v232 = vld [vmem:[%s226 + $0x14] sm:$0xf]
      %v233 = vld [vmem:[%s226 + $0x18] sm:$0xf]
      %v234 = vld [vmem:[%s226 + $0x1c] sm:$0xf]
      %v235 = vld [vmem:[%s226 + $0x20] sm:$0xf]
      %v236 = vld [vmem:[%s226 + $0x24] sm:$0xf]
      %v237 = vld [vmem:[%s226 + $0x28] sm:$0xf]
      %v238 = vld [vmem:[%s226 + $0x2c] sm:$0xf]
      %v239 = vld [vmem:[%s226 + $0x30] sm:$0xf]
      %v240 = vld [vmem:[%s226 + $0x34] sm:$0xf]
      %v241 = vld [vmem:[%s226 + $0x38] sm:$0xf]
      %v242 = vld [vmem:[%s226 + $0x3c] sm:$0xf]
      %v259 = vunpack.c.l.b16 %v227
      %v260 = vunpack.c.l.b16 %v228
      %v261 = vunpack.c.l.b16 %v229
      %v262 = vunpack.c.l.b16 %v230
      %v263 = vunpack.c.l.b16 %v231
      %v264 = vunpack.c.l.b16 %v232
      %v265 = vunpack.c.l.b16 %v233
      %v266 = vunpack.c.l.b16 %v234
      %v267 = vunpack.c.l.b16 %v235
      %v268 = vunpack.c.l.b16 %v236
      %v269 = vunpack.c.l.b16 %v237
      %v270 = vunpack.c.l.b16 %v238
      %v271 = vunpack.c.l.b16 %v239
      %v272 = vunpack.c.l.b16 %v240
      %v273 = vunpack.c.l.b16 %v241
      %v274 = vunpack.c.l.b16 %v242
      %v275 = vpack.c.b16 %v260, %v259
      %v276 = vpack.c.b16 %v262, %v261
      %v277 = vpack.c.b16 %v264, %v263
      %v278 = vpack.c.b16 %v266, %v265
      %v279 = vpack.c.b16 %v268, %v267
      %v280 = vpack.c.b16 %v270, %v269
      %v281 = vpack.c.b16 %v272, %v271
      %v282 = vpack.c.b16 %v274, %v273
      %291 = vmatprep.subr.bf16.mxu0 0
      %292 = vmatpush1.bf16.msra.mxu0 %v282
      %293 = vmatprep.subr.bf16.mxu0 0
      %294 = vmatpush1.bf16.msra.mxu0 %v281
      %295 = vmatprep.subr.bf16.mxu0 0
      %296 = vmatpush1.bf16.msra.mxu0 %v280
      %297 = vmatprep.subr.bf16.mxu0 0
      %298 = vmatpush1.bf16.msra.mxu0 %v279
      %299 = vmatprep.subr.bf16.mxu0 0
      %300 = vmatpush1.bf16.msra.mxu0 %v278
      %301 = vmatprep.subr.bf16.mxu0 0
      %302 = vmatpush1.bf16.msra.mxu0 %v277
      %303 = vmatprep.subr.bf16.mxu0 0
      %304 = vmatpush1.bf16.msra.mxu0 %v276
      %305 = vmatprep.subr.bf16.mxu0 0
      %306 = vmatpush1.bf16.msra.mxu0 %v275
      %307 = vmatprep.subr.bf16.mxu0 0
      %308 = vmatpush2.bf16.msra.mxu0 0
      %309 = vmatprep.subr.bf16.mxu0 0
      %310 = vmatpush2.bf16.msra.mxu0 0
      %311 = vmatprep.subr.bf16.mxu0 0
      %312 = vmatpush2.bf16.msra.mxu0 0
      %313 = vmatprep.subr.bf16.mxu0 0
      %314 = vmatpush2.bf16.msra.mxu0 0
      %315 = vmatprep.subr.bf16.mxu0 0
      %316 = vmatpush2.bf16.msra.mxu0 0
      %317 = vmatprep.subr.bf16.mxu0 0
      %318 = vmatpush2.bf16.msra.mxu0 0
      %319 = vmatprep.subr.bf16.mxu0 0
      %320 = vmatpush2.bf16.msra.mxu0 0
      %321 = vmatprep.subr.bf16.mxu0 0
      %322 = vmatpush2.bf16.msra.mxu0 0
      %323 = vmatprep.mubr.bf16.mxu0 0
      %324 = vmatmul.mubr.bf16.gmra.mxu0 %v223
      %v325 = vpop.f32.mrf.mxu0
      %v326 = vadd.f32 0.0, %v325
      %v327 = vpop.f32.mrf.mxu0
      %v328 = vpop.f32.mrf.mxu0
      %v329 = vpop.f32.mrf.mxu0
      %330 = vdwg.mxu0
      %v331 = vadd.f32 %v222, %v326
      %s332 = sadd.s32 16, %s224
      %s333 = smul.addr %s332, 4
      %s334 = scalar_lea.vmem %s1, %s333
      %v335 = vld [vmem:[%s334] sm:$0xf]
      %v336 = vld [vmem:[%s334 + $0x4] sm:$0xf]
      %v337 = vld [vmem:[%s334 + $0x8] sm:$0xf]
      %v338 = vld [vmem:[%s334 + $0xc] sm:$0xf]
      %v339 = vld [vmem:[%s334 + $0x10] sm:$0xf]
      %v340 = vld [vmem:[%s334 + $0x14] sm:$0xf]
      %v341 = vld [vmem:[%s334 + $0x18] sm:$0xf]
      %v342 = vld [vmem:[%s334 + $0x1c] sm:$0xf]
      %v343 = vld [vmem:[%s334 + $0x20] sm:$0xf]
      %v344 = vld [vmem:[%s334 + $0x24] sm:$0xf]
      %v345 = vld [vmem:[%s334 + $0x28] sm:$0xf]
      %v346 = vld [vmem:[%s334 + $0x2c] sm:$0xf]
      %v347 = vld [vmem:[%s334 + $0x30] sm:$0xf]
      %v348 = vld [vmem:[%s334 + $0x34] sm:$0xf]
      %v349 = vld [vmem:[%s334 + $0x38] sm:$0xf]
      %v350 = vld [vmem:[%s334 + $0x3c] sm:$0xf]
      %v352 = vunpack.c.l.b16 %v223
      %v353 = vpack.c.b16 %v352, %v352
      %v355 = vshrl.u32 %v353, 16
      %v357 = vshll.u32 %v353, 16
      %v359 = vrot.slane %v357, 1
      %v360 = vor.u32 %v355, %v359
      %v378 = vunpack.c.l.b16 %v335
      %v379 = vunpack.c.l.b16 %v336
      %v380 = vunpack.c.l.b16 %v337
      %v381 = vunpack.c.l.b16 %v338
      %v382 = vunpack.c.l.b16 %v339
      %v383 = vunpack.c.l.b16 %v340
      %v384 = vunpack.c.l.b16 %v341
      %v385 = vunpack.c.l.b16 %v342
      %v386 = vunpack.c.l.b16 %v343
      %v387 = vunpack.c.l.b16 %v344
      %v388 = vunpack.c.l.b16 %v345
      %v389 = vunpack.c.l.b16 %v346
      %v390 = vunpack.c.l.b16 %v347
      %v391 = vunpack.c.l.b16 %v348
      %v392 = vunpack.c.l.b16 %v349
      %v393 = vunpack.c.l.b16 %v350
      %v394 = vpack.c.b16 %v379, %v378
      %v395 = vpack.c.b16 %v381, %v380
      %v396 = vpack.c.b16 %v383, %v382
      %v397 = vpack.c.b16 %v385, %v384
      %v398 = vpack.c.b16 %v387, %v386
      %v399 = vpack.c.b16 %v389, %v388
      %v400 = vpack.c.b16 %v391, %v390
      %v401 = vpack.c.b16 %v393, %v392
      %410 = vmatprep.subr.bf16.mxu0 0
      %411 = vmatpush1.bf16.msra.mxu0 %v401
      %412 = vmatprep.subr.bf16.mxu0 0
      %413 = vmatpush1.bf16.msra.mxu0 %v400
      %414 = vmatprep.subr.bf16.mxu0 0
      %415 = vmatpush1.bf16.msra.mxu0 %v399
      %416 = vmatprep.subr.bf16.mxu0 0
      %417 = vmatpush1.bf16.msra.mxu0 %v398
      %418 = vmatprep.subr.bf16.mxu0 0
      %419 = vmatpush1.bf16.msra.mxu0 %v397
      %420 = vmatprep.subr.bf16.mxu0 0
      %421 = vmatpush1.bf16.msra.mxu0 %v396
      %422 = vmatprep.subr.bf16.mxu0 0
      %423 = vmatpush1.bf16.msra.mxu0 %v395
      %424 = vmatprep.subr.bf16.mxu0 0
      %425 = vmatpush1.bf16.msra.mxu0 %v394
      %426 = vmatprep.subr.bf16.mxu0 0
      %427 = vmatpush2.bf16.msra.mxu0 0
      %428 = vmatprep.subr.bf16.mxu0 0
      %429 = vmatpush2.bf16.msra.mxu0 0
      %430 = vmatprep.subr.bf16.mxu0 0
      %431 = vmatpush2.bf16.msra.mxu0 0
      %432 = vmatprep.subr.bf16.mxu0 0
      %433 = vmatpush2.bf16.msra.mxu0 0
      %434 = vmatprep.subr.bf16.mxu0 0
      %435 = vmatpush2.bf16.msra.mxu0 0
      %436 = vmatprep.subr.bf16.mxu0 0
      %437 = vmatpush2.bf16.msra.mxu0 0
      %438 = vmatprep.subr.bf16.mxu0 0
      %439 = vmatpush2.bf16.msra.mxu0 0
      %440 = vmatprep.subr.bf16.mxu0 0
      %441 = vmatpush2.bf16.msra.mxu0 0
      %442 = vmatprep.mubr.bf16.mxu0 0
      %443 = vmatmul.mubr.bf16.gmra.mxu0 %v360
      %v444 = vpop.f32.mrf.mxu0
      %v445 = vadd.f32 0.0, %v444
      %v446 = vpop.f32.mrf.mxu0
      %v447 = vpop.f32.mrf.mxu0
      %v448 = vpop.f32.mrf.mxu0
      %449 = vdwg.mxu0
      %v450 = vadd.f32 %v331, %v445
      %v451 = vld [vmem:[%s206] sm:$0xe]
      %s452 = sadd.s32 32, %s224
      %s453 = smul.addr %s452, 4
      %s454 = scalar_lea.vmem %s1, %s453
      %v455 = vld [vmem:[%s454] sm:$0xf]
      %v456 = vld [vmem:[%s454 + $0x4] sm:$0xf]
      %v457 = vld [vmem:[%s454 + $0x8] sm:$0xf]
      %v458 = vld [vmem:[%s454 + $0xc] sm:$0xf]
      %v459 = vld [vmem:[%s454 + $0x10] sm:$0xf]
      %v460 = vld [vmem:[%s454 + $0x14] sm:$0xf]
      %v461 = vld [vmem:[%s454 + $0x18] sm:$0xf]
      %v462 = vld [vmem:[%s454 + $0x1c] sm:$0xf]
      %v463 = vld [vmem:[%s454 + $0x20] sm:$0xf]
      %v464 = vld [vmem:[%s454 + $0x24] sm:$0xf]
      %v465 = vld [vmem:[%s454 + $0x28] sm:$0xf]
      %v466 = vld [vmem:[%s454 + $0x2c] sm:$0xf]
      %v467 = vld [vmem:[%s454 + $0x30] sm:$0xf]
      %v468 = vld [vmem:[%s454 + $0x34] sm:$0xf]
      %v469 = vld [vmem:[%s454 + $0x38] sm:$0xf]
      %v470 = vld [vmem:[%s454 + $0x3c] sm:$0xf]
      %v472 = vunpack.c.l.b16 %v451
      %v473 = vpack.c.b16 %v472, %v472
      %v474 = vrot.slane %v473, 1
      %v492 = vunpack.c.l.b16 %v455
      %v493 = vunpack.c.l.b16 %v456
      %v494 = vunpack.c.l.b16 %v457
      %v495 = vunpack.c.l.b16 %v458
      %v496 = vunpack.c.l.b16 %v459
      %v497 = vunpack.c.l.b16 %v460
      %v498 = vunpack.c.l.b16 %v461
      %v499 = vunpack.c.l.b16 %v462
      %v500 = vunpack.c.l.b16 %v463
      %v501 = vunpack.c.l.b16 %v464
      %v502 = vunpack.c.l.b16 %v465
      %v503 = vunpack.c.l.b16 %v466
      %v504 = vunpack.c.l.b16 %v467
      %v505 = vunpack.c.l.b16 %v468
      %v506 = vunpack.c.l.b16 %v469
      %v507 = vunpack.c.l.b16 %v470
      %v508 = vpack.c.b16 %v493, %v492
      %v509 = vpack.c.b16 %v495, %v494
      %v510 = vpack.c.b16 %v497, %v496
      %v511 = vpack.c.b16 %v499, %v498
      %v512 = vpack.c.b16 %v501, %v500
      %v513 = vpack.c.b16 %v503, %v502
      %v514 = vpack.c.b16 %v505, %v504
      %v515 = vpack.c.b16 %v507, %v506
      %524 = vmatprep.subr.bf16.mxu0 0
      %525 = vmatpush1.bf16.msra.mxu0 %v515
      %526 = vmatprep.subr.bf16.mxu0 0
      %527 = vmatpush1.bf16.msra.mxu0 %v514
      %528 = vmatprep.subr.bf16.mxu0 0
      %529 = vmatpush1.bf16.msra.mxu0 %v513
      %530 = vmatprep.subr.bf16.mxu0 0
      %531 = vmatpush1.bf16.msra.mxu0 %v512
      %532 = vmatprep.subr.bf16.mxu0 0
      %533 = vmatpush1.bf16.msra.mxu0 %v511
      %534 = vmatprep.subr.bf16.mxu0 0
      %535 = vmatpush1.bf16.msra.mxu0 %v510
      %536 = vmatprep.subr.bf16.mxu0 0
      %537 = vmatpush1.bf16.msra.mxu0 %v509
      %538 = vmatprep.subr.bf16.mxu0 0
      %539 = vmatpush1.bf16.msra.mxu0 %v508
      %540 = vmatprep.subr.bf16.mxu0 0
      %541 = vmatpush2.bf16.msra.mxu0 0
      %542 = vmatprep.subr.bf16.mxu0 0
      %543 = vmatpush2.bf16.msra.mxu0 0
      %544 = vmatprep.subr.bf16.mxu0 0
      %545 = vmatpush2.bf16.msra.mxu0 0
      %546 = vmatprep.subr.bf16.mxu0 0
      %547 = vmatpush2.bf16.msra.mxu0 0
      %548 = vmatprep.subr.bf16.mxu0 0
      %549 = vmatpush2.bf16.msra.mxu0 0
      %550 = vmatprep.subr.bf16.mxu0 0
      %551 = vmatpush2.bf16.msra.mxu0 0
      %552 = vmatprep.subr.bf16.mxu0 0
      %553 = vmatpush2.bf16.msra.mxu0 0
      %554 = vmatprep.subr.bf16.mxu0 0
      %555 = vmatpush2.bf16.msra.mxu0 0
      %556 = vmatprep.mubr.bf16.mxu0 0
      %557 = vmatmul.mubr.bf16.gmra.mxu0 %v474
      %v558 = vpop.f32.mrf.mxu0
      %v559 = vadd.f32 0.0, %v558
      %v560 = vpop.f32.mrf.mxu0
      %v561 = vpop.f32.mrf.mxu0
      %v562 = vpop.f32.mrf.mxu0
      %563 = vdwg.mxu0
      %v564 = vadd.f32 %v450, %v559
      %s565 = sadd.s32 48, %s224
      %s566 = smul.addr %s565, 4
      %s567 = scalar_lea.vmem %s1, %s566
      %v568 = vld [vmem:[%s567] sm:$0xf]
      %v569 = vld [vmem:[%s567 + $0x4] sm:$0xf]
      %v570 = vld [vmem:[%s567 + $0x8] sm:$0xf]
      %v571 = vld [vmem:[%s567 + $0xc] sm:$0xf]
      %v572 = vld [vmem:[%s567 + $0x10] sm:$0xf]
      %v573 = vld [vmem:[%s567 + $0x14] sm:$0xf]
      %v574 = vld [vmem:[%s567 + $0x18] sm:$0xf]
      %v575 = vld [vmem:[%s567 + $0x1c] sm:$0xf]
      %v576 = vld [vmem:[%s567 + $0x20] sm:$0xf]
      %v577 = vld [vmem:[%s567 + $0x24] sm:$0xf]
      %v578 = vld [vmem:[%s567 + $0x28] sm:$0xf]
      %v579 = vld [vmem:[%s567 + $0x2c] sm:$0xf]
      %v580 = vld [vmem:[%s567 + $0x30] sm:$0xf]
      %v581 = vld [vmem:[%s567 + $0x34] sm:$0xf]
      %v582 = vld [vmem:[%s567 + $0x38] sm:$0xf]
      %v583 = vld [vmem:[%s567 + $0x3c] sm:$0xf]
      %v585 = vshrl.u32 %v473, 16
      %v587 = vrot.slane %v585, 1
      %v588 = vshll.u32 %v473, 16
      %v590 = vrot.slane %v588, 2
      %v591 = vor.u32 %v587, %v590
      %v609 = vunpack.c.l.b16 %v568
      %v610 = vunpack.c.l.b16 %v569
      %v611 = vunpack.c.l.b16 %v570
      %v612 = vunpack.c.l.b16 %v571
      %v613 = vunpack.c.l.b16 %v572
      %v614 = vunpack.c.l.b16 %v573
      %v615 = vunpack.c.l.b16 %v574
      %v616 = vunpack.c.l.b16 %v575
      %v617 = vunpack.c.l.b16 %v576
      %v618 = vunpack.c.l.b16 %v577
      %v619 = vunpack.c.l.b16 %v578
      %v620 = vunpack.c.l.b16 %v579
      %v621 = vunpack.c.l.b16 %v580
      %v622 = vunpack.c.l.b16 %v581
      %v623 = vunpack.c.l.b16 %v582
      %v624 = vunpack.c.l.b16 %v583
      %v625 = vpack.c.b16 %v610, %v609
      %v626 = vpack.c.b16 %v612, %v611
      %v627 = vpack.c.b16 %v614, %v613
      %v628 = vpack.c.b16 %v616, %v615
      %v629 = vpack.c.b16 %v618, %v617
      %v630 = vpack.c.b16 %v620, %v619
      %v631 = vpack.c.b16 %v622, %v621
      %v632 = vpack.c.b16 %v624, %v623
      %641 = vmatprep.subr.bf16.mxu0 0
      %642 = vmatpush1.bf16.msra.mxu0 %v632
      %643 = vmatprep.subr.bf16.mxu0 0
      %644 = vmatpush1.bf16.msra.mxu0 %v631
      %645 = vmatprep.subr.bf16.mxu0 0
      %646 = vmatpush1.bf16.msra.mxu0 %v630
      %647 = vmatprep.subr.bf16.mxu0 0
      %648 = vmatpush1.bf16.msra.mxu0 %v629
      %649 = vmatprep.subr.bf16.mxu0 0
      %650 = vmatpush1.bf16.msra.mxu0 %v628
      %651 = vmatprep.subr.bf16.mxu0 0
      %652 = vmatpush1.bf16.msra.mxu0 %v627
      %653 = vmatprep.subr.bf16.mxu0 0
      %654 = vmatpush1.bf16.msra.mxu0 %v626
      %655 = vmatprep.subr.bf16.mxu0 0
      %656 = vmatpush1.bf16.msra.mxu0 %v625
      %657 = vmatprep.subr.bf16.mxu0 0
      %658 = vmatpush2.bf16.msra.mxu0 0
      %659 = vmatprep.subr.bf16.mxu0 0
      %660 = vmatpush2.bf16.msra.mxu0 0
      %661 = vmatprep.subr.bf16.mxu0 0
      %662 = vmatpush2.bf16.msra.mxu0 0
      %663 = vmatprep.subr.bf16.mxu0 0
      %664 = vmatpush2.bf16.msra.mxu0 0
      %665 = vmatprep.subr.bf16.mxu0 0
      %666 = vmatpush2.bf16.msra.mxu0 0
      %667 = vmatprep.subr.bf16.mxu0 0
      %668 = vmatpush2.bf16.msra.mxu0 0
      %669 = vmatprep.subr.bf16.mxu0 0
      %670 = vmatpush2.bf16.msra.mxu0 0
      %671 = vmatprep.subr.bf16.mxu0 0
      %672 = vmatpush2.bf16.msra.mxu0 0
      %673 = vmatprep.mubr.bf16.mxu0 0
      %674 = vmatmul.mubr.bf16.gmra.mxu0 %v591
      %v675 = vpop.f32.mrf.mxu0
      %v676 = vadd.f32 0.0, %v675
      %v677 = vpop.f32.mrf.mxu0
      %v678 = vpop.f32.mrf.mxu0
      %v679 = vpop.f32.mrf.mxu0
      %680 = vdwg.mxu0
      %v681 = vadd.f32 %v564, %v676
      %682 = vst [vmem:[#allocation2] sm:$0x1f] %v681
      %p683 = scmp.eq.s32.totalorder %s21, 3
      // Predicated region
      $region37: #{_forward_impl.9} parent=31 // pred_check
        %p684 = pneg %p683
      $region38: #{_forward_impl.9} parent=31 // pred_check_branch
        %686 = sbr.rel (%p684) target = $region40
      $region39: #{_forward_impl.9} parent=31 // pred_region
        %v687 = vld [vmem:[#allocation2] sm:$0x1f]
        %v688 = vld [vmem:[%s2] sm:$0x1]
        %v690 = vlaneseq
        %v691 = vshrl.u32 %v690, 7
        %v692 = vsub.s32 0, %v691
        %v693 = vrot.slane %v688, %v692
        %v695 = vadd.f32 %v687, %v693
        %v696 = vpack.c.bf16 %v695, %v695
        %vm697 = vcmask 1042432
        %vm698 = vsmask.f32 2304
        %vm699 = vmand %vm697, %vm698
        %v700 = vld [vmem:[%s215] sm:$0x7]
        %v701 = vsel %vm699, %v696, %v700
        %702 = vst [vmem:[%s215] sm:$0x7] %v701
      $region40: #{_forward_impl.9} parent=31 // pred_fallthru
        _
      %p703 = scmp.lt.s32.totalorder %s19, 1
      %s704 = scalar_select %p703, %s19, 1
      %p705 = scmp.lt.s32.totalorder %s20, 4
      %s706 = scalar_select %p705, %s20, 4
      %s707 = smul.addr %s704, 5
      %s708 = sadd.s32 %s706, %s707
      %s709 = smul.addr %s708, 4
      %s710 = scalar_lea.vmem %s3, %s709
      // Predicated region
      $region41: #{_forward_impl.9} parent=31 // pred_check
        %p711 = pneg %p125
      $region42: #{_forward_impl.9} parent=31 // pred_check_branch
        %713 = sbr.rel (%p711) target = $region44
      $region43: #{_forward_impl.9} parent=31 // pred_region
        _
      $region44: #{_forward_impl.9} parent=31 // pred_fallthru
        _
    $region32: #{_forward_impl.9} parent=5 // pred_fallthru
      _
    %p714 = scmp.le.s32.totalorder 2, %s9
    // Predicated region
    $region45: #{_forward_impl.9} parent=5 // pred_check
      %p715 = pneg %p714
    $region46: #{_forward_impl.9} parent=5 // pred_check_branch
      %717 = sbr.rel (%p715) target = $region48
    $region47: #{_forward_impl.9} parent=5 // pred_region
      %s718 = ssub.s32 %s9, 2
      // Predicated region
      $region49: #{_forward_impl.9} parent=47 // pred_check
        %p719 = pneg %p131
      $region50: #{_forward_impl.9} parent=47 // pred_check_branch
        %721 = sbr.rel (%p719) target = $region52
      $region51: #{_forward_impl.9} parent=47 // pred_region
        %p722 = scmp.lt.s32.totalorder %s22, 1
        %s723 = scalar_select %p722, %s22, 1
        %p724 = scmp.lt.s32.totalorder %s23, 4
        %s725 = scalar_select %p724, %s23, 4
        %s726 = smul.addr %s723, 5
        %s727 = sadd.s32 %s725, %s726
        %s728 = smul.addr %s727, 4
        %s729 = scalar_lea.vmem %s3, %s728
      $region52: #{_forward_impl.9} parent=47 // pred_fallthru
        _
    $region48: #{_forward_impl.9} parent=5 // pred_fallthru
      _
  $region6: #{_forward_impl.9} parent=0 // loop_footer
    %s13 = sadd.s32 1, %s9
  $region7: #{_forward_impl.9} parent=0 // loop_footer_branch
    %8 = sbr.rel target = $region3
  $region8: #{_forward_impl.9} parent=0 // loop_exit
    _

</llo_original>
